<compile_context>
chip_gen: v5e
topology: v5e:2x2
jax: 0.10.0
libtpu: 0.0.40
codegen_flags: <defaults>
</compile_context>

<pallas_src>
import numpy as np
import jax
import jax.numpy as jnp
from jax.experimental import pallas as pl
from jax.experimental.pallas import tpu as pltpu

# ----------------------------- synthetic config -----------------------------
ENC_EMB = 32      # enc_embedding_dim (stands in for BERT hidden size)
ENC_HID = 32      # enc_hidden_dim
DEC_EMB = 32      # dec_embedding_dim
DEC_HID = 32      # dec_hidden_dim
TAGS = 8          # tags_size
SOS_TOKEN = 1     # tag_index_dict['SOS']
# enc_bidirectional=True, enc_layers=1, dec_bidirectional=False, dec_layers=1

GP = 128          # lane padding per GRU gate block (r/z/n each start at a 128 boundary)
TAG_PAD = 128     # lane-dense padded output head

_VMEM = pl.BlockSpec(memory_space=pltpu.MemorySpace.VMEM)


# ----------------------------- lane-aligned fused-gate GRU step -----------------------------
def _gru_step(xg, h, wh, bh, nh):
    """One GRU step (PyTorch semantics, gate order r, z, n).
    xg: (Bp, 3*GP) precomputed x @ W_i + b_i (gate blocks at lane offsets 0/128/256,
        valid lanes 0:nh of each block);  h: (Bp, nh);  wh: (nh, 3*GP);  bh: (Bp, 3*GP)."""
    hg = jnp.dot(h, wh, preferred_element_type=jnp.float32) + bh
    r = jax.nn.sigmoid(xg[:, 0:GP] + hg[:, 0:GP])                 # 128-aligned slices
    z = jax.nn.sigmoid(xg[:, GP:2 * GP] + hg[:, GP:2 * GP])
    c = jnp.tanh(xg[:, 2 * GP:3 * GP] + r * hg[:, 2 * GP:3 * GP])
    return (1.0 - z[:, :nh]) * c[:, :nh] + z[:, :nh] * h          # offset-0 slices (no rotate)


# ----------------------------- the fused Pallas kernel -----------------------------
def make_kernel(Bp, T_enc, T_dec):
    """Bp = batch rows handled per program (B for the grid-less path, 1 for the
    per-TensorCore batch grid)."""
    H2 = 2 * ENC_HID          # fused encoder hidden width [h_fwd | h_bwd]
    Dd = DEC_HID

    def kernel(x_ref, emb_ref,
               wi_e_ref, wh_e_ref, bi_e_ref, bh_e_ref,   # fused bi-directional encoder GRU
               we2d_ref, be2d_ref,                       # bridge Linear
               wi_d_ref, wh_d_ref, bi_d_ref, bh_d_ref,   # decoder GRU
               wo_ref, bo_ref,                           # output Linear (lane-padded head)
               out_ref):                                 # (T_dec*Bp, TAG_PAD) log-probs
        dot = lambda a, b: jnp.dot(a, b, preferred_element_type=jnp.float32)

        # ---- encoder: ONE batched input projection covering both directions ----
        # x_ref row t = [x[t] | x[T-1-t]]  -> gates for fwd step t and bwd step t.
        xg_all = dot(x_ref[...], wi_e_ref[...]) + bi_e_ref[...]        # (T_enc*Bp, 3*GP)
        wh_e = wh_e_ref[...]
        bh_e = jnp.broadcast_to(bh_e_ref[...], (Bp, 3 * GP))           # hoisted broadcast
        h_enc = jnp.zeros((Bp, H2), jnp.float32)                       # [h_fwd | h_bwd]
        for t in range(T_enc):
            h_enc = _gru_step(xg_all[t * Bp:(t + 1) * Bp, :], h_enc, wh_e, bh_e, H2)

        # ---- bridge: Linear(cat(h_fwd, h_bwd)) as one matmul ----
        h = dot(h_enc, we2d_ref[...]) + be2d_ref[...]                  # (Bp, Dd)

        # ---- decoder recurrence (teacher forcing); input projection off the h-chain ----
        eg_all = dot(emb_ref[...], wi_d_ref[...]) + bi_d_ref[...]      # (T_dec*Bp, 3*GP)
        wh_d = wh_d_ref[...]
        bh_d = jnp.broadcast_to(bh_d_ref[...], (Bp, 3 * GP))
        hs = []                                                        # kept in registers
        for t in range(T_dec):
            h = _gru_step(eg_all[t * Bp:(t + 1) * Bp, :], h, wh_d, bh_d, Dd)
            hs.append(h)
        hs = jnp.concatenate(hs, axis=0)                               # (T_dec*Bp, Dd), t-major

        # ---- batched epilogue: one matmul + one log_softmax + one lane-dense store ----
        logits = dot(hs, wo_ref[...]) + bo_ref[...]                    # (T_dec*Bp, TAG_PAD)
        m = jnp.max(logits, axis=-1, keepdims=True)
        out_ref[...] = logits - m - jnp.log(
            jnp.sum(jnp.exp(logits - m), axis=-1, keepdims=True))
        # (padding lanes carry bias -1e9 -> exp()==0, so valid lanes are exact;
        #  the second log_softmax of the PyTorch code is the identity on log-probs)

    return kernel


# ----------------------------- wrapper (glue in plain JAX) -----------------------------
def bert_s2s_forward(enc_embedded_bse, trg_bt, kp, use_batch_grid=False):
    """enc_embedded_bse: (B, S_enc, ENC_EMB) float32  (stand-in for BERT embeddings)
       trg_bt:           (B, T) int32 tag indices
       kp:               packed kernel params (see pack_params)
       returns tag_scores: (B*T, TAGS) float32 log-probs (row order b*T + t)."""
    B, T = trg_bt.shape
    _, S, E = enc_embedded_bse.shape

    x = enc_embedded_bse.astype(jnp.float32)
    # row for encoder step t carries both directions' inputs: [x[t] | x[S-1-t]]
    x_comb = jnp.concatenate([x, x[:, ::-1, :]], axis=-1)              # (B, S, 2E)

    # teacher forcing: input token at step 0 is SOS, at step t>0 it is trg[:, t-1]
    sos = jnp.full((B, 1), SOS_TOKEN, dtype=jnp.int32)
    in_toks = jnp.concatenate([sos, trg_bt.astype(jnp.int32)[:, :-1]], axis=1)   # (B, T)

    weights = (kp["wi_e"], kp["wh_e"], kp["bi_e"], kp["bh_e"],
               kp["we2d"], kp["be2d"],
               kp["wi_d"], kp["wh_d"], kp["bi_d"], kp["bh_d"],
               kp["wo"], kp["bo"])

    if use_batch_grid:
        # v7x: one batch element per grid step, "parallel" -> one TensorCore each.
        x_in = x_comb.reshape(B * S, 2 * E)                            # row b*S + t
        emb_in = jnp.take(kp["dec_emb"], in_toks.reshape(B * T), axis=0)   # row b*T + t
        act_specs = [pl.BlockSpec((S, 2 * E), lambda b: (b, 0)),
                     pl.BlockSpec((T, DEC_EMB), lambda b: (b, 0))]
        w_specs = [pl.BlockSpec(w.shape, lambda b: (0, 0)) for w in weights]
        out = pl.pallas_call(
            make_kernel(1, S, T),
            out_shape=jax.ShapeDtypeStruct((B * T, TAG_PAD), jnp.float32),
            grid=(B,),
            in_specs=act_specs + w_specs,
            out_specs=pl.BlockSpec((T, TAG_PAD), lambda b: (b, 0)),
            compiler_params=pltpu.CompilerParams(dimension_semantics=("parallel",)),
        )(x_in, emb_in, *weights)
        return out[:, :TAGS]                                           # rows already b*T + t

    # single-TC path (v5e / v6e): one program, whole batch vectorized, t-major rows
    x_in = jnp.transpose(x_comb, (1, 0, 2)).reshape(S * B, 2 * E)      # row t*B + b
    emb_in = jnp.take(kp["dec_emb"], in_toks.T.reshape(T * B), axis=0)  # row t*B + b
    out = pl.pallas_call(
        make_kernel(B, S, T),
        out_shape=jax.ShapeDtypeStruct((T * B, TAG_PAD), jnp.float32),
        in_specs=[_VMEM] * (2 + len(weights)),
        out_specs=_VMEM,
    )(x_in, emb_in, *weights)
    # t-major -> b-major row reorder + de-pad (16x128 array: free in XLA)
    out = out.reshape(T, B, TAG_PAD).transpose(1, 0, 2).reshape(B * T, TAG_PAD)
    return out[:, :TAGS]


# ----------------------------- deterministic parameter init (torch layout) -----------------------------
def _uniform(key, shape, k):
    return jax.random.uniform(key, shape, minval=-k, maxval=k, dtype=jnp.float32)


def _gru_raw(key, in_dim, hid):
    """PyTorch nn.GRU single layer/direction params: w_ih (3H,in), w_hh (3H,H),
    b_ih (3H,), b_hh (3H,), gates stacked r, z, n."""
    k = 1.0 / np.sqrt(hid)
    k0, k1, k2, k3 = jax.random.split(key, 4)
    return dict(w_ih=_uniform(k0, (3 * hid, in_dim), k),
                w_hh=_uniform(k1, (3 * hid, hid), k),
                b_ih=_uniform(k2, (3 * hid,), k),
                b_hh=_uniform(k3, (3 * hid,), k))


def init_params(key):
    ks = jax.random.split(key, 8)
    enc_f = _gru_raw(ks[0], ENC_EMB, ENC_HID)
    enc_b = _gru_raw(ks[1], ENC_EMB, ENC_HID)
    k = 1.0 / np.sqrt(2 * ENC_HID)
    w_e2d = _uniform(ks[2], (DEC_HID, 2 * ENC_HID), k)     # (out, in) torch layout
    b_e2d = _uniform(ks[3], (DEC_HID,), k)
    dec_emb = jax.random.normal(ks[4], (TAGS, DEC_EMB), dtype=jnp.float32)
    dec = _gru_raw(ks[5], DEC_EMB, DEC_HID)
    kk = 1.0 / np.sqrt(DEC_HID)
    w_out = _uniform(ks[6], (TAGS, DEC_HID), kk)
    b_out = _uniform(ks[7], (TAGS,), kk)
    return dict(enc_f=enc_f, enc_b=enc_b, w_e2d=w_e2d, b_e2d=b_e2d,
                dec_emb=dec_emb, dec=dec, w_out=w_out, b_out=b_out)


# ----------------------------- kernel-weight packing (lane-aligned / fused) -----------------------------
def _pack_gate_cols(w, hid, lane_off):
    """w: (rows, 3*hid) gate-major columns (r, z, n). Returns (rows, 3*GP) with gate g
    occupying lanes [g*GP + lane_off, g*GP + lane_off + hid); all other lanes zero."""
    out = jnp.zeros((w.shape[0], 3 * GP), jnp.float32)
    for g in range(3):
        out = out.at[:, g * GP + lane_off:g * GP + lane_off + hid].set(
            w[:, g * hid:(g + 1) * hid])
    return out


def pack_params(p):
    H, D = ENC_HID, DEC_HID
    ef, eb, dg = p["enc_f"], p["enc_b"], p["dec"]
    # encoder: both directions fused; fwd occupies lanes 0:H, bwd lanes H:2H of each gate block
    wi_e = jnp.concatenate([_pack_gate_cols(ef["w_ih"].T, H, 0),
                            _pack_gate_cols(eb["w_ih"].T, H, H)], axis=0)      # (2E, 3*GP)
    wh_e = jnp.concatenate([_pack_gate_cols(ef["w_hh"].T, H, 0),
                            _pack_gate_cols(eb["w_hh"].T, H, H)], axis=0)      # (2H, 3*GP)
    bi_e = (_pack_gate_cols(ef["b_ih"].reshape(1, -1), H, 0)
            + _pack_gate_cols(eb["b_ih"].reshape(1, -1), H, H))                # (1, 3*GP)
    bh_e = (_pack_gate_cols(ef["b_hh"].reshape(1, -1), H, 0)
            + _pack_gate_cols(eb["b_hh"].reshape(1, -1), H, H))
    # decoder GRU (single direction)
    wi_d = _pack_gate_cols(dg["w_ih"].T, D, 0)                                  # (DEC_EMB, 3*GP)
    wh_d = _pack_gate_cols(dg["w_hh"].T, D, 0)                                  # (D, 3*GP)
    bi_d = _pack_gate_cols(dg["b_ih"].reshape(1, -1), D, 0)
    bh_d = _pack_gate_cols(dg["b_hh"].reshape(1, -1), D, 0)
    # bridge (single dot on [h_fwd|h_bwd]) + lane-padded output head
    we2d = p["w_e2d"].T                                                         # (2H, D)
    be2d = p["b_e2d"].reshape(1, D)
    wo = jnp.zeros((D, TAG_PAD), jnp.float32).at[:, :TAGS].set(p["w_out"].T)
    bo = jnp.full((1, TAG_PAD), -1e9, jnp.float32).at[0, :TAGS].set(p["b_out"])
    return dict(wi_e=wi_e, wh_e=wh_e, bi_e=bi_e, bh_e=bh_e,
                we2d=we2d, be2d=be2d,
                wi_d=wi_d, wh_d=wh_d, bi_d=bi_d, bh_d=bh_d,
                wo=wo, bo=bo, dec_emb=p["dec_emb"])


# ----------------------------- pure-JAX reference (torch-faithful) -----------------------------
def _ref_gru_step(x, h, p):
    H = h.shape[-1]
    gi = x @ p["w_ih"].T + p["b_ih"]
    gh = h @ p["w_hh"].T + p["b_hh"]
    r = jax.nn.sigmoid(gi[:, :H] + gh[:, :H])
    z = jax.nn.sigmoid(gi[:, H:2 * H] + gh[:, H:2 * H])
    n = jnp.tanh(gi[:, 2 * H:] + r * gh[:, 2 * H:])
    return (1.0 - z) * n + z * h


def reference_forward(enc_embedded_bse, trg_bt, params):
    B, T = trg_bt.shape
    x = jnp.transpose(enc_embedded_bse, (1, 0, 2)).astype(jnp.float32)   # (S, B, E)
    S = x.shape[0]
    h_f = jnp.zeros((B, ENC_HID), jnp.float32)
    for t in range(S):
        h_f = _ref_gru_step(x[t], h_f, params["enc_f"])
    h_b = jnp.zeros((B, ENC_HID), jnp.float32)
    for t in range(S - 1, -1, -1):
        h_b = _ref_gru_step(x[t], h_b, params["enc_b"])
    h = jnp.concatenate([h_f, h_b], axis=1) @ params["w_e2d"].T + params["b_e2d"]

    sos = jnp.full((1, B), SOS_TOKEN, dtype=jnp.int32)
    in_toks = jnp.concatenate([sos, trg_bt.astype(jnp.int32).T[:-1]], axis=0)   # (T, B)
    emb = params["dec_emb"][in_toks]                                            # (T, B, DEC_EMB)
    outs = []
    for t in range(T):
        h = _ref_gru_step(emb[t], h, params["dec"])
        logits = h @ params["w_out"].T + params["b_out"]
        outs.append(jax.nn.log_softmax(logits, axis=-1))
    dec_out = jnp.stack(outs, 0)                                 # (T, B, TAGS)
    flat = jnp.transpose(dec_out, (1, 0, 2)).reshape(B * T, TAGS)
    return jax.nn.log_softmax(flat, axis=-1)                     # idempotent final softmax


def _is_multi_tensorcore_chip():
    """True on v7x-class chips (2 TensorCores/chip) where a parallel batch grid pays off."""
    try:
        kind = jax.devices()[0].device_kind.lower()
    except Exception:
        return False
    return "7" in kind


# ----------------------------- main -----------------------------
if __name__ == "__main__":
    key = jax.random.PRNGKey(0)
    k_par, k_emb, k_trg = jax.random.split(key, 3)

    params = init_params(k_par)
    kparams = pack_params(params)

    B, S_ENC, T = 2, 8, 8
    # Synthetic stand-in for BERT token embeddings after del_special_token.
    enc_embedded = jax.random.normal(k_emb, (B, S_ENC, ENC_EMB), dtype=jnp.float32)
    trg = jax.random.randint(k_trg, (B, T), 0, TAGS, dtype=jnp.int32)

    use_batch_grid = _is_multi_tensorcore_chip()
    fwd = jax.jit(bert_s2s_forward, static_argnames=("use_batch_grid",))
    tag_scores = jax.block_until_ready(
        fwd(enc_embedded, trg, kparams, use_batch_grid=use_batch_grid))

    ref = jax.block_until_ready(reference_forward(enc_embedded, trg, params))
    assert tag_scores.shape == (B * T, TAGS)
    assert np.allclose(np.asarray(tag_scores), np.asarray(ref), atol=2e-2), (
        "Pallas output deviates from reference")

    print("KERNEL_OK")
</pallas_src>

<mosaic_0001>
module attributes {stable_mosaic.version = 11 : i64} {
  func.func @kernel(%arg0: memref<16x64xf32, #tpu.memory_space<vmem>>, %arg1: memref<16x32xf32, #tpu.memory_space<vmem>>, %arg2: memref<64x384xf32, #tpu.memory_space<vmem>>, %arg3: memref<64x384xf32, #tpu.memory_space<vmem>>, %arg4: memref<1x384xf32, #tpu.memory_space<vmem>>, %arg5: memref<1x384xf32, #tpu.memory_space<vmem>>, %arg6: memref<64x32xf32, #tpu.memory_space<vmem>>, %arg7: memref<1x32xf32, #tpu.memory_space<vmem>>, %arg8: memref<32x384xf32, #tpu.memory_space<vmem>>, %arg9: memref<32x384xf32, #tpu.memory_space<vmem>>, %arg10: memref<1x384xf32, #tpu.memory_space<vmem>>, %arg11: memref<1x384xf32, #tpu.memory_space<vmem>>, %arg12: memref<32x128xf32, #tpu.memory_space<vmem>>, %arg13: memref<1x128xf32, #tpu.memory_space<vmem>>, %arg14: memref<16x128xf32, #tpu.memory_space<vmem>>) attributes {dimension_semantics = [], scalar_prefetch = 0 : i64, scratch_operands = 0 : i64, tpu.core_type = #tpu.core_type<tc>} {
    %c0 = arith.constant 0 : index
    %c0_0 = arith.constant 0 : index
    %0 = vector.load %arg0[%c0, %c0_0] : memref<16x64xf32, #tpu.memory_space<vmem>>, vector<16x64xf32>
    %c0_1 = arith.constant 0 : index
    %c0_2 = arith.constant 0 : index
    %1 = vector.load %arg2[%c0_1, %c0_2] : memref<64x384xf32, #tpu.memory_space<vmem>>, vector<64x384xf32>
    %cst = arith.constant dense<0.000000e+00> : vector<16x384xf32>
    %2 = tpu.matmul %0, %1, %cst {dimension_numbers = #tpu.dot_dimension_numbers<[1], [0], [0], [1], [0, 0, 1, 1], [], []>} : vector<16x64xf32>, vector<64x384xf32>, vector<16x384xf32> -> vector<16x384xf32>
    %c0_3 = arith.constant 0 : index
    %c0_4 = arith.constant 0 : index
    %3 = vector.load %arg4[%c0_3, %c0_4] : memref<1x384xf32, #tpu.memory_space<vmem>>, vector<1x384xf32>
    %4 = vector.broadcast %3 : vector<1x384xf32> to vector<16x384xf32>
    %5 = arith.addf %2, %4 : vector<16x384xf32>
    %c0_5 = arith.constant 0 : index
    %c0_6 = arith.constant 0 : index
    %6 = vector.load %arg3[%c0_5, %c0_6] : memref<64x384xf32, #tpu.memory_space<vmem>>, vector<64x384xf32>
    %c0_7 = arith.constant 0 : index
    %c0_8 = arith.constant 0 : index
    %7 = vector.load %arg5[%c0_7, %c0_8] : memref<1x384xf32, #tpu.memory_space<vmem>>, vector<1x384xf32>
    %8 = vector.shape_cast %7 : vector<1x384xf32> to vector<1x384xf32>
    %9 = vector.broadcast %8 : vector<1x384xf32> to vector<2x384xf32>
    %cst_9 = arith.constant 0.000000e+00 : f32
    %10 = vector.broadcast %cst_9 : f32 to vector<2x64xf32>
    %11 = vector.extract_strided_slice %5 {offsets = [0, 0], sizes = [2, 384], strides = [1, 1]} : vector<16x384xf32> to vector<2x384xf32>
    %cst_10 = arith.constant dense<0.000000e+00> : vector<2x384xf32>
    %12 = tpu.matmul %10, %6, %cst_10 {dimension_numbers = #tpu.dot_dimension_numbers<[1], [0], [0], [1], [0, 0, 1, 1], [], []>} : vector<2x64xf32>, vector<64x384xf32>, vector<2x384xf32> -> vector<2x384xf32>
    %13 = arith.addf %12, %9 : vector<2x384xf32>
    %14 = vector.extract_strided_slice %11 {offsets = [0, 0], sizes = [2, 128], strides = [1, 1]} : vector<2x384xf32> to vector<2x128xf32>
    %15 = vector.extract_strided_slice %13 {offsets = [0, 0], sizes = [2, 128], strides = [1, 1]} : vector<2x384xf32> to vector<2x128xf32>
    %16 = arith.addf %14, %15 : vector<2x128xf32>
    %17 = arith.negf %16 : vector<2x128xf32>
    %18 = math.exp %17 : vector<2x128xf32>
    %cst_11 = arith.constant 1.000000e+00 : f32
    %19 = vector.broadcast %cst_11 : f32 to vector<2x128xf32>
    %20 = arith.addf %19, %18 : vector<2x128xf32>
    %21 = arith.divf %19, %20 : vector<2x128xf32>
    %22 = vector.extract_strided_slice %11 {offsets = [0, 128], sizes = [2, 128], strides = [1, 1]} : vector<2x384xf32> to vector<2x128xf32>
    %23 = vector.extract_strided_slice %13 {offsets = [0, 128], sizes = [2, 128], strides = [1, 1]} : vector<2x384xf32> to vector<2x128xf32>
    %24 = arith.addf %22, %23 : vector<2x128xf32>
    %25 = arith.negf %24 : vector<2x128xf32>
    %26 = math.exp %25 : vector<2x128xf32>
    %cst_12 = arith.constant 1.000000e+00 : f32
    %27 = vector.broadcast %cst_12 : f32 to vector<2x128xf32>
    %28 = arith.addf %27, %26 : vector<2x128xf32>
    %29 = arith.divf %27, %28 : vector<2x128xf32>
    %30 = vector.extract_strided_slice %11 {offsets = [0, 256], sizes = [2, 128], strides = [1, 1]} : vector<2x384xf32> to vector<2x128xf32>
    %31 = vector.extract_strided_slice %13 {offsets = [0, 256], sizes = [2, 128], strides = [1, 1]} : vector<2x384xf32> to vector<2x128xf32>
    %32 = arith.mulf %21, %31 : vector<2x128xf32>
    %33 = arith.addf %30, %32 : vector<2x128xf32>
    %34 = math.tanh %33 : vector<2x128xf32>
    %35 = vector.extract_strided_slice %29 {offsets = [0, 0], sizes = [2, 64], strides = [1, 1]} : vector<2x128xf32> to vector<2x64xf32>
    %cst_13 = arith.constant 1.000000e+00 : f32
    %36 = vector.broadcast %cst_13 : f32 to vector<2x64xf32>
    %37 = arith.subf %36, %35 : vector<2x64xf32>
    %38 = vector.extract_strided_slice %34 {offsets = [0, 0], sizes = [2, 64], strides = [1, 1]} : vector<2x128xf32> to vector<2x64xf32>
    %39 = arith.mulf %37, %38 : vector<2x64xf32>
    %40 = vector.extract_strided_slice %29 {offsets = [0, 0], sizes = [2, 64], strides = [1, 1]} : vector<2x128xf32> to vector<2x64xf32>
    %41 = arith.mulf %40, %10 : vector<2x64xf32>
    %42 = arith.addf %39, %41 : vector<2x64xf32>
    %43 = vector.extract_strided_slice %5 {offsets = [2, 0], sizes = [2, 384], strides = [1, 1]} : vector<16x384xf32> to vector<2x384xf32>
    %cst_14 = arith.constant dense<0.000000e+00> : vector<2x384xf32>
    %44 = tpu.matmul %42, %6, %cst_14 {dimension_numbers = #tpu.dot_dimension_numbers<[1], [0], [0], [1], [0, 0, 1, 1], [], []>} : vector<2x64xf32>, vector<64x384xf32>, vector<2x384xf32> -> vector<2x384xf32>
    %45 = arith.addf %44, %9 : vector<2x384xf32>
    %46 = vector.extract_strided_slice %43 {offsets = [0, 0], sizes = [2, 128], strides = [1, 1]} : vector<2x384xf32> to vector<2x128xf32>
    %47 = vector.extract_strided_slice %45 {offsets = [0, 0], sizes = [2, 128], strides = [1, 1]} : vector<2x384xf32> to vector<2x128xf32>
    %48 = arith.addf %46, %47 : vector<2x128xf32>
    %49 = arith.negf %48 : vector<2x128xf32>
    %50 = math.exp %49 : vector<2x128xf32>
    %cst_15 = arith.constant 1.000000e+00 : f32
    %51 = vector.broadcast %cst_15 : f32 to vector<2x128xf32>
    %52 = arith.addf %51, %50 : vector<2x128xf32>
    %53 = arith.divf %51, %52 : vector<2x128xf32>
    %54 = vector.extract_strided_slice %43 {offsets = [0, 128], sizes = [2, 128], strides = [1, 1]} : vector<2x384xf32> to vector<2x128xf32>
    %55 = vector.extract_strided_slice %45 {offsets = [0, 128], sizes = [2, 128], strides = [1, 1]} : vector<2x384xf32> to vector<2x128xf32>
    %56 = arith.addf %54, %55 : vector<2x128xf32>
    %57 = arith.negf %56 : vector<2x128xf32>
    %58 = math.exp %57 : vector<2x128xf32>
    %cst_16 = arith.constant 1.000000e+00 : f32
    %59 = vector.broadcast %cst_16 : f32 to vector<2x128xf32>
    %60 = arith.addf %59, %58 : vector<2x128xf32>
    %61 = arith.divf %59, %60 : vector<2x128xf32>
    %62 = vector.extract_strided_slice %43 {offsets = [0, 256], sizes = [2, 128], strides = [1, 1]} : vector<2x384xf32> to vector<2x128xf32>
    %63 = vector.extract_strided_slice %45 {offsets = [0, 256], sizes = [2, 128], strides = [1, 1]} : vector<2x384xf32> to vector<2x128xf32>
    %64 = arith.mulf %53, %63 : vector<2x128xf32>
    %65 = arith.addf %62, %64 : vector<2x128xf32>
    %66 = math.tanh %65 : vector<2x128xf32>
    %67 = vector.extract_strided_slice %61 {offsets = [0, 0], sizes = [2, 64], strides = [1, 1]} : vector<2x128xf32> to vector<2x64xf32>
    %cst_17 = arith.constant 1.000000e+00 : f32
    %68 = vector.broadcast %cst_17 : f32 to vector<2x64xf32>
    %69 = arith.subf %68, %67 : vector<2x64xf32>
    %70 = vector.extract_strided_slice %66 {offsets = [0, 0], sizes = [2, 64], strides = [1, 1]} : vector<2x128xf32> to vector<2x64xf32>
    %71 = arith.mulf %69, %70 : vector<2x64xf32>
    %72 = vector.extract_strided_slice %61 {offsets = [0, 0], sizes = [2, 64], strides = [1, 1]} : vector<2x128xf32> to vector<2x64xf32>
    %73 = arith.mulf %72, %42 : vector<2x64xf32>
    %74 = arith.addf %71, %73 : vector<2x64xf32>
    %75 = vector.extract_strided_slice %5 {offsets = [4, 0], sizes = [2, 384], strides = [1, 1]} : vector<16x384xf32> to vector<2x384xf32>
    %cst_18 = arith.constant dense<0.000000e+00> : vector<2x384xf32>
    %76 = tpu.matmul %74, %6, %cst_18 {dimension_numbers = #tpu.dot_dimension_numbers<[1], [0], [0], [1], [0, 0, 1, 1], [], []>} : vector<2x64xf32>, vector<64x384xf32>, vector<2x384xf32> -> vector<2x384xf32>
    %77 = arith.addf %76, %9 : vector<2x384xf32>
    %78 = vector.extract_strided_slice %75 {offsets = [0, 0], sizes = [2, 128], strides = [1, 1]} : vector<2x384xf32> to vector<2x128xf32>
    %79 = vector.extract_strided_slice %77 {offsets = [0, 0], sizes = [2, 128], strides = [1, 1]} : vector<2x384xf32> to vector<2x128xf32>
    %80 = arith.addf %78, %79 : vector<2x128xf32>
    %81 = arith.negf %80 : vector<2x128xf32>
    %82 = math.exp %81 : vector<2x128xf32>
    %cst_19 = arith.constant 1.000000e+00 : f32
    %83 = vector.broadcast %cst_19 : f32 to vector<2x128xf32>
    %84 = arith.addf %83, %82 : vector<2x128xf32>
    %85 = arith.divf %83, %84 : vector<2x128xf32>
    %86 = vector.extract_strided_slice %75 {offsets = [0, 128], sizes = [2, 128], strides = [1, 1]} : vector<2x384xf32> to vector<2x128xf32>
    %87 = vector.extract_strided_slice %77 {offsets = [0, 128], sizes = [2, 128], strides = [1, 1]} : vector<2x384xf32> to vector<2x128xf32>
    %88 = arith.addf %86, %87 : vector<2x128xf32>
    %89 = arith.negf %88 : vector<2x128xf32>
    %90 = math.exp %89 : vector<2x128xf32>
    %cst_20 = arith.constant 1.000000e+00 : f32
    %91 = vector.broadcast %cst_20 : f32 to vector<2x128xf32>
    %92 = arith.addf %91, %90 : vector<2x128xf32>
    %93 = arith.divf %91, %92 : vector<2x128xf32>
    %94 = vector.extract_strided_slice %75 {offsets = [0, 256], sizes = [2, 128], strides = [1, 1]} : vector<2x384xf32> to vector<2x128xf32>
    %95 = vector.extract_strided_slice %77 {offsets = [0, 256], sizes = [2, 128], strides = [1, 1]} : vector<2x384xf32> to vector<2x128xf32>
    %96 = arith.mulf %85, %95 : vector<2x128xf32>
    %97 = arith.addf %94, %96 : vector<2x128xf32>
    %98 = math.tanh %97 : vector<2x128xf32>
    %99 = vector.extract_strided_slice %93 {offsets = [0, 0], sizes = [2, 64], strides = [1, 1]} : vector<2x128xf32> to vector<2x64xf32>
    %cst_21 = arith.constant 1.000000e+00 : f32
    %100 = vector.broadcast %cst_21 : f32 to vector<2x64xf32>
    %101 = arith.subf %100, %99 : vector<2x64xf32>
    %102 = vector.extract_strided_slice %98 {offsets = [0, 0], sizes = [2, 64], strides = [1, 1]} : vector<2x128xf32> to vector<2x64xf32>
    %103 = arith.mulf %101, %102 : vector<2x64xf32>
    %104 = vector.extract_strided_slice %93 {offsets = [0, 0], sizes = [2, 64], strides = [1, 1]} : vector<2x128xf32> to vector<2x64xf32>
    %105 = arith.mulf %104, %74 : vector<2x64xf32>
    %106 = arith.addf %103, %105 : vector<2x64xf32>
    %107 = vector.extract_strided_slice %5 {offsets = [6, 0], sizes = [2, 384], strides = [1, 1]} : vector<16x384xf32> to vector<2x384xf32>
    %cst_22 = arith.constant dense<0.000000e+00> : vector<2x384xf32>
    %108 = tpu.matmul %106, %6, %cst_22 {dimension_numbers = #tpu.dot_dimension_numbers<[1], [0], [0], [1], [0, 0, 1, 1], [], []>} : vector<2x64xf32>, vector<64x384xf32>, vector<2x384xf32> -> vector<2x384xf32>
    %109 = arith.addf %108, %9 : vector<2x384xf32>
    %110 = vector.extract_strided_slice %107 {offsets = [0, 0], sizes = [2, 128], strides = [1, 1]} : vector<2x384xf32> to vector<2x128xf32>
    %111 = vector.extract_strided_slice %109 {offsets = [0, 0], sizes = [2, 128], strides = [1, 1]} : vector<2x384xf32> to vector<2x128xf32>
    %112 = arith.addf %110, %111 : vector<2x128xf32>
    %113 = arith.negf %112 : vector<2x128xf32>
    %114 = math.exp %113 : vector<2x128xf32>
    %cst_23 = arith.constant 1.000000e+00 : f32
    %115 = vector.broadcast %cst_23 : f32 to vector<2x128xf32>
    %116 = arith.addf %115, %114 : vector<2x128xf32>
    %117 = arith.divf %115, %116 : vector<2x128xf32>
    %118 = vector.extract_strided_slice %107 {offsets = [0, 128], sizes = [2, 128], strides = [1, 1]} : vector<2x384xf32> to vector<2x128xf32>
    %119 = vector.extract_strided_slice %109 {offsets = [0, 128], sizes = [2, 128], strides = [1, 1]} : vector<2x384xf32> to vector<2x128xf32>
    %120 = arith.addf %118, %119 : vector<2x128xf32>
    %121 = arith.negf %120 : vector<2x128xf32>
    %122 = math.exp %121 : vector<2x128xf32>
    %cst_24 = arith.constant 1.000000e+00 : f32
    %123 = vector.broadcast %cst_24 : f32 to vector<2x128xf32>
    %124 = arith.addf %123, %122 : vector<2x128xf32>
    %125 = arith.divf %123, %124 : vector<2x128xf32>
    %126 = vector.extract_strided_slice %107 {offsets = [0, 256], sizes = [2, 128], strides = [1, 1]} : vector<2x384xf32> to vector<2x128xf32>
    %127 = vector.extract_strided_slice %109 {offsets = [0, 256], sizes = [2, 128], strides = [1, 1]} : vector<2x384xf32> to vector<2x128xf32>
    %128 = arith.mulf %117, %127 : vector<2x128xf32>
    %129 = arith.addf %126, %128 : vector<2x128xf32>
    %130 = math.tanh %129 : vector<2x128xf32>
    %131 = vector.extract_strided_slice %125 {offsets = [0, 0], sizes = [2, 64], strides = [1, 1]} : vector<2x128xf32> to vector<2x64xf32>
    %cst_25 = arith.constant 1.000000e+00 : f32
    %132 = vector.broadcast %cst_25 : f32 to vector<2x64xf32>
    %133 = arith.subf %132, %131 : vector<2x64xf32>
    %134 = vector.extract_strided_slice %130 {offsets = [0, 0], sizes = [2, 64], strides = [1, 1]} : vector<2x128xf32> to vector<2x64xf32>
    %135 = arith.mulf %133, %134 : vector<2x64xf32>
    %136 = vector.extract_strided_slice %125 {offsets = [0, 0], sizes = [2, 64], strides = [1, 1]} : vector<2x128xf32> to vector<2x64xf32>
    %137 = arith.mulf %136, %106 : vector<2x64xf32>
    %138 = arith.addf %135, %137 : vector<2x64xf32>
    %139 = vector.extract_strided_slice %5 {offsets = [8, 0], sizes = [2, 384], strides = [1, 1]} : vector<16x384xf32> to vector<2x384xf32>
    %cst_26 = arith.constant dense<0.000000e+00> : vector<2x384xf32>
    %140 = tpu.matmul %138, %6, %cst_26 {dimension_numbers = #tpu.dot_dimension_numbers<[1], [0], [0], [1], [0, 0, 1, 1], [], []>} : vector<2x64xf32>, vector<64x384xf32>, vector<2x384xf32> -> vector<2x384xf32>
    %141 = arith.addf %140, %9 : vector<2x384xf32>
    %142 = vector.extract_strided_slice %139 {offsets = [0, 0], sizes = [2, 128], strides = [1, 1]} : vector<2x384xf32> to vector<2x128xf32>
    %143 = vector.extract_strided_slice %141 {offsets = [0, 0], sizes = [2, 128], strides = [1, 1]} : vector<2x384xf32> to vector<2x128xf32>
    %144 = arith.addf %142, %143 : vector<2x128xf32>
    %145 = arith.negf %144 : vector<2x128xf32>
    %146 = math.exp %145 : vector<2x128xf32>
    %cst_27 = arith.constant 1.000000e+00 : f32
    %147 = vector.broadcast %cst_27 : f32 to vector<2x128xf32>
    %148 = arith.addf %147, %146 : vector<2x128xf32>
    %149 = arith.divf %147, %148 : vector<2x128xf32>
    %150 = vector.extract_strided_slice %139 {offsets = [0, 128], sizes = [2, 128], strides = [1, 1]} : vector<2x384xf32> to vector<2x128xf32>
    %151 = vector.extract_strided_slice %141 {offsets = [0, 128], sizes = [2, 128], strides = [1, 1]} : vector<2x384xf32> to vector<2x128xf32>
    %152 = arith.addf %150, %151 : vector<2x128xf32>
    %153 = arith.negf %152 : vector<2x128xf32>
    %154 = math.exp %153 : vector<2x128xf32>
    %cst_28 = arith.constant 1.000000e+00 : f32
    %155 = vector.broadcast %cst_28 : f32 to vector<2x128xf32>
    %156 = arith.addf %155, %154 : vector<2x128xf32>
    %157 = arith.divf %155, %156 : vector<2x128xf32>
    %158 = vector.extract_strided_slice %139 {offsets = [0, 256], sizes = [2, 128], strides = [1, 1]} : vector<2x384xf32> to vector<2x128xf32>
    %159 = vector.extract_strided_slice %141 {offsets = [0, 256], sizes = [2, 128], strides = [1, 1]} : vector<2x384xf32> to vector<2x128xf32>
    %160 = arith.mulf %149, %159 : vector<2x128xf32>
    %161 = arith.addf %158, %160 : vector<2x128xf32>
    %162 = math.tanh %161 : vector<2x128xf32>
    %163 = vector.extract_strided_slice %157 {offsets = [0, 0], sizes = [2, 64], strides = [1, 1]} : vector<2x128xf32> to vector<2x64xf32>
    %cst_29 = arith.constant 1.000000e+00 : f32
    %164 = vector.broadcast %cst_29 : f32 to vector<2x64xf32>
    %165 = arith.subf %164, %163 : vector<2x64xf32>
    %166 = vector.extract_strided_slice %162 {offsets = [0, 0], sizes = [2, 64], strides = [1, 1]} : vector<2x128xf32> to vector<2x64xf32>
    %167 = arith.mulf %165, %166 : vector<2x64xf32>
    %168 = vector.extract_strided_slice %157 {offsets = [0, 0], sizes = [2, 64], strides = [1, 1]} : vector<2x128xf32> to vector<2x64xf32>
    %169 = arith.mulf %168, %138 : vector<2x64xf32>
    %170 = arith.addf %167, %169 : vector<2x64xf32>
    %171 = vector.extract_strided_slice %5 {offsets = [10, 0], sizes = [2, 384], strides = [1, 1]} : vector<16x384xf32> to vector<2x384xf32>
    %cst_30 = arith.constant dense<0.000000e+00> : vector<2x384xf32>
    %172 = tpu.matmul %170, %6, %cst_30 {dimension_numbers = #tpu.dot_dimension_numbers<[1], [0], [0], [1], [0, 0, 1, 1], [], []>} : vector<2x64xf32>, vector<64x384xf32>, vector<2x384xf32> -> vector<2x384xf32>
    %173 = arith.addf %172, %9 : vector<2x384xf32>
    %174 = vector.extract_strided_slice %171 {offsets = [0, 0], sizes = [2, 128], strides = [1, 1]} : vector<2x384xf32> to vector<2x128xf32>
    %175 = vector.extract_strided_slice %173 {offsets = [0, 0], sizes = [2, 128], strides = [1, 1]} : vector<2x384xf32> to vector<2x128xf32>
    %176 = arith.addf %174, %175 : vector<2x128xf32>
    %177 = arith.negf %176 : vector<2x128xf32>
    %178 = math.exp %177 : vector<2x128xf32>
    %cst_31 = arith.constant 1.000000e+00 : f32
    %179 = vector.broadcast %cst_31 : f32 to vector<2x128xf32>
    %180 = arith.addf %179, %178 : vector<2x128xf32>
    %181 = arith.divf %179, %180 : vector<2x128xf32>
    %182 = vector.extract_strided_slice %171 {offsets = [0, 128], sizes = [2, 128], strides = [1, 1]} : vector<2x384xf32> to vector<2x128xf32>
    %183 = vector.extract_strided_slice %173 {offsets = [0, 128], sizes = [2, 128], strides = [1, 1]} : vector<2x384xf32> to vector<2x128xf32>
    %184 = arith.addf %182, %183 : vector<2x128xf32>
    %185 = arith.negf %184 : vector<2x128xf32>
    %186 = math.exp %185 : vector<2x128xf32>
    %cst_32 = arith.constant 1.000000e+00 : f32
    %187 = vector.broadcast %cst_32 : f32 to vector<2x128xf32>
    %188 = arith.addf %187, %186 : vector<2x128xf32>
    %189 = arith.divf %187, %188 : vector<2x128xf32>
    %190 = vector.extract_strided_slice %171 {offsets = [0, 256], sizes = [2, 128], strides = [1, 1]} : vector<2x384xf32> to vector<2x128xf32>
    %191 = vector.extract_strided_slice %173 {offsets = [0, 256], sizes = [2, 128], strides = [1, 1]} : vector<2x384xf32> to vector<2x128xf32>
    %192 = arith.mulf %181, %191 : vector<2x128xf32>
    %193 = arith.addf %190, %192 : vector<2x128xf32>
    %194 = math.tanh %193 : vector<2x128xf32>
    %195 = vector.extract_strided_slice %189 {offsets = [0, 0], sizes = [2, 64], strides = [1, 1]} : vector<2x128xf32> to vector<2x64xf32>
    %cst_33 = arith.constant 1.000000e+00 : f32
    %196 = vector.broadcast %cst_33 : f32 to vector<2x64xf32>
    %197 = arith.subf %196, %195 : vector<2x64xf32>
    %198 = vector.extract_strided_slice %194 {offsets = [0, 0], sizes = [2, 64], strides = [1, 1]} : vector<2x128xf32> to vector<2x64xf32>
    %199 = arith.mulf %197, %198 : vector<2x64xf32>
    %200 = vector.extract_strided_slice %189 {offsets = [0, 0], sizes = [2, 64], strides = [1, 1]} : vector<2x128xf32> to vector<2x64xf32>
    %201 = arith.mulf %200, %170 : vector<2x64xf32>
    %202 = arith.addf %199, %201 : vector<2x64xf32>
    %203 = vector.extract_strided_slice %5 {offsets = [12, 0], sizes = [2, 384], strides = [1, 1]} : vector<16x384xf32> to vector<2x384xf32>
    %cst_34 = arith.constant dense<0.000000e+00> : vector<2x384xf32>
    %204 = tpu.matmul %202, %6, %cst_34 {dimension_numbers = #tpu.dot_dimension_numbers<[1], [0], [0], [1], [0, 0, 1, 1], [], []>} : vector<2x64xf32>, vector<64x384xf32>, vector<2x384xf32> -> vector<2x384xf32>
    %205 = arith.addf %204, %9 : vector<2x384xf32>
    %206 = vector.extract_strided_slice %203 {offsets = [0, 0], sizes = [2, 128], strides = [1, 1]} : vector<2x384xf32> to vector<2x128xf32>
    %207 = vector.extract_strided_slice %205 {offsets = [0, 0], sizes = [2, 128], strides = [1, 1]} : vector<2x384xf32> to vector<2x128xf32>
    %208 = arith.addf %206, %207 : vector<2x128xf32>
    %209 = arith.negf %208 : vector<2x128xf32>
    %210 = math.exp %209 : vector<2x128xf32>
    %cst_35 = arith.constant 1.000000e+00 : f32
    %211 = vector.broadcast %cst_35 : f32 to vector<2x128xf32>
    %212 = arith.addf %211, %210 : vector<2x128xf32>
    %213 = arith.divf %211, %212 : vector<2x128xf32>
    %214 = vector.extract_strided_slice %203 {offsets = [0, 128], sizes = [2, 128], strides = [1, 1]} : vector<2x384xf32> to vector<2x128xf32>
    %215 = vector.extract_strided_slice %205 {offsets = [0, 128], sizes = [2, 128], strides = [1, 1]} : vector<2x384xf32> to vector<2x128xf32>
    %216 = arith.addf %214, %215 : vector<2x128xf32>
    %217 = arith.negf %216 : vector<2x128xf32>
    %218 = math.exp %217 : vector<2x128xf32>
    %cst_36 = arith.constant 1.000000e+00 : f32
    %219 = vector.broadcast %cst_36 : f32 to vector<2x128xf32>
    %220 = arith.addf %219, %218 : vector<2x128xf32>
    %221 = arith.divf %219, %220 : vector<2x128xf32>
    %222 = vector.extract_strided_slice %203 {offsets = [0, 256], sizes = [2, 128], strides = [1, 1]} : vector<2x384xf32> to vector<2x128xf32>
    %223 = vector.extract_strided_slice %205 {offsets = [0, 256], sizes = [2, 128], strides = [1, 1]} : vector<2x384xf32> to vector<2x128xf32>
    %224 = arith.mulf %213, %223 : vector<2x128xf32>
    %225 = arith.addf %222, %224 : vector<2x128xf32>
    %226 = math.tanh %225 : vector<2x128xf32>
    %227 = vector.extract_strided_slice %221 {offsets = [0, 0], sizes = [2, 64], strides = [1, 1]} : vector<2x128xf32> to vector<2x64xf32>
    %cst_37 = arith.constant 1.000000e+00 : f32
    %228 = vector.broadcast %cst_37 : f32 to vector<2x64xf32>
    %229 = arith.subf %228, %227 : vector<2x64xf32>
    %230 = vector.extract_strided_slice %226 {offsets = [0, 0], sizes = [2, 64], strides = [1, 1]} : vector<2x128xf32> to vector<2x64xf32>
    %231 = arith.mulf %229, %230 : vector<2x64xf32>
    %232 = vector.extract_strided_slice %221 {offsets = [0, 0], sizes = [2, 64], strides = [1, 1]} : vector<2x128xf32> to vector<2x64xf32>
    %233 = arith.mulf %232, %202 : vector<2x64xf32>
    %234 = arith.addf %231, %233 : vector<2x64xf32>
    %235 = vector.extract_strided_slice %5 {offsets = [14, 0], sizes = [2, 384], strides = [1, 1]} : vector<16x384xf32> to vector<2x384xf32>
    %cst_38 = arith.constant dense<0.000000e+00> : vector<2x384xf32>
    %236 = tpu.matmul %234, %6, %cst_38 {dimension_numbers = #tpu.dot_dimension_numbers<[1], [0], [0], [1], [0, 0, 1, 1], [], []>} : vector<2x64xf32>, vector<64x384xf32>, vector<2x384xf32> -> vector<2x384xf32>
    %237 = arith.addf %236, %9 : vector<2x384xf32>
    %238 = vector.extract_strided_slice %235 {offsets = [0, 0], sizes = [2, 128], strides = [1, 1]} : vector<2x384xf32> to vector<2x128xf32>
    %239 = vector.extract_strided_slice %237 {offsets = [0, 0], sizes = [2, 128], strides = [1, 1]} : vector<2x384xf32> to vector<2x128xf32>
    %240 = arith.addf %238, %239 : vector<2x128xf32>
    %241 = arith.negf %240 : vector<2x128xf32>
    %242 = math.exp %241 : vector<2x128xf32>
    %cst_39 = arith.constant 1.000000e+00 : f32
    %243 = vector.broadcast %cst_39 : f32 to vector<2x128xf32>
    %244 = arith.addf %243, %242 : vector<2x128xf32>
    %245 = arith.divf %243, %244 : vector<2x128xf32>
    %246 = vector.extract_strided_slice %235 {offsets = [0, 128], sizes = [2, 128], strides = [1, 1]} : vector<2x384xf32> to vector<2x128xf32>
    %247 = vector.extract_strided_slice %237 {offsets = [0, 128], sizes = [2, 128], strides = [1, 1]} : vector<2x384xf32> to vector<2x128xf32>
    %248 = arith.addf %246, %247 : vector<2x128xf32>
    %249 = arith.negf %248 : vector<2x128xf32>
    %250 = math.exp %249 : vector<2x128xf32>
    %cst_40 = arith.constant 1.000000e+00 : f32
    %251 = vector.broadcast %cst_40 : f32 to vector<2x128xf32>
    %252 = arith.addf %251, %250 : vector<2x128xf32>
    %253 = arith.divf %251, %252 : vector<2x128xf32>
    %254 = vector.extract_strided_slice %235 {offsets = [0, 256], sizes = [2, 128], strides = [1, 1]} : vector<2x384xf32> to vector<2x128xf32>
    %255 = vector.extract_strided_slice %237 {offsets = [0, 256], sizes = [2, 128], strides = [1, 1]} : vector<2x384xf32> to vector<2x128xf32>
    %256 = arith.mulf %245, %255 : vector<2x128xf32>
    %257 = arith.addf %254, %256 : vector<2x128xf32>
    %258 = math.tanh %257 : vector<2x128xf32>
    %259 = vector.extract_strided_slice %253 {offsets = [0, 0], sizes = [2, 64], strides = [1, 1]} : vector<2x128xf32> to vector<2x64xf32>
    %cst_41 = arith.constant 1.000000e+00 : f32
    %260 = vector.broadcast %cst_41 : f32 to vector<2x64xf32>
    %261 = arith.subf %260, %259 : vector<2x64xf32>
    %262 = vector.extract_strided_slice %258 {offsets = [0, 0], sizes = [2, 64], strides = [1, 1]} : vector<2x128xf32> to vector<2x64xf32>
    %263 = arith.mulf %261, %262 : vector<2x64xf32>
    %264 = vector.extract_strided_slice %253 {offsets = [0, 0], sizes = [2, 64], strides = [1, 1]} : vector<2x128xf32> to vector<2x64xf32>
    %265 = arith.mulf %264, %234 : vector<2x64xf32>
    %266 = arith.addf %263, %265 : vector<2x64xf32>
    %c0_42 = arith.constant 0 : index
    %c0_43 = arith.constant 0 : index
    %267 = vector.load %arg6[%c0_42, %c0_43] : memref<64x32xf32, #tpu.memory_space<vmem>>, vector<64x32xf32>
    %cst_44 = arith.constant dense<0.000000e+00> : vector<2x32xf32>
    %268 = tpu.matmul %266, %267, %cst_44 {dimension_numbers = #tpu.dot_dimension_numbers<[1], [0], [0], [1], [0, 0, 1, 1], [], []>} : vector<2x64xf32>, vector<64x32xf32>, vector<2x32xf32> -> vector<2x32xf32>
    %c0_45 = arith.constant 0 : index
    %c0_46 = arith.constant 0 : index
    %269 = vector.load %arg7[%c0_45, %c0_46] : memref<1x32xf32, #tpu.memory_space<vmem>>, vector<1x32xf32>
    %270 = vector.broadcast %269 : vector<1x32xf32> to vector<2x32xf32>
    %271 = arith.addf %268, %270 : vector<2x32xf32>
    %c0_47 = arith.constant 0 : index
    %c0_48 = arith.constant 0 : index
    %272 = vector.load %arg1[%c0_47, %c0_48] : memref<16x32xf32, #tpu.memory_space<vmem>>, vector<16x32xf32>
    %c0_49 = arith.constant 0 : index
    %c0_50 = arith.constant 0 : index
    %273 = vector.load %arg8[%c0_49, %c0_50] : memref<32x384xf32, #tpu.memory_space<vmem>>, vector<32x384xf32>
    %cst_51 = arith.constant dense<0.000000e+00> : vector<16x384xf32>
    %274 = tpu.matmul %272, %273, %cst_51 {dimension_numbers = #tpu.dot_dimension_numbers<[1], [0], [0], [1], [0, 0, 1, 1], [], []>} : vector<16x32xf32>, vector<32x384xf32>, vector<16x384xf32> -> vector<16x384xf32>
    %c0_52 = arith.constant 0 : index
    %c0_53 = arith.constant 0 : index
    %275 = vector.load %arg10[%c0_52, %c0_53] : memref<1x384xf32, #tpu.memory_space<vmem>>, vector<1x384xf32>
    %276 = vector.broadcast %275 : vector<1x384xf32> to vector<16x384xf32>
    %277 = arith.addf %274, %276 : vector<16x384xf32>
    %c0_54 = arith.constant 0 : index
    %c0_55 = arith.constant 0 : index
    %278 = vector.load %arg9[%c0_54, %c0_55] : memref<32x384xf32, #tpu.memory_space<vmem>>, vector<32x384xf32>
    %c0_56 = arith.constant 0 : index
    %c0_57 = arith.constant 0 : index
    %279 = vector.load %arg11[%c0_56, %c0_57] : memref<1x384xf32, #tpu.memory_space<vmem>>, vector<1x384xf32>
    %280 = vector.shape_cast %279 : vector<1x384xf32> to vector<1x384xf32>
    %281 = vector.broadcast %280 : vector<1x384xf32> to vector<2x384xf32>
    %282 = vector.extract_strided_slice %277 {offsets = [0, 0], sizes = [2, 384], strides = [1, 1]} : vector<16x384xf32> to vector<2x384xf32>
    %cst_58 = arith.constant dense<0.000000e+00> : vector<2x384xf32>
    %283 = tpu.matmul %271, %278, %cst_58 {dimension_numbers = #tpu.dot_dimension_numbers<[1], [0], [0], [1], [0, 0, 1, 1], [], []>} : vector<2x32xf32>, vector<32x384xf32>, vector<2x384xf32> -> vector<2x384xf32>
    %284 = arith.addf %283, %281 : vector<2x384xf32>
    %285 = vector.extract_strided_slice %282 {offsets = [0, 0], sizes = [2, 128], strides = [1, 1]} : vector<2x384xf32> to vector<2x128xf32>
    %286 = vector.extract_strided_slice %284 {offsets = [0, 0], sizes = [2, 128], strides = [1, 1]} : vector<2x384xf32> to vector<2x128xf32>
    %287 = arith.addf %285, %286 : vector<2x128xf32>
    %288 = arith.negf %287 : vector<2x128xf32>
    %289 = math.exp %288 : vector<2x128xf32>
    %cst_59 = arith.constant 1.000000e+00 : f32
    %290 = vector.broadcast %cst_59 : f32 to vector<2x128xf32>
    %291 = arith.addf %290, %289 : vector<2x128xf32>
    %292 = arith.divf %290, %291 : vector<2x128xf32>
    %293 = vector.extract_strided_slice %282 {offsets = [0, 128], sizes = [2, 128], strides = [1, 1]} : vector<2x384xf32> to vector<2x128xf32>
    %294 = vector.extract_strided_slice %284 {offsets = [0, 128], sizes = [2, 128], strides = [1, 1]} : vector<2x384xf32> to vector<2x128xf32>
    %295 = arith.addf %293, %294 : vector<2x128xf32>
    %296 = arith.negf %295 : vector<2x128xf32>
    %297 = math.exp %296 : vector<2x128xf32>
    %cst_60 = arith.constant 1.000000e+00 : f32
    %298 = vector.broadcast %cst_60 : f32 to vector<2x128xf32>
    %299 = arith.addf %298, %297 : vector<2x128xf32>
    %300 = arith.divf %298, %299 : vector<2x128xf32>
    %301 = vector.extract_strided_slice %282 {offsets = [0, 256], sizes = [2, 128], strides = [1, 1]} : vector<2x384xf32> to vector<2x128xf32>
    %302 = vector.extract_strided_slice %284 {offsets = [0, 256], sizes = [2, 128], strides = [1, 1]} : vector<2x384xf32> to vector<2x128xf32>
    %303 = arith.mulf %292, %302 : vector<2x128xf32>
    %304 = arith.addf %301, %303 : vector<2x128xf32>
    %305 = math.tanh %304 : vector<2x128xf32>
    %306 = vector.extract_strided_slice %300 {offsets = [0, 0], sizes = [2, 32], strides = [1, 1]} : vector<2x128xf32> to vector<2x32xf32>
    %cst_61 = arith.constant 1.000000e+00 : f32
    %307 = vector.broadcast %cst_61 : f32 to vector<2x32xf32>
    %308 = arith.subf %307, %306 : vector<2x32xf32>
    %309 = vector.extract_strided_slice %305 {offsets = [0, 0], sizes = [2, 32], strides = [1, 1]} : vector<2x128xf32> to vector<2x32xf32>
    %310 = arith.mulf %308, %309 : vector<2x32xf32>
    %311 = vector.extract_strided_slice %300 {offsets = [0, 0], sizes = [2, 32], strides = [1, 1]} : vector<2x128xf32> to vector<2x32xf32>
    %312 = arith.mulf %311, %271 : vector<2x32xf32>
    %313 = arith.addf %310, %312 : vector<2x32xf32>
    %314 = vector.extract_strided_slice %277 {offsets = [2, 0], sizes = [2, 384], strides = [1, 1]} : vector<16x384xf32> to vector<2x384xf32>
    %cst_62 = arith.constant dense<0.000000e+00> : vector<2x384xf32>
    %315 = tpu.matmul %313, %278, %cst_62 {dimension_numbers = #tpu.dot_dimension_numbers<[1], [0], [0], [1], [0, 0, 1, 1], [], []>} : vector<2x32xf32>, vector<32x384xf32>, vector<2x384xf32> -> vector<2x384xf32>
    %316 = arith.addf %315, %281 : vector<2x384xf32>
    %317 = vector.extract_strided_slice %314 {offsets = [0, 0], sizes = [2, 128], strides = [1, 1]} : vector<2x384xf32> to vector<2x128xf32>
    %318 = vector.extract_strided_slice %316 {offsets = [0, 0], sizes = [2, 128], strides = [1, 1]} : vector<2x384xf32> to vector<2x128xf32>
    %319 = arith.addf %317, %318 : vector<2x128xf32>
    %320 = arith.negf %319 : vector<2x128xf32>
    %321 = math.exp %320 : vector<2x128xf32>
    %cst_63 = arith.constant 1.000000e+00 : f32
    %322 = vector.broadcast %cst_63 : f32 to vector<2x128xf32>
    %323 = arith.addf %322, %321 : vector<2x128xf32>
    %324 = arith.divf %322, %323 : vector<2x128xf32>
    %325 = vector.extract_strided_slice %314 {offsets = [0, 128], sizes = [2, 128], strides = [1, 1]} : vector<2x384xf32> to vector<2x128xf32>
    %326 = vector.extract_strided_slice %316 {offsets = [0, 128], sizes = [2, 128], strides = [1, 1]} : vector<2x384xf32> to vector<2x128xf32>
    %327 = arith.addf %325, %326 : vector<2x128xf32>
    %328 = arith.negf %327 : vector<2x128xf32>
    %329 = math.exp %328 : vector<2x128xf32>
    %cst_64 = arith.constant 1.000000e+00 : f32
    %330 = vector.broadcast %cst_64 : f32 to vector<2x128xf32>
    %331 = arith.addf %330, %329 : vector<2x128xf32>
    %332 = arith.divf %330, %331 : vector<2x128xf32>
    %333 = vector.extract_strided_slice %314 {offsets = [0, 256], sizes = [2, 128], strides = [1, 1]} : vector<2x384xf32> to vector<2x128xf32>
    %334 = vector.extract_strided_slice %316 {offsets = [0, 256], sizes = [2, 128], strides = [1, 1]} : vector<2x384xf32> to vector<2x128xf32>
    %335 = arith.mulf %324, %334 : vector<2x128xf32>
    %336 = arith.addf %333, %335 : vector<2x128xf32>
    %337 = math.tanh %336 : vector<2x128xf32>
    %338 = vector.extract_strided_slice %332 {offsets = [0, 0], sizes = [2, 32], strides = [1, 1]} : vector<2x128xf32> to vector<2x32xf32>
    %cst_65 = arith.constant 1.000000e+00 : f32
    %339 = vector.broadcast %cst_65 : f32 to vector<2x32xf32>
    %340 = arith.subf %339, %338 : vector<2x32xf32>
    %341 = vector.extract_strided_slice %337 {offsets = [0, 0], sizes = [2, 32], strides = [1, 1]} : vector<2x128xf32> to vector<2x32xf32>
    %342 = arith.mulf %340, %341 : vector<2x32xf32>
    %343 = vector.extract_strided_slice %332 {offsets = [0, 0], sizes = [2, 32], strides = [1, 1]} : vector<2x128xf32> to vector<2x32xf32>
    %344 = arith.mulf %343, %313 : vector<2x32xf32>
    %345 = arith.addf %342, %344 : vector<2x32xf32>
    %346 = vector.extract_strided_slice %277 {offsets = [4, 0], sizes = [2, 384], strides = [1, 1]} : vector<16x384xf32> to vector<2x384xf32>
    %cst_66 = arith.constant dense<0.000000e+00> : vector<2x384xf32>
    %347 = tpu.matmul %345, %278, %cst_66 {dimension_numbers = #tpu.dot_dimension_numbers<[1], [0], [0], [1], [0, 0, 1, 1], [], []>} : vector<2x32xf32>, vector<32x384xf32>, vector<2x384xf32> -> vector<2x384xf32>
    %348 = arith.addf %347, %281 : vector<2x384xf32>
    %349 = vector.extract_strided_slice %346 {offsets = [0, 0], sizes = [2, 128], strides = [1, 1]} : vector<2x384xf32> to vector<2x128xf32>
    %350 = vector.extract_strided_slice %348 {offsets = [0, 0], sizes = [2, 128], strides = [1, 1]} : vector<2x384xf32> to vector<2x128xf32>
    %351 = arith.addf %349, %350 : vector<2x128xf32>
    %352 = arith.negf %351 : vector<2x128xf32>
    %353 = math.exp %352 : vector<2x128xf32>
    %cst_67 = arith.constant 1.000000e+00 : f32
    %354 = vector.broadcast %cst_67 : f32 to vector<2x128xf32>
    %355 = arith.addf %354, %353 : vector<2x128xf32>
    %356 = arith.divf %354, %355 : vector<2x128xf32>
    %357 = vector.extract_strided_slice %346 {offsets = [0, 128], sizes = [2, 128], strides = [1, 1]} : vector<2x384xf32> to vector<2x128xf32>
    %358 = vector.extract_strided_slice %348 {offsets = [0, 128], sizes = [2, 128], strides = [1, 1]} : vector<2x384xf32> to vector<2x128xf32>
    %359 = arith.addf %357, %358 : vector<2x128xf32>
    %360 = arith.negf %359 : vector<2x128xf32>
    %361 = math.exp %360 : vector<2x128xf32>
    %cst_68 = arith.constant 1.000000e+00 : f32
    %362 = vector.broadcast %cst_68 : f32 to vector<2x128xf32>
    %363 = arith.addf %362, %361 : vector<2x128xf32>
    %364 = arith.divf %362, %363 : vector<2x128xf32>
    %365 = vector.extract_strided_slice %346 {offsets = [0, 256], sizes = [2, 128], strides = [1, 1]} : vector<2x384xf32> to vector<2x128xf32>
    %366 = vector.extract_strided_slice %348 {offsets = [0, 256], sizes = [2, 128], strides = [1, 1]} : vector<2x384xf32> to vector<2x128xf32>
    %367 = arith.mulf %356, %366 : vector<2x128xf32>
    %368 = arith.addf %365, %367 : vector<2x128xf32>
    %369 = math.tanh %368 : vector<2x128xf32>
    %370 = vector.extract_strided_slice %364 {offsets = [0, 0], sizes = [2, 32], strides = [1, 1]} : vector<2x128xf32> to vector<2x32xf32>
    %cst_69 = arith.constant 1.000000e+00 : f32
    %371 = vector.broadcast %cst_69 : f32 to vector<2x32xf32>
    %372 = arith.subf %371, %370 : vector<2x32xf32>
    %373 = vector.extract_strided_slice %369 {offsets = [0, 0], sizes = [2, 32], strides = [1, 1]} : vector<2x128xf32> to vector<2x32xf32>
    %374 = arith.mulf %372, %373 : vector<2x32xf32>
    %375 = vector.extract_strided_slice %364 {offsets = [0, 0], sizes = [2, 32], strides = [1, 1]} : vector<2x128xf32> to vector<2x32xf32>
    %376 = arith.mulf %375, %345 : vector<2x32xf32>
    %377 = arith.addf %374, %376 : vector<2x32xf32>
    %378 = vector.extract_strided_slice %277 {offsets = [6, 0], sizes = [2, 384], strides = [1, 1]} : vector<16x384xf32> to vector<2x384xf32>
    %cst_70 = arith.constant dense<0.000000e+00> : vector<2x384xf32>
    %379 = tpu.matmul %377, %278, %cst_70 {dimension_numbers = #tpu.dot_dimension_numbers<[1], [0], [0], [1], [0, 0, 1, 1], [], []>} : vector<2x32xf32>, vector<32x384xf32>, vector<2x384xf32> -> vector<2x384xf32>
    %380 = arith.addf %379, %281 : vector<2x384xf32>
    %381 = vector.extract_strided_slice %378 {offsets = [0, 0], sizes = [2, 128], strides = [1, 1]} : vector<2x384xf32> to vector<2x128xf32>
    %382 = vector.extract_strided_slice %380 {offsets = [0, 0], sizes = [2, 128], strides = [1, 1]} : vector<2x384xf32> to vector<2x128xf32>
    %383 = arith.addf %381, %382 : vector<2x128xf32>
    %384 = arith.negf %383 : vector<2x128xf32>
    %385 = math.exp %384 : vector<2x128xf32>
    %cst_71 = arith.constant 1.000000e+00 : f32
    %386 = vector.broadcast %cst_71 : f32 to vector<2x128xf32>
    %387 = arith.addf %386, %385 : vector<2x128xf32>
    %388 = arith.divf %386, %387 : vector<2x128xf32>
    %389 = vector.extract_strided_slice %378 {offsets = [0, 128], sizes = [2, 128], strides = [1, 1]} : vector<2x384xf32> to vector<2x128xf32>
    %390 = vector.extract_strided_slice %380 {offsets = [0, 128], sizes = [2, 128], strides = [1, 1]} : vector<2x384xf32> to vector<2x128xf32>
    %391 = arith.addf %389, %390 : vector<2x128xf32>
    %392 = arith.negf %391 : vector<2x128xf32>
    %393 = math.exp %392 : vector<2x128xf32>
    %cst_72 = arith.constant 1.000000e+00 : f32
    %394 = vector.broadcast %cst_72 : f32 to vector<2x128xf32>
    %395 = arith.addf %394, %393 : vector<2x128xf32>
    %396 = arith.divf %394, %395 : vector<2x128xf32>
    %397 = vector.extract_strided_slice %378 {offsets = [0, 256], sizes = [2, 128], strides = [1, 1]} : vector<2x384xf32> to vector<2x128xf32>
    %398 = vector.extract_strided_slice %380 {offsets = [0, 256], sizes = [2, 128], strides = [1, 1]} : vector<2x384xf32> to vector<2x128xf32>
    %399 = arith.mulf %388, %398 : vector<2x128xf32>
    %400 = arith.addf %397, %399 : vector<2x128xf32>
    %401 = math.tanh %400 : vector<2x128xf32>
    %402 = vector.extract_strided_slice %396 {offsets = [0, 0], sizes = [2, 32], strides = [1, 1]} : vector<2x128xf32> to vector<2x32xf32>
    %cst_73 = arith.constant 1.000000e+00 : f32
    %403 = vector.broadcast %cst_73 : f32 to vector<2x32xf32>
    %404 = arith.subf %403, %402 : vector<2x32xf32>
    %405 = vector.extract_strided_slice %401 {offsets = [0, 0], sizes = [2, 32], strides = [1, 1]} : vector<2x128xf32> to vector<2x32xf32>
    %406 = arith.mulf %404, %405 : vector<2x32xf32>
    %407 = vector.extract_strided_slice %396 {offsets = [0, 0], sizes = [2, 32], strides = [1, 1]} : vector<2x128xf32> to vector<2x32xf32>
    %408 = arith.mulf %407, %377 : vector<2x32xf32>
    %409 = arith.addf %406, %408 : vector<2x32xf32>
    %410 = vector.extract_strided_slice %277 {offsets = [8, 0], sizes = [2, 384], strides = [1, 1]} : vector<16x384xf32> to vector<2x384xf32>
    %cst_74 = arith.constant dense<0.000000e+00> : vector<2x384xf32>
    %411 = tpu.matmul %409, %278, %cst_74 {dimension_numbers = #tpu.dot_dimension_numbers<[1], [0], [0], [1], [0, 0, 1, 1], [], []>} : vector<2x32xf32>, vector<32x384xf32>, vector<2x384xf32> -> vector<2x384xf32>
    %412 = arith.addf %411, %281 : vector<2x384xf32>
    %413 = vector.extract_strided_slice %410 {offsets = [0, 0], sizes = [2, 128], strides = [1, 1]} : vector<2x384xf32> to vector<2x128xf32>
    %414 = vector.extract_strided_slice %412 {offsets = [0, 0], sizes = [2, 128], strides = [1, 1]} : vector<2x384xf32> to vector<2x128xf32>
    %415 = arith.addf %413, %414 : vector<2x128xf32>
    %416 = arith.negf %415 : vector<2x128xf32>
    %417 = math.exp %416 : vector<2x128xf32>
    %cst_75 = arith.constant 1.000000e+00 : f32
    %418 = vector.broadcast %cst_75 : f32 to vector<2x128xf32>
    %419 = arith.addf %418, %417 : vector<2x128xf32>
    %420 = arith.divf %418, %419 : vector<2x128xf32>
    %421 = vector.extract_strided_slice %410 {offsets = [0, 128], sizes = [2, 128], strides = [1, 1]} : vector<2x384xf32> to vector<2x128xf32>
    %422 = vector.extract_strided_slice %412 {offsets = [0, 128], sizes = [2, 128], strides = [1, 1]} : vector<2x384xf32> to vector<2x128xf32>
    %423 = arith.addf %421, %422 : vector<2x128xf32>
    %424 = arith.negf %423 : vector<2x128xf32>
    %425 = math.exp %424 : vector<2x128xf32>
    %cst_76 = arith.constant 1.000000e+00 : f32
    %426 = vector.broadcast %cst_76 : f32 to vector<2x128xf32>
    %427 = arith.addf %426, %425 : vector<2x128xf32>
    %428 = arith.divf %426, %427 : vector<2x128xf32>
    %429 = vector.extract_strided_slice %410 {offsets = [0, 256], sizes = [2, 128], strides = [1, 1]} : vector<2x384xf32> to vector<2x128xf32>
    %430 = vector.extract_strided_slice %412 {offsets = [0, 256], sizes = [2, 128], strides = [1, 1]} : vector<2x384xf32> to vector<2x128xf32>
    %431 = arith.mulf %420, %430 : vector<2x128xf32>
    %432 = arith.addf %429, %431 : vector<2x128xf32>
    %433 = math.tanh %432 : vector<2x128xf32>
    %434 = vector.extract_strided_slice %428 {offsets = [0, 0], sizes = [2, 32], strides = [1, 1]} : vector<2x128xf32> to vector<2x32xf32>
    %cst_77 = arith.constant 1.000000e+00 : f32
    %435 = vector.broadcast %cst_77 : f32 to vector<2x32xf32>
    %436 = arith.subf %435, %434 : vector<2x32xf32>
    %437 = vector.extract_strided_slice %433 {offsets = [0, 0], sizes = [2, 32], strides = [1, 1]} : vector<2x128xf32> to vector<2x32xf32>
    %438 = arith.mulf %436, %437 : vector<2x32xf32>
    %439 = vector.extract_strided_slice %428 {offsets = [0, 0], sizes = [2, 32], strides = [1, 1]} : vector<2x128xf32> to vector<2x32xf32>
    %440 = arith.mulf %439, %409 : vector<2x32xf32>
    %441 = arith.addf %438, %440 : vector<2x32xf32>
    %442 = vector.extract_strided_slice %277 {offsets = [10, 0], sizes = [2, 384], strides = [1, 1]} : vector<16x384xf32> to vector<2x384xf32>
    %cst_78 = arith.constant dense<0.000000e+00> : vector<2x384xf32>
    %443 = tpu.matmul %441, %278, %cst_78 {dimension_numbers = #tpu.dot_dimension_numbers<[1], [0], [0], [1], [0, 0, 1, 1], [], []>} : vector<2x32xf32>, vector<32x384xf32>, vector<2x384xf32> -> vector<2x384xf32>
    %444 = arith.addf %443, %281 : vector<2x384xf32>
    %445 = vector.extract_strided_slice %442 {offsets = [0, 0], sizes = [2, 128], strides = [1, 1]} : vector<2x384xf32> to vector<2x128xf32>
    %446 = vector.extract_strided_slice %444 {offsets = [0, 0], sizes = [2, 128], strides = [1, 1]} : vector<2x384xf32> to vector<2x128xf32>
    %447 = arith.addf %445, %446 : vector<2x128xf32>
    %448 = arith.negf %447 : vector<2x128xf32>
    %449 = math.exp %448 : vector<2x128xf32>
    %cst_79 = arith.constant 1.000000e+00 : f32
    %450 = vector.broadcast %cst_79 : f32 to vector<2x128xf32>
    %451 = arith.addf %450, %449 : vector<2x128xf32>
    %452 = arith.divf %450, %451 : vector<2x128xf32>
    %453 = vector.extract_strided_slice %442 {offsets = [0, 128], sizes = [2, 128], strides = [1, 1]} : vector<2x384xf32> to vector<2x128xf32>
    %454 = vector.extract_strided_slice %444 {offsets = [0, 128], sizes = [2, 128], strides = [1, 1]} : vector<2x384xf32> to vector<2x128xf32>
    %455 = arith.addf %453, %454 : vector<2x128xf32>
    %456 = arith.negf %455 : vector<2x128xf32>
    %457 = math.exp %456 : vector<2x128xf32>
    %cst_80 = arith.constant 1.000000e+00 : f32
    %458 = vector.broadcast %cst_80 : f32 to vector<2x128xf32>
    %459 = arith.addf %458, %457 : vector<2x128xf32>
    %460 = arith.divf %458, %459 : vector<2x128xf32>
    %461 = vector.extract_strided_slice %442 {offsets = [0, 256], sizes = [2, 128], strides = [1, 1]} : vector<2x384xf32> to vector<2x128xf32>
    %462 = vector.extract_strided_slice %444 {offsets = [0, 256], sizes = [2, 128], strides = [1, 1]} : vector<2x384xf32> to vector<2x128xf32>
    %463 = arith.mulf %452, %462 : vector<2x128xf32>
    %464 = arith.addf %461, %463 : vector<2x128xf32>
    %465 = math.tanh %464 : vector<2x128xf32>
    %466 = vector.extract_strided_slice %460 {offsets = [0, 0], sizes = [2, 32], strides = [1, 1]} : vector<2x128xf32> to vector<2x32xf32>
    %cst_81 = arith.constant 1.000000e+00 : f32
    %467 = vector.broadcast %cst_81 : f32 to vector<2x32xf32>
    %468 = arith.subf %467, %466 : vector<2x32xf32>
    %469 = vector.extract_strided_slice %465 {offsets = [0, 0], sizes = [2, 32], strides = [1, 1]} : vector<2x128xf32> to vector<2x32xf32>
    %470 = arith.mulf %468, %469 : vector<2x32xf32>
    %471 = vector.extract_strided_slice %460 {offsets = [0, 0], sizes = [2, 32], strides = [1, 1]} : vector<2x128xf32> to vector<2x32xf32>
    %472 = arith.mulf %471, %441 : vector<2x32xf32>
    %473 = arith.addf %470, %472 : vector<2x32xf32>
    %474 = vector.extract_strided_slice %277 {offsets = [12, 0], sizes = [2, 384], strides = [1, 1]} : vector<16x384xf32> to vector<2x384xf32>
    %cst_82 = arith.constant dense<0.000000e+00> : vector<2x384xf32>
    %475 = tpu.matmul %473, %278, %cst_82 {dimension_numbers = #tpu.dot_dimension_numbers<[1], [0], [0], [1], [0, 0, 1, 1], [], []>} : vector<2x32xf32>, vector<32x384xf32>, vector<2x384xf32> -> vector<2x384xf32>
    %476 = arith.addf %475, %281 : vector<2x384xf32>
    %477 = vector.extract_strided_slice %474 {offsets = [0, 0], sizes = [2, 128], strides = [1, 1]} : vector<2x384xf32> to vector<2x128xf32>
    %478 = vector.extract_strided_slice %476 {offsets = [0, 0], sizes = [2, 128], strides = [1, 1]} : vector<2x384xf32> to vector<2x128xf32>
    %479 = arith.addf %477, %478 : vector<2x128xf32>
    %480 = arith.negf %479 : vector<2x128xf32>
    %481 = math.exp %480 : vector<2x128xf32>
    %cst_83 = arith.constant 1.000000e+00 : f32
    %482 = vector.broadcast %cst_83 : f32 to vector<2x128xf32>
    %483 = arith.addf %482, %481 : vector<2x128xf32>
    %484 = arith.divf %482, %483 : vector<2x128xf32>
    %485 = vector.extract_strided_slice %474 {offsets = [0, 128], sizes = [2, 128], strides = [1, 1]} : vector<2x384xf32> to vector<2x128xf32>
    %486 = vector.extract_strided_slice %476 {offsets = [0, 128], sizes = [2, 128], strides = [1, 1]} : vector<2x384xf32> to vector<2x128xf32>
    %487 = arith.addf %485, %486 : vector<2x128xf32>
    %488 = arith.negf %487 : vector<2x128xf32>
    %489 = math.exp %488 : vector<2x128xf32>
    %cst_84 = arith.constant 1.000000e+00 : f32
    %490 = vector.broadcast %cst_84 : f32 to vector<2x128xf32>
    %491 = arith.addf %490, %489 : vector<2x128xf32>
    %492 = arith.divf %490, %491 : vector<2x128xf32>
    %493 = vector.extract_strided_slice %474 {offsets = [0, 256], sizes = [2, 128], strides = [1, 1]} : vector<2x384xf32> to vector<2x128xf32>
    %494 = vector.extract_strided_slice %476 {offsets = [0, 256], sizes = [2, 128], strides = [1, 1]} : vector<2x384xf32> to vector<2x128xf32>
    %495 = arith.mulf %484, %494 : vector<2x128xf32>
    %496 = arith.addf %493, %495 : vector<2x128xf32>
    %497 = math.tanh %496 : vector<2x128xf32>
    %498 = vector.extract_strided_slice %492 {offsets = [0, 0], sizes = [2, 32], strides = [1, 1]} : vector<2x128xf32> to vector<2x32xf32>
    %cst_85 = arith.constant 1.000000e+00 : f32
    %499 = vector.broadcast %cst_85 : f32 to vector<2x32xf32>
    %500 = arith.subf %499, %498 : vector<2x32xf32>
    %501 = vector.extract_strided_slice %497 {offsets = [0, 0], sizes = [2, 32], strides = [1, 1]} : vector<2x128xf32> to vector<2x32xf32>
    %502 = arith.mulf %500, %501 : vector<2x32xf32>
    %503 = vector.extract_strided_slice %492 {offsets = [0, 0], sizes = [2, 32], strides = [1, 1]} : vector<2x128xf32> to vector<2x32xf32>
    %504 = arith.mulf %503, %473 : vector<2x32xf32>
    %505 = arith.addf %502, %504 : vector<2x32xf32>
    %506 = vector.extract_strided_slice %277 {offsets = [14, 0], sizes = [2, 384], strides = [1, 1]} : vector<16x384xf32> to vector<2x384xf32>
    %cst_86 = arith.constant dense<0.000000e+00> : vector<2x384xf32>
    %507 = tpu.matmul %505, %278, %cst_86 {dimension_numbers = #tpu.dot_dimension_numbers<[1], [0], [0], [1], [0, 0, 1, 1], [], []>} : vector<2x32xf32>, vector<32x384xf32>, vector<2x384xf32> -> vector<2x384xf32>
    %508 = arith.addf %507, %281 : vector<2x384xf32>
    %509 = vector.extract_strided_slice %506 {offsets = [0, 0], sizes = [2, 128], strides = [1, 1]} : vector<2x384xf32> to vector<2x128xf32>
    %510 = vector.extract_strided_slice %508 {offsets = [0, 0], sizes = [2, 128], strides = [1, 1]} : vector<2x384xf32> to vector<2x128xf32>
    %511 = arith.addf %509, %510 : vector<2x128xf32>
    %512 = arith.negf %511 : vector<2x128xf32>
    %513 = math.exp %512 : vector<2x128xf32>
    %cst_87 = arith.constant 1.000000e+00 : f32
    %514 = vector.broadcast %cst_87 : f32 to vector<2x128xf32>
    %515 = arith.addf %514, %513 : vector<2x128xf32>
    %516 = arith.divf %514, %515 : vector<2x128xf32>
    %517 = vector.extract_strided_slice %506 {offsets = [0, 128], sizes = [2, 128], strides = [1, 1]} : vector<2x384xf32> to vector<2x128xf32>
    %518 = vector.extract_strided_slice %508 {offsets = [0, 128], sizes = [2, 128], strides = [1, 1]} : vector<2x384xf32> to vector<2x128xf32>
    %519 = arith.addf %517, %518 : vector<2x128xf32>
    %520 = arith.negf %519 : vector<2x128xf32>
    %521 = math.exp %520 : vector<2x128xf32>
    %cst_88 = arith.constant 1.000000e+00 : f32
    %522 = vector.broadcast %cst_88 : f32 to vector<2x128xf32>
    %523 = arith.addf %522, %521 : vector<2x128xf32>
    %524 = arith.divf %522, %523 : vector<2x128xf32>
    %525 = vector.extract_strided_slice %506 {offsets = [0, 256], sizes = [2, 128], strides = [1, 1]} : vector<2x384xf32> to vector<2x128xf32>
    %526 = vector.extract_strided_slice %508 {offsets = [0, 256], sizes = [2, 128], strides = [1, 1]} : vector<2x384xf32> to vector<2x128xf32>
    %527 = arith.mulf %516, %526 : vector<2x128xf32>
    %528 = arith.addf %525, %527 : vector<2x128xf32>
    %529 = math.tanh %528 : vector<2x128xf32>
    %530 = vector.extract_strided_slice %524 {offsets = [0, 0], sizes = [2, 32], strides = [1, 1]} : vector<2x128xf32> to vector<2x32xf32>
    %cst_89 = arith.constant 1.000000e+00 : f32
    %531 = vector.broadcast %cst_89 : f32 to vector<2x32xf32>
    %532 = arith.subf %531, %530 : vector<2x32xf32>
    %533 = vector.extract_strided_slice %529 {offsets = [0, 0], sizes = [2, 32], strides = [1, 1]} : vector<2x128xf32> to vector<2x32xf32>
    %534 = arith.mulf %532, %533 : vector<2x32xf32>
    %535 = vector.extract_strided_slice %524 {offsets = [0, 0], sizes = [2, 32], strides = [1, 1]} : vector<2x128xf32> to vector<2x32xf32>
    %536 = arith.mulf %535, %505 : vector<2x32xf32>
    %537 = arith.addf %534, %536 : vector<2x32xf32>
    %538 = tpu.concatenate %313, %345, %377, %409, %441, %473, %505, %537 in 0 : vector<2x32xf32>, vector<2x32xf32>, vector<2x32xf32>, vector<2x32xf32>, vector<2x32xf32>, vector<2x32xf32>, vector<2x32xf32>, vector<2x32xf32> -> vector<16x32xf32>
    %c0_90 = arith.constant 0 : index
    %c0_91 = arith.constant 0 : index
    %539 = vector.load %arg12[%c0_90, %c0_91] : memref<32x128xf32, #tpu.memory_space<vmem>>, vector<32x128xf32>
    %cst_92 = arith.constant dense<0.000000e+00> : vector<16x128xf32>
    %540 = tpu.matmul %538, %539, %cst_92 {dimension_numbers = #tpu.dot_dimension_numbers<[1], [0], [0], [1], [0, 0, 1, 1], [], []>} : vector<16x32xf32>, vector<32x128xf32>, vector<16x128xf32> -> vector<16x128xf32>
    %c0_93 = arith.constant 0 : index
    %c0_94 = arith.constant 0 : index
    %541 = vector.load %arg13[%c0_93, %c0_94] : memref<1x128xf32, #tpu.memory_space<vmem>>, vector<1x128xf32>
    %542 = vector.broadcast %541 : vector<1x128xf32> to vector<16x128xf32>
    %543 = arith.addf %540, %542 : vector<16x128xf32>
    %cst_95 = arith.constant dense<0xFF800000> : vector<16xf32>
    %544 = vector.multi_reduction <maximumf>, %543, %cst_95 [1] : vector<16x128xf32> to vector<16xf32>
    %545 = vector.shape_cast %544 : vector<16xf32> to vector<16x1xf32>
    %546 = vector.broadcast %545 : vector<16x1xf32> to vector<16x128xf32>
    %547 = arith.subf %543, %546 : vector<16x128xf32>
    %548 = vector.broadcast %545 : vector<16x1xf32> to vector<16x128xf32>
    %549 = arith.subf %543, %548 : vector<16x128xf32>
    %550 = math.exp %549 : vector<16x128xf32>
    %cst_96 = arith.constant dense<0.000000e+00> : vector<16xf32>
    %551 = vector.multi_reduction <add>, %550, %cst_96 [1] : vector<16x128xf32> to vector<16xf32>
    %552 = vector.shape_cast %551 : vector<16xf32> to vector<16x1xf32>
    %553 = math.log %552 : vector<16x1xf32>
    %554 = vector.broadcast %553 : vector<16x1xf32> to vector<16x128xf32>
    %555 = arith.subf %547, %554 : vector<16x128xf32>
    %c0_97 = arith.constant 0 : index
    %c0_98 = arith.constant 0 : index
    %556 = vector.load %arg14[%c0_97, %c0_98] : memref<16x128xf32, #tpu.memory_space<vmem>>, vector<16x128xf32>
    tpu.vector_store %arg14[%c0_97, %c0_98], %555 {strides = array<i32>} : memref<16x128xf32, #tpu.memory_space<vmem>>, vector<16x128xf32>,
    return
  }
}

</mosaic_0001>

<llo_original>
// kernel: bert_s2s_forward.1
$region0: #{bert_s2s_forward.1}
  #allocation0 [shape = 'u32[]', space=smem, size = 0x4, offset = 0x4, fixed_abs, tag = 'smem constant byte address 0x4 - core index']
  #allocation1 [shape = 'u32[72,128]{1,0:T(1,128)}', space=vmem, size = 0x9000, scoped, tag = 'internal scratch']
  %s0 = inlined_call_operand.vmem [shape: f32[16,64], index: 0, kind: input, shape index: {}]
  %s1 = inlined_call_operand.vmem [shape: f32[16,32], index: 1, kind: input, shape index: {}]
  %s2 = inlined_call_operand.vmem [shape: f32[64,384], index: 2, kind: input, shape index: {}]
  %s3 = inlined_call_operand.hbm [shape: f32[64,384], index: 3, kind: input, shape index: {}]
  %s4 = inlined_call_operand.vmem [shape: f32[1,384], index: 4, kind: input, shape index: {}]
  %s5 = inlined_call_operand.vmem [shape: f32[1,384], index: 5, kind: input, shape index: {}]
  %s6 = inlined_call_operand.vmem [shape: f32[64,32], index: 6, kind: input, shape index: {}]
  %s7 = inlined_call_operand.vmem [shape: f32[1,32], index: 7, kind: input, shape index: {}]
  %s8 = inlined_call_operand.vmem [shape: f32[32,384], index: 8, kind: input, shape index: {}]
  %s9 = inlined_call_operand.hbm [shape: f32[32,384], index: 9, kind: input, shape index: {}]
  %s10 = inlined_call_operand.vmem [shape: f32[1,384], index: 10, kind: input, shape index: {}]
  %s11 = inlined_call_operand.vmem [shape: f32[1,384], index: 11, kind: input, shape index: {}]
  %s12 = inlined_call_operand.vmem [shape: f32[32,128], index: 12, kind: input, shape index: {}]
  %s13 = inlined_call_operand.vmem [shape: f32[1,128], index: 13, kind: input, shape index: {}]
  %s14 = inlined_call_operand.vmem [shape: f32[16,128], index: 14, kind: output, shape index: {}]
  %s15 = sld [smem:[#allocation0]]
  $region74: #{bert_s2s_forward.1} parent=0
    _
  %s17 = ssub.s32 1, %s15
  %s18 = scalar_select 0, %s17, %s15
  $region1: #{bert_s2s_forward.1} parent=0
    #allocation2 [shape = 'u8[98304]{0}', space=vmem, size = 0x18000, scoped, tag = 'input window, operand 3, single buffered']
    #allocation3 [shape = 's32[1]{0}', space=sflag, size = 0x4, scoped, tag = 'scoped memory for bert_s2s_forward.1']
    #allocation4 [shape = 'u8[49152]{0}', space=vmem, size = 0xc000, scoped, tag = 'input window, operand 9, single buffered']
    #allocation5 [shape = 's32[1]{0}', space=sflag, size = 0x4, scoped, tag = 'scoped memory for bert_s2s_forward.1']
    %19 = vsyncpa [#allocation3], 0
    %20 = vsyncpa [#allocation5], 0
    // Predicated region
    $region2: #{bert_s2s_forward.1} parent=1 // pred_check
      _
    $region3: #{bert_s2s_forward.1} parent=1 // pred_check_branch
      %22 = sbr.rel (0) target = $region5
    $region4: #{bert_s2s_forward.1} parent=1 // pred_region
      _
    $region5: #{bert_s2s_forward.1} parent=1 // pred_fallthru
      _
    // Predicated region
    $region6: #{bert_s2s_forward.1} parent=1 // pred_check
      _
    $region7: #{bert_s2s_forward.1} parent=1 // pred_check_branch
      %24 = sbr.rel (0) target = $region9
    $region8: #{bert_s2s_forward.1} parent=1 // pred_region
      _
    $region9: #{bert_s2s_forward.1} parent=1 // pred_fallthru
      _
    // Predicated region
    $region10: #{bert_s2s_forward.1} parent=1 // pred_check
      _
    $region11: #{bert_s2s_forward.1} parent=1 // pred_check_branch
      %26 = sbr.rel (0) target = $region13
    $region12: #{bert_s2s_forward.1} parent=1 // pred_region
      _
    $region13: #{bert_s2s_forward.1} parent=1 // pred_fallthru
      _
    // Predicated region
    $region14: #{bert_s2s_forward.1} parent=1 // pred_check
      _
    $region15: #{bert_s2s_forward.1} parent=1 // pred_check_branch
      %28 = sbr.rel (0) target = $region17
    $region16: #{bert_s2s_forward.1} parent=1 // pred_region
      %30 = vsyncadd [#allocation3], 0
      %s31 = sshll.u32 %s3, 4
      %s32 = int_to_ptr.hbm [resolvable:$true] %s31
      %s33 = sshll.u32 [#allocation2], 4
      %s34 = int_to_ptr.vmem [resolvable:$true] %s33
      %39 = dma.hbm_to_vmem [thread:$0]  %s32, 3072, %s34, [#allocation3], 384, 384, 24
    $region17: #{bert_s2s_forward.1} parent=1 // pred_fallthru
      _
    // Predicated region
    $region18: #{bert_s2s_forward.1} parent=1 // pred_check
      _
    $region19: #{bert_s2s_forward.1} parent=1 // pred_check_branch
      %41 = sbr.rel (0) target = $region21
    $region20: #{bert_s2s_forward.1} parent=1 // pred_region
      _
    $region21: #{bert_s2s_forward.1} parent=1 // pred_fallthru
      _
    // Predicated region
    $region22: #{bert_s2s_forward.1} parent=1 // pred_check
      _
    $region23: #{bert_s2s_forward.1} parent=1 // pred_check_branch
      %43 = sbr.rel (0) target = $region25
    $region24: #{bert_s2s_forward.1} parent=1 // pred_region
      _
    $region25: #{bert_s2s_forward.1} parent=1 // pred_fallthru
      _
    // Predicated region
    $region26: #{bert_s2s_forward.1} parent=1 // pred_check
      _
    $region27: #{bert_s2s_forward.1} parent=1 // pred_check_branch
      %45 = sbr.rel (0) target = $region29
    $region28: #{bert_s2s_forward.1} parent=1 // pred_region
      _
    $region29: #{bert_s2s_forward.1} parent=1 // pred_fallthru
      _
    // Predicated region
    $region30: #{bert_s2s_forward.1} parent=1 // pred_check
      _
    $region31: #{bert_s2s_forward.1} parent=1 // pred_check_branch
      %47 = sbr.rel (0) target = $region33
    $region32: #{bert_s2s_forward.1} parent=1 // pred_region
      _
    $region33: #{bert_s2s_forward.1} parent=1 // pred_fallthru
      _
    // Predicated region
    $region34: #{bert_s2s_forward.1} parent=1 // pred_check
      _
    $region35: #{bert_s2s_forward.1} parent=1 // pred_check_branch
      %49 = sbr.rel (0) target = $region37
    $region36: #{bert_s2s_forward.1} parent=1 // pred_region
      _
    $region37: #{bert_s2s_forward.1} parent=1 // pred_fallthru
      _
    // Predicated region
    $region38: #{bert_s2s_forward.1} parent=1 // pred_check
      _
    $region39: #{bert_s2s_forward.1} parent=1 // pred_check_branch
      %51 = sbr.rel (0) target = $region41
    $region40: #{bert_s2s_forward.1} parent=1 // pred_region
      %53 = vsyncadd [#allocation5], 0
      %s54 = sshll.u32 %s9, 4
      %s55 = int_to_ptr.hbm [resolvable:$true] %s54
      %s56 = sshll.u32 [#allocation4], 4
      %s57 = int_to_ptr.vmem [resolvable:$true] %s56
      %62 = dma.hbm_to_vmem [thread:$0]  %s55, 1536, %s57, [#allocation5], 384, 384, 24
    $region41: #{bert_s2s_forward.1} parent=1 // pred_fallthru
      _
    // Predicated region
    $region42: #{bert_s2s_forward.1} parent=1 // pred_check
      _
    $region43: #{bert_s2s_forward.1} parent=1 // pred_check_branch
      %64 = sbr.rel (0) target = $region45
    $region44: #{bert_s2s_forward.1} parent=1 // pred_region
      _
    $region45: #{bert_s2s_forward.1} parent=1 // pred_fallthru
      _
    // Predicated region
    $region46: #{bert_s2s_forward.1} parent=1 // pred_check
      _
    $region47: #{bert_s2s_forward.1} parent=1 // pred_check_branch
      %66 = sbr.rel (0) target = $region49
    $region48: #{bert_s2s_forward.1} parent=1 // pred_region
      _
    $region49: #{bert_s2s_forward.1} parent=1 // pred_fallthru
      _
    // Predicated region
    $region50: #{bert_s2s_forward.1} parent=1 // pred_check
      _
    $region51: #{bert_s2s_forward.1} parent=1 // pred_check_branch
      %68 = sbr.rel (0) target = $region53
    $region52: #{bert_s2s_forward.1} parent=1 // pred_region
      _
    $region53: #{bert_s2s_forward.1} parent=1 // pred_fallthru
      _
    // Predicated region
    $region54: #{bert_s2s_forward.1} parent=1 // pred_check
      _
    $region55: #{bert_s2s_forward.1} parent=1 // pred_check_branch
      %70 = sbr.rel (0) target = $region57
    $region56: #{bert_s2s_forward.1} parent=1 // pred_region
      _
    $region57: #{bert_s2s_forward.1} parent=1 // pred_fallthru
      _
    // Predicated region
    $region58: #{bert_s2s_forward.1} parent=1 // pred_check
      _
    $region59: #{bert_s2s_forward.1} parent=1 // pred_check_branch
      %72 = sbr.rel (0) target = $region61
    $region60: #{bert_s2s_forward.1} parent=1 // pred_region
      %74 = dma.done [#allocation3], 3072
    $region61: #{bert_s2s_forward.1} parent=1 // pred_fallthru
      _
    // Predicated region
    $region62: #{bert_s2s_forward.1} parent=1 // pred_check
      _
    $region63: #{bert_s2s_forward.1} parent=1 // pred_check_branch
      %76 = sbr.rel (0) target = $region65
    $region64: #{bert_s2s_forward.1} parent=1 // pred_region
      %78 = dma.done [#allocation5], 1536
    $region65: #{bert_s2s_forward.1} parent=1 // pred_fallthru
      _
    %v79 = vld [vmem:[%s0] sm:$0xff]
    %v80 = vld [vmem:[%s0 + $0x8] sm:$0xff]
    %v81 = vld [vmem:[%s2] sm:$0xff]
    %v82 = vld [vmem:[%s2 + $0x8] sm:$0xff]
    %v83 = vld [vmem:[%s2 + $0x10] sm:$0xff]
    %v84 = vld [vmem:[%s2 + $0x18] sm:$0xff]
    %v85 = vld [vmem:[%s2 + $0x20] sm:$0xff]
    %v86 = vld [vmem:[%s2 + $0x28] sm:$0xff]
    %v87 = vld [vmem:[%s2 + $0x30] sm:$0xff]
    %v88 = vld [vmem:[%s2 + $0x38] sm:$0xff]
    %v89 = vld [vmem:[%s2 + $0x40] sm:$0xff]
    %v90 = vld [vmem:[%s2 + $0x48] sm:$0xff]
    %v91 = vld [vmem:[%s2 + $0x50] sm:$0xff]
    %v92 = vld [vmem:[%s2 + $0x58] sm:$0xff]
    %v93 = vld [vmem:[%s2 + $0x60] sm:$0xff]
    %v94 = vld [vmem:[%s2 + $0x68] sm:$0xff]
    %v95 = vld [vmem:[%s2 + $0x70] sm:$0xff]
    %v96 = vld [vmem:[%s2 + $0x78] sm:$0xff]
    %v97 = vld [vmem:[%s2 + $0x80] sm:$0xff]
    %v98 = vld [vmem:[%s2 + $0x88] sm:$0xff]
    %v99 = vld [vmem:[%s2 + $0x90] sm:$0xff]
    %v100 = vld [vmem:[%s2 + $0x98] sm:$0xff]
    %v101 = vld [vmem:[%s2 + $0xa0] sm:$0xff]
    %v102 = vld [vmem:[%s2 + $0xa8] sm:$0xff]
    %v103 = vld [vmem:[%s2 + $0xb0] sm:$0xff]
    %v104 = vld [vmem:[%s2 + $0xb8] sm:$0xff]
    %v105 = vld [vmem:[%s4] sm:$0x7]
    %v107 = vperm.slane %v105, 0
    %v108 = vperm.slane %v105, 1
    %v109 = vperm.slane %v105, 2
    %vm113 = vcmask 523264
    %v115 = vsel %vm113, %v79, 0
    %v118 = vsel %vm113, %v80, 0
    %120 = vmatpush.msra.mxu0 0.0
    %121 = vmatpush.msra.mxu0 0.0
    %122 = vmatpush.msra.mxu0 0.0
    %123 = vmatpush.msra.mxu0 0.0
    %124 = vmatpush.msra.mxu0 0.0
    %125 = vmatpush.msra.mxu0 0.0
    %126 = vmatpush.msra.mxu0 0.0
    %127 = vmatpush.msra.mxu0 0.0
    %128 = vmatpush.msra.mxu0 %v102
    %129 = vmatpush.msra.mxu0 %v99
    %130 = vmatpush.msra.mxu0 %v96
    %131 = vmatpush.msra.mxu0 %v93
    %132 = vmatpush.msra.mxu0 %v90
    %133 = vmatpush.msra.mxu0 %v87
    %134 = vmatpush.msra.mxu0 %v84
    %135 = vmatpush.msra.mxu0 %v81
    %136 = vmatmul.f32.gmra.mxu0 %v115
    %v137 = vpop.f32.mrf.mxu0
    %v138 = vadd.f32 %v107, %v137
    %139 = vmatmul.f32.gmra.mxu0 %v118
    %v140 = vpop.f32.mrf.mxu0
    %v141 = vadd.f32 %v107, %v140
    %142 = vdwg.mxu0
    %143 = vmatpush.msra.mxu0 0.0
    %144 = vmatpush.msra.mxu0 0.0
    %145 = vmatpush.msra.mxu0 0.0
    %146 = vmatpush.msra.mxu0 0.0
    %147 = vmatpush.msra.mxu0 0.0
    %148 = vmatpush.msra.mxu0 0.0
    %149 = vmatpush.msra.mxu0 0.0
    %150 = vmatpush.msra.mxu0 0.0
    %151 = vmatpush.msra.mxu0 %v103
    %152 = vmatpush.msra.mxu0 %v100
    %153 = vmatpush.msra.mxu0 %v97
    %154 = vmatpush.msra.mxu0 %v94
    %155 = vmatpush.msra.mxu0 %v91
    %156 = vmatpush.msra.mxu0 %v88
    %157 = vmatpush.msra.mxu0 %v85
    %158 = vmatpush.msra.mxu0 %v82
    %159 = vmatmul.f32.gmra.mxu0 %v115
    %v160 = vpop.f32.mrf.mxu0
    %v161 = vadd.f32 %v108, %v160
    %162 = vmatmul.f32.gmra.mxu0 %v118
    %v163 = vpop.f32.mrf.mxu0
    %v164 = vadd.f32 %v108, %v163
    %165 = vdwg.mxu0
    %166 = vmatpush.msra.mxu0 0.0
    %167 = vmatpush.msra.mxu0 0.0
    %168 = vmatpush.msra.mxu0 0.0
    %169 = vmatpush.msra.mxu0 0.0
    %170 = vmatpush.msra.mxu0 0.0
    %171 = vmatpush.msra.mxu0 0.0
    %172 = vmatpush.msra.mxu0 0.0
    %173 = vmatpush.msra.mxu0 0.0
    %174 = vmatpush.msra.mxu0 %v104
    %175 = vmatpush.msra.mxu0 %v101
    %176 = vmatpush.msra.mxu0 %v98
    %177 = vmatpush.msra.mxu0 %v95
    %178 = vmatpush.msra.mxu0 %v92
    %179 = vmatpush.msra.mxu0 %v89
    %180 = vmatpush.msra.mxu0 %v86
    %181 = vmatpush.msra.mxu0 %v83
    %182 = vmatmul.f32.gmra.mxu0 %v115
    %v183 = vpop.f32.mrf.mxu0
    %v184 = vadd.f32 %v109, %v183
    %185 = vmatmul.f32.gmra.mxu0 %v118
    %v186 = vpop.f32.mrf.mxu0
    %v187 = vadd.f32 %v109, %v186
    %188 = vdwg.mxu0
    %v189 = vld [vmem:[#allocation2] sm:$0xff]
    %v190 = vld [vmem:[#allocation2 + $0x8] sm:$0xff]
    %v191 = vld [vmem:[#allocation2 + $0x10] sm:$0xff]
    %v192 = vld [vmem:[#allocation2 + $0x18] sm:$0xff]
    %v193 = vld [vmem:[#allocation2 + $0x20] sm:$0xff]
    %v194 = vld [vmem:[#allocation2 + $0x28] sm:$0xff]
    %v195 = vld [vmem:[#allocation2 + $0x30] sm:$0xff]
    %v196 = vld [vmem:[#allocation2 + $0x38] sm:$0xff]
    %v197 = vld [vmem:[#allocation2 + $0x40] sm:$0xff]
    %v198 = vld [vmem:[#allocation2 + $0x48] sm:$0xff]
    %v199 = vld [vmem:[#allocation2 + $0x50] sm:$0xff]
    %v200 = vld [vmem:[#allocation2 + $0x58] sm:$0xff]
    %v201 = vld [vmem:[#allocation2 + $0x60] sm:$0xff]
    %v202 = vld [vmem:[#allocation2 + $0x68] sm:$0xff]
    %v203 = vld [vmem:[#allocation2 + $0x70] sm:$0xff]
    %v204 = vld [vmem:[#allocation2 + $0x78] sm:$0xff]
    %v205 = vld [vmem:[#allocation2 + $0x80] sm:$0xff]
    %v206 = vld [vmem:[#allocation2 + $0x88] sm:$0xff]
    %v207 = vld [vmem:[#allocation2 + $0x90] sm:$0xff]
    %v208 = vld [vmem:[#allocation2 + $0x98] sm:$0xff]
    %v209 = vld [vmem:[#allocation2 + $0xa0] sm:$0xff]
    %v210 = vld [vmem:[#allocation2 + $0xa8] sm:$0xff]
    %v211 = vld [vmem:[#allocation2 + $0xb0] sm:$0xff]
    %v212 = vld [vmem:[#allocation2 + $0xb8] sm:$0xff]
    %v213 = vld [vmem:[%s5] sm:$0x7]
    %v215 = vperm.slane %v213, 0
    %v216 = vperm.slane %v213, 1
    %v217 = vperm.slane %v213, 2
    %v222 = vsel %vm113, 0.0, 0
    %224 = vmatpush.msra.mxu0 0.0
    %225 = vmatpush.msra.mxu0 0.0
    %226 = vmatpush.msra.mxu0 0.0
    %227 = vmatpush.msra.mxu0 0.0
    %228 = vmatpush.msra.mxu0 0.0
    %229 = vmatpush.msra.mxu0 0.0
    %230 = vmatpush.msra.mxu0 0.0
    %231 = vmatpush.msra.mxu0 0.0
    %232 = vmatpush.msra.mxu0 %v210
    %233 = vmatpush.msra.mxu0 %v207
    %234 = vmatpush.msra.mxu0 %v204
    %235 = vmatpush.msra.mxu0 %v201
    %236 = vmatpush.msra.mxu0 %v198
    %237 = vmatpush.msra.mxu0 %v195
    %238 = vmatpush.msra.mxu0 %v192
    %239 = vmatpush.msra.mxu0 %v189
    %240 = vmatmul.f32.gmra.mxu0 %v222
    %v241 = vpop.f32.mrf.mxu0
    %v242 = vadd.f32 %v215, %v241
    %243 = vdwg.mxu0
    %244 = vmatpush.msra.mxu0 0.0
    %245 = vmatpush.msra.mxu0 0.0
    %246 = vmatpush.msra.mxu0 0.0
    %247 = vmatpush.msra.mxu0 0.0
    %248 = vmatpush.msra.mxu0 0.0
    %249 = vmatpush.msra.mxu0 0.0
    %250 = vmatpush.msra.mxu0 0.0
    %251 = vmatpush.msra.mxu0 0.0
    %252 = vmatpush.msra.mxu0 %v211
    %253 = vmatpush.msra.mxu0 %v208
    %254 = vmatpush.msra.mxu0 %v205
    %255 = vmatpush.msra.mxu0 %v202
    %256 = vmatpush.msra.mxu0 %v199
    %257 = vmatpush.msra.mxu0 %v196
    %258 = vmatpush.msra.mxu0 %v193
    %259 = vmatpush.msra.mxu0 %v190
    %260 = vmatmul.f32.gmra.mxu0 %v222
    %v261 = vpop.f32.mrf.mxu0
    %v262 = vadd.f32 %v216, %v261
    %263 = vdwg.mxu0
    %264 = vmatpush.msra.mxu0 0.0
    %265 = vmatpush.msra.mxu0 0.0
    %266 = vmatpush.msra.mxu0 0.0
    %267 = vmatpush.msra.mxu0 0.0
    %268 = vmatpush.msra.mxu0 0.0
    %269 = vmatpush.msra.mxu0 0.0
    %270 = vmatpush.msra.mxu0 0.0
    %271 = vmatpush.msra.mxu0 0.0
    %272 = vmatpush.msra.mxu0 %v212
    %273 = vmatpush.msra.mxu0 %v209
    %274 = vmatpush.msra.mxu0 %v206
    %275 = vmatpush.msra.mxu0 %v203
    %276 = vmatpush.msra.mxu0 %v200
    %277 = vmatpush.msra.mxu0 %v197
    %278 = vmatpush.msra.mxu0 %v194
    %279 = vmatpush.msra.mxu0 %v191
    %280 = vmatmul.f32.gmra.mxu0 %v222
    %v281 = vpop.f32.mrf.mxu0
    %v282 = vadd.f32 %v217, %v281
    %283 = vdwg.mxu0
    %v284 = vadd.f32 %v138, %v242
    %v285 = vxor.u32 %v284, 2147483648
    %v286 = vmul.f32 %v285, 1.442695
    %v287 = vpow.pop %v286
    %v288 = vadd.f32 %v287, 1.0
    %v289 = vrcp.pop %v288
    %v290 = vmul.f32 %v288, %v289
    %v291 = vsub.f32 1.0, %v290
    %v292 = vmul.f32 %v289, %v291
    %v293 = vadd.f32 %v289, %v292
    %vm294 = vweird.f32 %v288
    %vm295 = vweird.f32 %v289
    %vm296 = vmor %vm294, %vm295
    %v297 = vsel %vm296, %v289, %v293
    %v298 = vand.u32 2147483647, %v288
    %vm299 = vcmp.eq.f32.partialorder %v298, 8.507059e+37
    %v300 = vand.u32 %v288, 2147483648
    %v301 = vor.u32 1.1754944e-38, %v300
    %v302 = vsel %vm299, %v301, %v297
    %v303 = vmul.f32 1.0, %v302
    %v304 = vadd.f32 %v161, %v262
    %v305 = vxor.u32 %v304, 2147483648
    %v306 = vmul.f32 %v305, 1.442695
    %v307 = vpow.pop %v306
    %v308 = vadd.f32 %v307, 1.0
    %v309 = vrcp.pop %v308
    %v310 = vmul.f32 %v308, %v309
    %v311 = vsub.f32 1.0, %v310
    %v312 = vmul.f32 %v309, %v311
    %v313 = vadd.f32 %v309, %v312
    %vm314 = vweird.f32 %v308
    %vm315 = vweird.f32 %v309
    %vm316 = vmor %vm314, %vm315
    %v317 = vsel %vm316, %v309, %v313
    %v318 = vand.u32 2147483647, %v308
    %vm319 = vcmp.eq.f32.partialorder %v318, 8.507059e+37
    %v320 = vand.u32 %v308, 2147483648
    %v321 = vor.u32 1.1754944e-38, %v320
    %v322 = vsel %vm319, %v321, %v317
    %v323 = vmul.f32 1.0, %v322
    %v324 = vmul.f32 %v303, %v282
    %v325 = vadd.f32 %v184, %v324
    %v326 = vtanh.pop %v325
    %v327 = vsub.f32 1.0, %v323
    %v328 = vmul.f32 %v327, %v326
    %v329 = vmul.f32 %v323, 0.0
    %v330 = vadd.f32 %v328, %v329
    %v332 = vsel %vm113, %v330, 0
    %334 = vmatpush.msra.mxu0 0.0
    %335 = vmatpush.msra.mxu0 0.0
    %336 = vmatpush.msra.mxu0 0.0
    %337 = vmatpush.msra.mxu0 0.0
    %338 = vmatpush.msra.mxu0 0.0
    %339 = vmatpush.msra.mxu0 0.0
    %340 = vmatpush.msra.mxu0 0.0
    %341 = vmatpush.msra.mxu0 0.0
    %342 = vmatpush.msra.mxu0 %v210
    %343 = vmatpush.msra.mxu0 %v207
    %344 = vmatpush.msra.mxu0 %v204
    %345 = vmatpush.msra.mxu0 %v201
    %346 = vmatpush.msra.mxu0 %v198
    %347 = vmatpush.msra.mxu0 %v195
    %348 = vmatpush.msra.mxu0 %v192
    %349 = vmatpush.msra.mxu0 %v189
    %350 = vmatmul.f32.gmra.mxu0 %v332
    %v351 = vpop.f32.mrf.mxu0
    %v352 = vadd.f32 %v215, %v351
    %353 = vdwg.mxu0
    %354 = vmatpush.msra.mxu0 0.0
    %355 = vmatpush.msra.mxu0 0.0
    %356 = vmatpush.msra.mxu0 0.0
    %357 = vmatpush.msra.mxu0 0.0
    %358 = vmatpush.msra.mxu0 0.0
    %359 = vmatpush.msra.mxu0 0.0
    %360 = vmatpush.msra.mxu0 0.0
    %361 = vmatpush.msra.mxu0 0.0
    %362 = vmatpush.msra.mxu0 %v211
    %363 = vmatpush.msra.mxu0 %v208
    %364 = vmatpush.msra.mxu0 %v205
    %365 = vmatpush.msra.mxu0 %v202
    %366 = vmatpush.msra.mxu0 %v199
    %367 = vmatpush.msra.mxu0 %v196
    %368 = vmatpush.msra.mxu0 %v193
    %369 = vmatpush.msra.mxu0 %v190
    %370 = vmatmul.f32.gmra.mxu0 %v332
    %v371 = vpop.f32.mrf.mxu0
    %v372 = vadd.f32 %v216, %v371
    %373 = vdwg.mxu0
    %374 = vmatpush.msra.mxu0 0.0
    %375 = vmatpush.msra.mxu0 0.0
    %376 = vmatpush.msra.mxu0 0.0
    %377 = vmatpush.msra.mxu0 0.0
    %378 = vmatpush.msra.mxu0 0.0
    %379 = vmatpush.msra.mxu0 0.0
    %380 = vmatpush.msra.mxu0 0.0
    %381 = vmatpush.msra.mxu0 0.0
    %382 = vmatpush.msra.mxu0 %v212
    %383 = vmatpush.msra.mxu0 %v209
    %384 = vmatpush.msra.mxu0 %v206
    %385 = vmatpush.msra.mxu0 %v203
    %386 = vmatpush.msra.mxu0 %v200
    %387 = vmatpush.msra.mxu0 %v197
    %388 = vmatpush.msra.mxu0 %v194
    %389 = vmatpush.msra.mxu0 %v191
    %390 = vmatmul.f32.gmra.mxu0 %v332
    %v391 = vpop.f32.mrf.mxu0
    %v392 = vadd.f32 %v217, %v391
    %393 = vdwg.mxu0
    %v395 = vrot.slane %v352, 6
    %v397 = vadd.f32 %v138, %v395
    %v398 = vxor.u32 %v397, 2147483648
    %v399 = vmul.f32 %v398, 1.442695
    %v400 = vpow.pop %v399
    %v401 = vadd.f32 %v400, 1.0
    %v402 = vrcp.pop %v401
    %v403 = vmul.f32 %v401, %v402
    %v404 = vsub.f32 1.0, %v403
    %v405 = vmul.f32 %v402, %v404
    %v406 = vadd.f32 %v402, %v405
    %vm407 = vweird.f32 %v401
    %vm408 = vweird.f32 %v402
    %vm409 = vmor %vm407, %vm408
    %v410 = vsel %vm409, %v402, %v406
    %v411 = vand.u32 2147483647, %v401
    %vm412 = vcmp.eq.f32.partialorder %v411, 8.507059e+37
    %v413 = vand.u32 %v401, 2147483648
    %v414 = vor.u32 1.1754944e-38, %v413
    %v415 = vsel %vm412, %v414, %v410
    %v416 = vmul.f32 1.0, %v415
    %v418 = vrot.slane %v372, 6
    %v420 = vadd.f32 %v161, %v418
    %v421 = vxor.u32 %v420, 2147483648
    %v422 = vmul.f32 %v421, 1.442695
    %v423 = vpow.pop %v422
    %v424 = vadd.f32 %v423, 1.0
    %v425 = vrcp.pop %v424
    %v426 = vmul.f32 %v424, %v425
    %v427 = vsub.f32 1.0, %v426
    %v428 = vmul.f32 %v425, %v427
    %v429 = vadd.f32 %v425, %v428
    %vm430 = vweird.f32 %v424
    %vm431 = vweird.f32 %v425
    %vm432 = vmor %vm430, %vm431
    %v433 = vsel %vm432, %v425, %v429
    %v434 = vand.u32 2147483647, %v424
    %vm435 = vcmp.eq.f32.partialorder %v434, 8.507059e+37
    %v436 = vand.u32 %v424, 2147483648
    %v437 = vor.u32 1.1754944e-38, %v436
    %v438 = vsel %vm435, %v437, %v433
    %v439 = vmul.f32 1.0, %v438
    %v441 = vrot.slane %v392, 6
    %v443 = vmul.f32 %v416, %v441
    %v444 = vadd.f32 %v184, %v443
    %v445 = vtanh.pop %v444
    %v446 = vsub.f32 1.0, %v439
    %v447 = vmul.f32 %v446, %v445
    %v448 = vrot.slane %v330, 6
    %v450 = vmul.f32 %v439, %v448
    %v451 = vadd.f32 %v447, %v450
    %v453 = vrot.slane %v451, 2
    %v454 = vsel %vm113, %v453, 0
    %456 = vmatpush.msra.mxu0 0.0
    %457 = vmatpush.msra.mxu0 0.0
    %458 = vmatpush.msra.mxu0 0.0
    %459 = vmatpush.msra.mxu0 0.0
    %460 = vmatpush.msra.mxu0 0.0
    %461 = vmatpush.msra.mxu0 0.0
    %462 = vmatpush.msra.mxu0 0.0
    %463 = vmatpush.msra.mxu0 0.0
    %464 = vmatpush.msra.mxu0 %v210
    %465 = vmatpush.msra.mxu0 %v207
    %466 = vmatpush.msra.mxu0 %v204
    %467 = vmatpush.msra.mxu0 %v201
    %468 = vmatpush.msra.mxu0 %v198
    %469 = vmatpush.msra.mxu0 %v195
    %470 = vmatpush.msra.mxu0 %v192
    %471 = vmatpush.msra.mxu0 %v189
    %472 = vmatmul.f32.gmra.mxu0 %v454
    %v473 = vpop.f32.mrf.mxu0
    %v474 = vadd.f32 %v215, %v473
    %475 = vdwg.mxu0
    %476 = vmatpush.msra.mxu0 0.0
    %477 = vmatpush.msra.mxu0 0.0
    %478 = vmatpush.msra.mxu0 0.0
    %479 = vmatpush.msra.mxu0 0.0
    %480 = vmatpush.msra.mxu0 0.0
    %481 = vmatpush.msra.mxu0 0.0
    %482 = vmatpush.msra.mxu0 0.0
    %483 = vmatpush.msra.mxu0 0.0
    %484 = vmatpush.msra.mxu0 %v211
    %485 = vmatpush.msra.mxu0 %v208
    %486 = vmatpush.msra.mxu0 %v205
    %487 = vmatpush.msra.mxu0 %v202
    %488 = vmatpush.msra.mxu0 %v199
    %489 = vmatpush.msra.mxu0 %v196
    %490 = vmatpush.msra.mxu0 %v193
    %491 = vmatpush.msra.mxu0 %v190
    %492 = vmatmul.f32.gmra.mxu0 %v454
    %v493 = vpop.f32.mrf.mxu0
    %v494 = vadd.f32 %v216, %v493
    %495 = vdwg.mxu0
    %496 = vmatpush.msra.mxu0 0.0
    %497 = vmatpush.msra.mxu0 0.0
    %498 = vmatpush.msra.mxu0 0.0
    %499 = vmatpush.msra.mxu0 0.0
    %500 = vmatpush.msra.mxu0 0.0
    %501 = vmatpush.msra.mxu0 0.0
    %502 = vmatpush.msra.mxu0 0.0
    %503 = vmatpush.msra.mxu0 0.0
    %504 = vmatpush.msra.mxu0 %v212
    %505 = vmatpush.msra.mxu0 %v209
    %506 = vmatpush.msra.mxu0 %v206
    %507 = vmatpush.msra.mxu0 %v203
    %508 = vmatpush.msra.mxu0 %v200
    %509 = vmatpush.msra.mxu0 %v197
    %510 = vmatpush.msra.mxu0 %v194
    %511 = vmatpush.msra.mxu0 %v191
    %512 = vmatmul.f32.gmra.mxu0 %v454
    %v513 = vpop.f32.mrf.mxu0
    %v514 = vadd.f32 %v217, %v513
    %515 = vdwg.mxu0
    %v517 = vrot.slane %v474, 4
    %v519 = vadd.f32 %v138, %v517
    %v520 = vxor.u32 %v519, 2147483648
    %v521 = vmul.f32 %v520, 1.442695
    %v522 = vpow.pop %v521
    %v523 = vadd.f32 %v522, 1.0
    %v524 = vrcp.pop %v523
    %v525 = vmul.f32 %v523, %v524
    %v526 = vsub.f32 1.0, %v525
    %v527 = vmul.f32 %v524, %v526
    %v528 = vadd.f32 %v524, %v527
    %vm529 = vweird.f32 %v523
    %vm530 = vweird.f32 %v524
    %vm531 = vmor %vm529, %vm530
    %v532 = vsel %vm531, %v524, %v528
    %v533 = vand.u32 2147483647, %v523
    %vm534 = vcmp.eq.f32.partialorder %v533, 8.507059e+37
    %v535 = vand.u32 %v523, 2147483648
    %v536 = vor.u32 1.1754944e-38, %v535
    %v537 = vsel %vm534, %v536, %v532
    %v538 = vmul.f32 1.0, %v537
    %v540 = vrot.slane %v494, 4
    %v542 = vadd.f32 %v161, %v540
    %v543 = vxor.u32 %v542, 2147483648
    %v544 = vmul.f32 %v543, 1.442695
    %v545 = vpow.pop %v544
    %v546 = vadd.f32 %v545, 1.0
    %v547 = vrcp.pop %v546
    %v548 = vmul.f32 %v546, %v547
    %v549 = vsub.f32 1.0, %v548
    %v550 = vmul.f32 %v547, %v549
    %v551 = vadd.f32 %v547, %v550
    %vm552 = vweird.f32 %v546
    %vm553 = vweird.f32 %v547
    %vm554 = vmor %vm552, %vm553
    %v555 = vsel %vm554, %v547, %v551
    %v556 = vand.u32 2147483647, %v546
    %vm557 = vcmp.eq.f32.partialorder %v556, 8.507059e+37
    %v558 = vand.u32 %v546, 2147483648
    %v559 = vor.u32 1.1754944e-38, %v558
    %v560 = vsel %vm557, %v559, %v555
    %v561 = vmul.f32 1.0, %v560
    %v563 = vrot.slane %v514, 4
    %v565 = vmul.f32 %v538, %v563
    %v566 = vadd.f32 %v184, %v565
    %v567 = vtanh.pop %v566
    %v568 = vsub.f32 1.0, %v561
    %v569 = vmul.f32 %v568, %v567
    %v570 = vrot.slane %v451, 6
    %v572 = vmul.f32 %v561, %v570
    %v573 = vadd.f32 %v569, %v572
    %v575 = vrot.slane %v573, 4
    %v576 = vsel %vm113, %v575, 0
    %578 = vmatpush.msra.mxu0 0.0
    %579 = vmatpush.msra.mxu0 0.0
    %580 = vmatpush.msra.mxu0 0.0
    %581 = vmatpush.msra.mxu0 0.0
    %582 = vmatpush.msra.mxu0 0.0
    %583 = vmatpush.msra.mxu0 0.0
    %584 = vmatpush.msra.mxu0 0.0
    %585 = vmatpush.msra.mxu0 0.0
    %586 = vmatpush.msra.mxu0 %v210
    %587 = vmatpush.msra.mxu0 %v207
    %588 = vmatpush.msra.mxu0 %v204
    %589 = vmatpush.msra.mxu0 %v201
    %590 = vmatpush.msra.mxu0 %v198
    %591 = vmatpush.msra.mxu0 %v195
    %592 = vmatpush.msra.mxu0 %v192
    %593 = vmatpush.msra.mxu0 %v189
    %594 = vmatmul.f32.gmra.mxu0 %v576
    %v595 = vpop.f32.mrf.mxu0
    %v596 = vadd.f32 %v215, %v595
    %597 = vdwg.mxu0
    %598 = vmatpush.msra.mxu0 0.0
    %599 = vmatpush.msra.mxu0 0.0
    %600 = vmatpush.msra.mxu0 0.0
    %601 = vmatpush.msra.mxu0 0.0
    %602 = vmatpush.msra.mxu0 0.0
    %603 = vmatpush.msra.mxu0 0.0
    %604 = vmatpush.msra.mxu0 0.0
    %605 = vmatpush.msra.mxu0 0.0
    %606 = vmatpush.msra.mxu0 %v211
    %607 = vmatpush.msra.mxu0 %v208
    %608 = vmatpush.msra.mxu0 %v205
    %609 = vmatpush.msra.mxu0 %v202
    %610 = vmatpush.msra.mxu0 %v199
    %611 = vmatpush.msra.mxu0 %v196
    %612 = vmatpush.msra.mxu0 %v193
    %613 = vmatpush.msra.mxu0 %v190
    %614 = vmatmul.f32.gmra.mxu0 %v576
    %v615 = vpop.f32.mrf.mxu0
    %v616 = vadd.f32 %v216, %v615
    %617 = vdwg.mxu0
    %618 = vmatpush.msra.mxu0 0.0
    %619 = vmatpush.msra.mxu0 0.0
    %620 = vmatpush.msra.mxu0 0.0
    %621 = vmatpush.msra.mxu0 0.0
    %622 = vmatpush.msra.mxu0 0.0
    %623 = vmatpush.msra.mxu0 0.0
    %624 = vmatpush.msra.mxu0 0.0
    %625 = vmatpush.msra.mxu0 0.0
    %626 = vmatpush.msra.mxu0 %v212
    %627 = vmatpush.msra.mxu0 %v209
    %628 = vmatpush.msra.mxu0 %v206
    %629 = vmatpush.msra.mxu0 %v203
    %630 = vmatpush.msra.mxu0 %v200
    %631 = vmatpush.msra.mxu0 %v197
    %632 = vmatpush.msra.mxu0 %v194
    %633 = vmatpush.msra.mxu0 %v191
    %634 = vmatmul.f32.gmra.mxu0 %v576
    %v635 = vpop.f32.mrf.mxu0
    %v636 = vadd.f32 %v217, %v635
    %637 = vdwg.mxu0
    %v639 = vrot.slane %v596, 2
    %v641 = vadd.f32 %v138, %v639
    %v642 = vxor.u32 %v641, 2147483648
    %v643 = vmul.f32 %v642, 1.442695
    %v644 = vpow.pop %v643
    %v645 = vadd.f32 %v644, 1.0
    %v646 = vrcp.pop %v645
    %v647 = vmul.f32 %v645, %v646
    %v648 = vsub.f32 1.0, %v647
    %v649 = vmul.f32 %v646, %v648
    %v650 = vadd.f32 %v646, %v649
    %vm651 = vweird.f32 %v645
    %vm652 = vweird.f32 %v646
    %vm653 = vmor %vm651, %vm652
    %v654 = vsel %vm653, %v646, %v650
    %v655 = vand.u32 2147483647, %v645
    %vm656 = vcmp.eq.f32.partialorder %v655, 8.507059e+37
    %v657 = vand.u32 %v645, 2147483648
    %v658 = vor.u32 1.1754944e-38, %v657
    %v659 = vsel %vm656, %v658, %v654
    %v660 = vmul.f32 1.0, %v659
    %v662 = vrot.slane %v616, 2
    %v664 = vadd.f32 %v161, %v662
    %v665 = vxor.u32 %v664, 2147483648
    %v666 = vmul.f32 %v665, 1.442695
    %v667 = vpow.pop %v666
    %v668 = vadd.f32 %v667, 1.0
    %v669 = vrcp.pop %v668
    %v670 = vmul.f32 %v668, %v669
    %v671 = vsub.f32 1.0, %v670
    %v672 = vmul.f32 %v669, %v671
    %v673 = vadd.f32 %v669, %v672
    %vm674 = vweird.f32 %v668
    %vm675 = vweird.f32 %v669
    %vm676 = vmor %vm674, %vm675
    %v677 = vsel %vm676, %v669, %v673
    %v678 = vand.u32 2147483647, %v668
    %vm679 = vcmp.eq.f32.partialorder %v678, 8.507059e+37
    %v680 = vand.u32 %v668, 2147483648
    %v681 = vor.u32 1.1754944e-38, %v680
    %v682 = vsel %vm679, %v681, %v677
    %v683 = vmul.f32 1.0, %v682
    %v685 = vrot.slane %v636, 2
    %v687 = vmul.f32 %v660, %v685
    %v688 = vadd.f32 %v184, %v687
    %v689 = vtanh.pop %v688
    %v690 = vsub.f32 1.0, %v683
    %v691 = vmul.f32 %v690, %v689
    %v692 = vrot.slane %v573, 6
    %v694 = vmul.f32 %v683, %v692
    %v695 = vadd.f32 %v691, %v694
    %v697 = vrot.slane %v695, 6
    %v698 = vsel %vm113, %v697, 0
    %700 = vmatpush.msra.mxu0 0.0
    %701 = vmatpush.msra.mxu0 0.0
    %702 = vmatpush.msra.mxu0 0.0
    %703 = vmatpush.msra.mxu0 0.0
    %704 = vmatpush.msra.mxu0 0.0
    %705 = vmatpush.msra.mxu0 0.0
    %706 = vmatpush.msra.mxu0 0.0
    %707 = vmatpush.msra.mxu0 0.0
    %708 = vmatpush.msra.mxu0 %v210
    %709 = vmatpush.msra.mxu0 %v207
    %710 = vmatpush.msra.mxu0 %v204
    %711 = vmatpush.msra.mxu0 %v201
    %712 = vmatpush.msra.mxu0 %v198
    %713 = vmatpush.msra.mxu0 %v195
    %714 = vmatpush.msra.mxu0 %v192
    %715 = vmatpush.msra.mxu0 %v189
    %716 = vmatmul.f32.gmra.mxu0 %v698
    %v717 = vpop.f32.mrf.mxu0
    %v718 = vadd.f32 %v215, %v717
    %719 = vdwg.mxu0
    %720 = vmatpush.msra.mxu0 0.0
    %721 = vmatpush.msra.mxu0 0.0
    %722 = vmatpush.msra.mxu0 0.0
    %723 = vmatpush.msra.mxu0 0.0
    %724 = vmatpush.msra.mxu0 0.0
    %725 = vmatpush.msra.mxu0 0.0
    %726 = vmatpush.msra.mxu0 0.0
    %727 = vmatpush.msra.mxu0 0.0
    %728 = vmatpush.msra.mxu0 %v211
    %729 = vmatpush.msra.mxu0 %v208
    %730 = vmatpush.msra.mxu0 %v205
    %731 = vmatpush.msra.mxu0 %v202
    %732 = vmatpush.msra.mxu0 %v199
    %733 = vmatpush.msra.mxu0 %v196
    %734 = vmatpush.msra.mxu0 %v193
    %735 = vmatpush.msra.mxu0 %v190
    %736 = vmatmul.f32.gmra.mxu0 %v698
    %v737 = vpop.f32.mrf.mxu0
    %v738 = vadd.f32 %v216, %v737
    %739 = vdwg.mxu0
    %740 = vmatpush.msra.mxu0 0.0
    %741 = vmatpush.msra.mxu0 0.0
    %742 = vmatpush.msra.mxu0 0.0
    %743 = vmatpush.msra.mxu0 0.0
    %744 = vmatpush.msra.mxu0 0.0
    %745 = vmatpush.msra.mxu0 0.0
    %746 = vmatpush.msra.mxu0 0.0
    %747 = vmatpush.msra.mxu0 0.0
    %748 = vmatpush.msra.mxu0 %v212
    %749 = vmatpush.msra.mxu0 %v209
    %750 = vmatpush.msra.mxu0 %v206
    %751 = vmatpush.msra.mxu0 %v203
    %752 = vmatpush.msra.mxu0 %v200
    %753 = vmatpush.msra.mxu0 %v197
    %754 = vmatpush.msra.mxu0 %v194
    %755 = vmatpush.msra.mxu0 %v191
    %756 = vmatmul.f32.gmra.mxu0 %v698
    %v757 = vpop.f32.mrf.mxu0
    %v758 = vadd.f32 %v217, %v757
    %759 = vdwg.mxu0
    %v760 = vadd.f32 %v141, %v718
    %v761 = vxor.u32 %v760, 2147483648
    %v762 = vmul.f32 %v761, 1.442695
    %v763 = vpow.pop %v762
    %v764 = vadd.f32 %v763, 1.0
    %v765 = vrcp.pop %v764
    %v766 = vmul.f32 %v764, %v765
    %v767 = vsub.f32 1.0, %v766
    %v768 = vmul.f32 %v765, %v767
    %v769 = vadd.f32 %v765, %v768
    %vm770 = vweird.f32 %v764
    %vm771 = vweird.f32 %v765
    %vm772 = vmor %vm770, %vm771
    %v773 = vsel %vm772, %v765, %v769
    %v774 = vand.u32 2147483647, %v764
    %vm775 = vcmp.eq.f32.partialorder %v774, 8.507059e+37
    %v776 = vand.u32 %v764, 2147483648
    %v777 = vor.u32 1.1754944e-38, %v776
    %v778 = vsel %vm775, %v777, %v773
    %v779 = vmul.f32 1.0, %v778
    %v780 = vadd.f32 %v164, %v738
    %v781 = vxor.u32 %v780, 2147483648
    %v782 = vmul.f32 %v781, 1.442695
    %v783 = vpow.pop %v782
    %v784 = vadd.f32 %v783, 1.0
    %v785 = vrcp.pop %v784
    %v786 = vmul.f32 %v784, %v785
    %v787 = vsub.f32 1.0, %v786
    %v788 = vmul.f32 %v785, %v787
    %v789 = vadd.f32 %v785, %v788
    %vm790 = vweird.f32 %v784
    %vm791 = vweird.f32 %v785
    %vm792 = vmor %vm790, %vm791
    %v793 = vsel %vm792, %v785, %v789
    %v794 = vand.u32 2147483647, %v784
    %vm795 = vcmp.eq.f32.partialorder %v794, 8.507059e+37
    %v796 = vand.u32 %v784, 2147483648
    %v797 = vor.u32 1.1754944e-38, %v796
    %v798 = vsel %vm795, %v797, %v793
    %v799 = vmul.f32 1.0, %v798
    %v800 = vmul.f32 %v779, %v758
    %v801 = vadd.f32 %v187, %v800
    %v802 = vtanh.pop %v801
    %v803 = vsub.f32 1.0, %v799
    %v804 = vmul.f32 %v803, %v802
    %v806 = vmul.f32 %v799, %v697
    %v807 = vadd.f32 %v804, %v806
    %v809 = vsel %vm113, %v807, 0
    %811 = vmatpush.msra.mxu0 0.0
    %812 = vmatpush.msra.mxu0 0.0
    %813 = vmatpush.msra.mxu0 0.0
    %814 = vmatpush.msra.mxu0 0.0
    %815 = vmatpush.msra.mxu0 0.0
    %816 = vmatpush.msra.mxu0 0.0
    %817 = vmatpush.msra.mxu0 0.0
    %818 = vmatpush.msra.mxu0 0.0
    %819 = vmatpush.msra.mxu0 %v210
    %820 = vmatpush.msra.mxu0 %v207
    %821 = vmatpush.msra.mxu0 %v204
    %822 = vmatpush.msra.mxu0 %v201
    %823 = vmatpush.msra.mxu0 %v198
    %824 = vmatpush.msra.mxu0 %v195
    %825 = vmatpush.msra.mxu0 %v192
    %826 = vmatpush.msra.mxu0 %v189
    %827 = vmatmul.f32.gmra.mxu0 %v809
    %v828 = vpop.f32.mrf.mxu0
    %v829 = vadd.f32 %v215, %v828
    %830 = vdwg.mxu0
    %831 = vmatpush.msra.mxu0 0.0
    %832 = vmatpush.msra.mxu0 0.0
    %833 = vmatpush.msra.mxu0 0.0
    %834 = vmatpush.msra.mxu0 0.0
    %835 = vmatpush.msra.mxu0 0.0
    %836 = vmatpush.msra.mxu0 0.0
    %837 = vmatpush.msra.mxu0 0.0
    %838 = vmatpush.msra.mxu0 0.0
    %839 = vmatpush.msra.mxu0 %v211
    %840 = vmatpush.msra.mxu0 %v208
    %841 = vmatpush.msra.mxu0 %v205
    %842 = vmatpush.msra.mxu0 %v202
    %843 = vmatpush.msra.mxu0 %v199
    %844 = vmatpush.msra.mxu0 %v196
    %845 = vmatpush.msra.mxu0 %v193
    %846 = vmatpush.msra.mxu0 %v190
    %847 = vmatmul.f32.gmra.mxu0 %v809
    %v848 = vpop.f32.mrf.mxu0
    %v849 = vadd.f32 %v216, %v848
    %850 = vdwg.mxu0
    %851 = vmatpush.msra.mxu0 0.0
    %852 = vmatpush.msra.mxu0 0.0
    %853 = vmatpush.msra.mxu0 0.0
    %854 = vmatpush.msra.mxu0 0.0
    %855 = vmatpush.msra.mxu0 0.0
    %856 = vmatpush.msra.mxu0 0.0
    %857 = vmatpush.msra.mxu0 0.0
    %858 = vmatpush.msra.mxu0 0.0
    %859 = vmatpush.msra.mxu0 %v212
    %860 = vmatpush.msra.mxu0 %v209
    %861 = vmatpush.msra.mxu0 %v206
    %862 = vmatpush.msra.mxu0 %v203
    %863 = vmatpush.msra.mxu0 %v200
    %864 = vmatpush.msra.mxu0 %v197
    %865 = vmatpush.msra.mxu0 %v194
    %866 = vmatpush.msra.mxu0 %v191
    %867 = vmatmul.f32.gmra.mxu0 %v809
    %v868 = vpop.f32.mrf.mxu0
    %v869 = vadd.f32 %v217, %v868
    %870 = vdwg.mxu0
    %v872 = vrot.slane %v829, 6
    %v874 = vadd.f32 %v141, %v872
    %v875 = vxor.u32 %v874, 2147483648
    %v876 = vmul.f32 %v875, 1.442695
    %v877 = vpow.pop %v876
    %v878 = vadd.f32 %v877, 1.0
    %v879 = vrcp.pop %v878
    %v880 = vmul.f32 %v878, %v879
    %v881 = vsub.f32 1.0, %v880
    %v882 = vmul.f32 %v879, %v881
    %v883 = vadd.f32 %v879, %v882
    %vm884 = vweird.f32 %v878
    %vm885 = vweird.f32 %v879
    %vm886 = vmor %vm884, %vm885
    %v887 = vsel %vm886, %v879, %v883
    %v888 = vand.u32 2147483647, %v878
    %vm889 = vcmp.eq.f32.partialorder %v888, 8.507059e+37
    %v890 = vand.u32 %v878, 2147483648
    %v891 = vor.u32 1.1754944e-38, %v890
    %v892 = vsel %vm889, %v891, %v887
    %v893 = vmul.f32 1.0, %v892
    %v895 = vrot.slane %v849, 6
    %v897 = vadd.f32 %v164, %v895
    %v898 = vxor.u32 %v897, 2147483648
    %v899 = vmul.f32 %v898, 1.442695
    %v900 = vpow.pop %v899
    %v901 = vadd.f32 %v900, 1.0
    %v902 = vrcp.pop %v901
    %v903 = vmul.f32 %v901, %v902
    %v904 = vsub.f32 1.0, %v903
    %v905 = vmul.f32 %v902, %v904
    %v906 = vadd.f32 %v902, %v905
    %vm907 = vweird.f32 %v901
    %vm908 = vweird.f32 %v902
    %vm909 = vmor %vm907, %vm908
    %v910 = vsel %vm909, %v902, %v906
    %v911 = vand.u32 2147483647, %v901
    %vm912 = vcmp.eq.f32.partialorder %v911, 8.507059e+37
    %v913 = vand.u32 %v901, 2147483648
    %v914 = vor.u32 1.1754944e-38, %v913
    %v915 = vsel %vm912, %v914, %v910
    %v916 = vmul.f32 1.0, %v915
    %v918 = vrot.slane %v869, 6
    %v920 = vmul.f32 %v893, %v918
    %v921 = vadd.f32 %v187, %v920
    %v922 = vtanh.pop %v921
    %v923 = vsub.f32 1.0, %v916
    %v924 = vmul.f32 %v923, %v922
    %v925 = vrot.slane %v807, 6
    %v927 = vmul.f32 %v916, %v925
    %v928 = vadd.f32 %v924, %v927
    %v930 = vrot.slane %v928, 2
    %v931 = vsel %vm113, %v930, 0
    %933 = vmatpush.msra.mxu0 0.0
    %934 = vmatpush.msra.mxu0 0.0
    %935 = vmatpush.msra.mxu0 0.0
    %936 = vmatpush.msra.mxu0 0.0
    %937 = vmatpush.msra.mxu0 0.0
    %938 = vmatpush.msra.mxu0 0.0
    %939 = vmatpush.msra.mxu0 0.0
    %940 = vmatpush.msra.mxu0 0.0
    %941 = vmatpush.msra.mxu0 %v210
    %942 = vmatpush.msra.mxu0 %v207
    %943 = vmatpush.msra.mxu0 %v204
    %944 = vmatpush.msra.mxu0 %v201
    %945 = vmatpush.msra.mxu0 %v198
    %946 = vmatpush.msra.mxu0 %v195
    %947 = vmatpush.msra.mxu0 %v192
    %948 = vmatpush.msra.mxu0 %v189
    %949 = vmatmul.f32.gmra.mxu0 %v931
    %v950 = vpop.f32.mrf.mxu0
    %v951 = vadd.f32 %v215, %v950
    %952 = vdwg.mxu0
    %953 = vmatpush.msra.mxu0 0.0
    %954 = vmatpush.msra.mxu0 0.0
    %955 = vmatpush.msra.mxu0 0.0
    %956 = vmatpush.msra.mxu0 0.0
    %957 = vmatpush.msra.mxu0 0.0
    %958 = vmatpush.msra.mxu0 0.0
    %959 = vmatpush.msra.mxu0 0.0
    %960 = vmatpush.msra.mxu0 0.0
    %961 = vmatpush.msra.mxu0 %v211
    %962 = vmatpush.msra.mxu0 %v208
    %963 = vmatpush.msra.mxu0 %v205
    %964 = vmatpush.msra.mxu0 %v202
    %965 = vmatpush.msra.mxu0 %v199
    %966 = vmatpush.msra.mxu0 %v196
    %967 = vmatpush.msra.mxu0 %v193
    %968 = vmatpush.msra.mxu0 %v190
    %969 = vmatmul.f32.gmra.mxu0 %v931
    %v970 = vpop.f32.mrf.mxu0
    %v971 = vadd.f32 %v216, %v970
    %972 = vdwg.mxu0
    %973 = vmatpush.msra.mxu0 0.0
    %974 = vmatpush.msra.mxu0 0.0
    %975 = vmatpush.msra.mxu0 0.0
    %976 = vmatpush.msra.mxu0 0.0
    %977 = vmatpush.msra.mxu0 0.0
    %978 = vmatpush.msra.mxu0 0.0
    %979 = vmatpush.msra.mxu0 0.0
    %980 = vmatpush.msra.mxu0 0.0
    %981 = vmatpush.msra.mxu0 %v212
    %982 = vmatpush.msra.mxu0 %v209
    %983 = vmatpush.msra.mxu0 %v206
    %984 = vmatpush.msra.mxu0 %v203
    %985 = vmatpush.msra.mxu0 %v200
    %986 = vmatpush.msra.mxu0 %v197
    %987 = vmatpush.msra.mxu0 %v194
    %988 = vmatpush.msra.mxu0 %v191
    %989 = vmatmul.f32.gmra.mxu0 %v931
    %v990 = vpop.f32.mrf.mxu0
    %v991 = vadd.f32 %v217, %v990
    %992 = vdwg.mxu0
    %v994 = vrot.slane %v951, 4
    %v996 = vadd.f32 %v141, %v994
    %v997 = vxor.u32 %v996, 2147483648
    %v998 = vmul.f32 %v997, 1.442695
    %v999 = vpow.pop %v998
    %v1000 = vadd.f32 %v999, 1.0
    %v1001 = vrcp.pop %v1000
    %v1002 = vmul.f32 %v1000, %v1001
    %v1003 = vsub.f32 1.0, %v1002
    %v1004 = vmul.f32 %v1001, %v1003
    %v1005 = vadd.f32 %v1001, %v1004
    %vm1006 = vweird.f32 %v1000
    %vm1007 = vweird.f32 %v1001
    %vm1008 = vmor %vm1006, %vm1007
    %v1009 = vsel %vm1008, %v1001, %v1005
    %v1010 = vand.u32 2147483647, %v1000
    %vm1011 = vcmp.eq.f32.partialorder %v1010, 8.507059e+37
    %v1012 = vand.u32 %v1000, 2147483648
    %v1013 = vor.u32 1.1754944e-38, %v1012
    %v1014 = vsel %vm1011, %v1013, %v1009
    %v1015 = vmul.f32 1.0, %v1014
    %v1017 = vrot.slane %v971, 4
    %v1019 = vadd.f32 %v164, %v1017
    %v1020 = vxor.u32 %v1019, 2147483648
    %v1021 = vmul.f32 %v1020, 1.442695
    %v1022 = vpow.pop %v1021
    %v1023 = vadd.f32 %v1022, 1.0
    %v1024 = vrcp.pop %v1023
    %v1025 = vmul.f32 %v1023, %v1024
    %v1026 = vsub.f32 1.0, %v1025
    %v1027 = vmul.f32 %v1024, %v1026
    %v1028 = vadd.f32 %v1024, %v1027
    %vm1029 = vweird.f32 %v1023
    %vm1030 = vweird.f32 %v1024
    %vm1031 = vmor %vm1029, %vm1030
    %v1032 = vsel %vm1031, %v1024, %v1028
    %v1033 = vand.u32 2147483647, %v1023
    %vm1034 = vcmp.eq.f32.partialorder %v1033, 8.507059e+37
    %v1035 = vand.u32 %v1023, 2147483648
    %v1036 = vor.u32 1.1754944e-38, %v1035
    %v1037 = vsel %vm1034, %v1036, %v1032
    %v1038 = vmul.f32 1.0, %v1037
    %v1040 = vrot.slane %v991, 4
    %v1042 = vmul.f32 %v1015, %v1040
    %v1043 = vadd.f32 %v187, %v1042
    %v1044 = vtanh.pop %v1043
    %v1045 = vsub.f32 1.0, %v1038
    %v1046 = vmul.f32 %v1045, %v1044
    %v1047 = vrot.slane %v928, 6
    %v1049 = vmul.f32 %v1038, %v1047
    %v1050 = vadd.f32 %v1046, %v1049
    %v1052 = vrot.slane %v1050, 4
    %v1053 = vsel %vm113, %v1052, 0
    %1055 = vmatpush.msra.mxu0 0.0
    %1056 = vmatpush.msra.mxu0 0.0
    %1057 = vmatpush.msra.mxu0 0.0
    %1058 = vmatpush.msra.mxu0 0.0
    %1059 = vmatpush.msra.mxu0 0.0
    %1060 = vmatpush.msra.mxu0 0.0
    %1061 = vmatpush.msra.mxu0 0.0
    %1062 = vmatpush.msra.mxu0 0.0
    %1063 = vmatpush.msra.mxu0 %v210
    %1064 = vmatpush.msra.mxu0 %v207
    %1065 = vmatpush.msra.mxu0 %v204
    %1066 = vmatpush.msra.mxu0 %v201
    %1067 = vmatpush.msra.mxu0 %v198
    %1068 = vmatpush.msra.mxu0 %v195
    %1069 = vmatpush.msra.mxu0 %v192
    %1070 = vmatpush.msra.mxu0 %v189
    %1071 = vmatmul.f32.gmra.mxu0 %v1053
    %v1072 = vpop.f32.mrf.mxu0
    %v1073 = vadd.f32 %v215, %v1072
    %1074 = vdwg.mxu0
    %1075 = vmatpush.msra.mxu0 0.0
    %1076 = vmatpush.msra.mxu0 0.0
    %1077 = vmatpush.msra.mxu0 0.0
    %1078 = vmatpush.msra.mxu0 0.0
    %1079 = vmatpush.msra.mxu0 0.0
    %1080 = vmatpush.msra.mxu0 0.0
    %1081 = vmatpush.msra.mxu0 0.0
    %1082 = vmatpush.msra.mxu0 0.0
    %1083 = vmatpush.msra.mxu0 %v211
    %1084 = vmatpush.msra.mxu0 %v208
    %1085 = vmatpush.msra.mxu0 %v205
    %1086 = vmatpush.msra.mxu0 %v202
    %1087 = vmatpush.msra.mxu0 %v199
    %1088 = vmatpush.msra.mxu0 %v196
    %1089 = vmatpush.msra.mxu0 %v193
    %1090 = vmatpush.msra.mxu0 %v190
    %1091 = vmatmul.f32.gmra.mxu0 %v1053
    %v1092 = vpop.f32.mrf.mxu0
    %v1093 = vadd.f32 %v216, %v1092
    %1094 = vdwg.mxu0
    %1095 = vmatpush.msra.mxu0 0.0
    %1096 = vmatpush.msra.mxu0 0.0
    %1097 = vmatpush.msra.mxu0 0.0
    %1098 = vmatpush.msra.mxu0 0.0
    %1099 = vmatpush.msra.mxu0 0.0
    %1100 = vmatpush.msra.mxu0 0.0
    %1101 = vmatpush.msra.mxu0 0.0
    %1102 = vmatpush.msra.mxu0 0.0
    %1103 = vmatpush.msra.mxu0 %v212
    %1104 = vmatpush.msra.mxu0 %v209
    %1105 = vmatpush.msra.mxu0 %v206
    %1106 = vmatpush.msra.mxu0 %v203
    %1107 = vmatpush.msra.mxu0 %v200
    %1108 = vmatpush.msra.mxu0 %v197
    %1109 = vmatpush.msra.mxu0 %v194
    %1110 = vmatpush.msra.mxu0 %v191
    %1111 = vmatmul.f32.gmra.mxu0 %v1053
    %v1112 = vpop.f32.mrf.mxu0
    %v1113 = vadd.f32 %v217, %v1112
    %1114 = vdwg.mxu0
    %v1116 = vrot.slane %v1073, 2
    %v1118 = vadd.f32 %v141, %v1116
    %v1119 = vxor.u32 %v1118, 2147483648
    %v1120 = vmul.f32 %v1119, 1.442695
    %v1121 = vpow.pop %v1120
    %v1122 = vadd.f32 %v1121, 1.0
    %v1123 = vrcp.pop %v1122
    %v1124 = vmul.f32 %v1122, %v1123
    %v1125 = vsub.f32 1.0, %v1124
    %v1126 = vmul.f32 %v1123, %v1125
    %v1127 = vadd.f32 %v1123, %v1126
    %vm1128 = vweird.f32 %v1122
    %vm1129 = vweird.f32 %v1123
    %vm1130 = vmor %vm1128, %vm1129
    %v1131 = vsel %vm1130, %v1123, %v1127
    %v1132 = vand.u32 2147483647, %v1122
    %vm1133 = vcmp.eq.f32.partialorder %v1132, 8.507059e+37
    %v1134 = vand.u32 %v1122, 2147483648
    %v1135 = vor.u32 1.1754944e-38, %v1134
    %v1136 = vsel %vm1133, %v1135, %v1131
    %v1137 = vmul.f32 1.0, %v1136
    %v1139 = vrot.slane %v1093, 2
    %v1141 = vadd.f32 %v164, %v1139
    %v1142 = vxor.u32 %v1141, 2147483648
    %v1143 = vmul.f32 %v1142, 1.442695
    %v1144 = vpow.pop %v1143
    %v1145 = vadd.f32 %v1144, 1.0
    %v1146 = vrcp.pop %v1145
    %v1147 = vmul.f32 %v1145, %v1146
    %v1148 = vsub.f32 1.0, %v1147
    %v1149 = vmul.f32 %v1146, %v1148
    %v1150 = vadd.f32 %v1146, %v1149
    %vm1151 = vweird.f32 %v1145
    %vm1152 = vweird.f32 %v1146
    %vm1153 = vmor %vm1151, %vm1152
    %v1154 = vsel %vm1153, %v1146, %v1150
    %v1155 = vand.u32 2147483647, %v1145
    %vm1156 = vcmp.eq.f32.partialorder %v1155, 8.507059e+37
    %v1157 = vand.u32 %v1145, 2147483648
    %v1158 = vor.u32 1.1754944e-38, %v1157
    %v1159 = vsel %vm1156, %v1158, %v1154
    %v1160 = vmul.f32 1.0, %v1159
    %v1162 = vrot.slane %v1113, 2
    %v1164 = vmul.f32 %v1137, %v1162
    %v1165 = vadd.f32 %v187, %v1164
    %v1166 = vtanh.pop %v1165
    %v1167 = vsub.f32 1.0, %v1160
    %v1168 = vmul.f32 %v1167, %v1166
    %v1169 = vrot.slane %v1050, 6
    %v1171 = vmul.f32 %v1160, %v1169
    %v1172 = vadd.f32 %v1168, %v1171
    %v1173 = vld [vmem:[%s6] sm:$0xff]
    %v1174 = vld [vmem:[%s6 + $0x8] sm:$0xff]
    %v1175 = vld [vmem:[%s6 + $0x10] sm:$0xff]
    %v1176 = vld [vmem:[%s6 + $0x18] sm:$0xff]
    %v1177 = vld [vmem:[%s6 + $0x20] sm:$0xff]
    %v1178 = vld [vmem:[%s6 + $0x28] sm:$0xff]
    %v1179 = vld [vmem:[%s6 + $0x30] sm:$0xff]
    %v1180 = vld [vmem:[%s6 + $0x38] sm:$0xff]
    %v1181 = vld [vmem:[%s7] sm:$0x1]
    %v1183 = vperm.slane %v1181, 0
    %v1186 = vrot.slane %v1172, 6
    %v1187 = vsel %vm113, %v1186, 0
    %1189 = vmatpush.msra.mxu0 0.0
    %1190 = vmatpush.msra.mxu0 0.0
    %1191 = vmatpush.msra.mxu0 0.0
    %1192 = vmatpush.msra.mxu0 0.0
    %1193 = vmatpush.msra.mxu0 0.0
    %1194 = vmatpush.msra.mxu0 0.0
    %1195 = vmatpush.msra.mxu0 0.0
    %1196 = vmatpush.msra.mxu0 0.0
    %1197 = vmatpush.msra.mxu0 %v1180
    %1198 = vmatpush.msra.mxu0 %v1179
    %1199 = vmatpush.msra.mxu0 %v1178
    %1200 = vmatpush.msra.mxu0 %v1177
    %1201 = vmatpush.msra.mxu0 %v1176
    %1202 = vmatpush.msra.mxu0 %v1175
    %1203 = vmatpush.msra.mxu0 %v1174
    %1204 = vmatpush.msra.mxu0 %v1173
    %1205 = vmatmul.f32.gmra.mxu0 %v1187
    %v1206 = vpop.f32.mrf.mxu0
    %v1207 = vadd.f32 %v1183, %v1206
    %1208 = vdwg.mxu0
    %v1209 = vld [vmem:[%s1] sm:$0xff]
    %v1210 = vld [vmem:[%s1 + $0x8] sm:$0xff]
    %v1211 = vld [vmem:[%s8] sm:$0xff]
    %v1212 = vld [vmem:[%s8 + $0x8] sm:$0xff]
    %v1213 = vld [vmem:[%s8 + $0x10] sm:$0xff]
    %v1214 = vld [vmem:[%s8 + $0x18] sm:$0xff]
    %v1215 = vld [vmem:[%s8 + $0x20] sm:$0xff]
    %v1216 = vld [vmem:[%s8 + $0x28] sm:$0xff]
    %v1217 = vld [vmem:[%s8 + $0x30] sm:$0xff]
    %v1218 = vld [vmem:[%s8 + $0x38] sm:$0xff]
    %v1219 = vld [vmem:[%s8 + $0x40] sm:$0xff]
    %v1220 = vld [vmem:[%s8 + $0x48] sm:$0xff]
    %v1221 = vld [vmem:[%s8 + $0x50] sm:$0xff]
    %v1222 = vld [vmem:[%s8 + $0x58] sm:$0xff]
    %v1223 = vld [vmem:[%s10] sm:$0x7]
    %v1225 = vperm.slane %v1223, 0
    %v1226 = vperm.slane %v1223, 1
    %v1227 = vperm.slane %v1223, 2
    %vm1231 = vcmask 261120
    %v1233 = vsel %vm1231, %v1209, 0
    %v1236 = vsel %vm1231, %v1210, 0
    %1238 = vmatpush.msra.mxu0 0.0
    %1239 = vmatpush.msra.mxu0 0.0
    %1240 = vmatpush.msra.mxu0 0.0
    %1241 = vmatpush.msra.mxu0 0.0
    %1242 = vmatpush.msra.mxu0 0.0
    %1243 = vmatpush.msra.mxu0 0.0
    %1244 = vmatpush.msra.mxu0 0.0
    %1245 = vmatpush.msra.mxu0 0.0
    %1246 = vmatpush.msra.mxu0 0.0
    %1247 = vmatpush.msra.mxu0 0.0
    %1248 = vmatpush.msra.mxu0 0.0
    %1249 = vmatpush.msra.mxu0 0.0
    %1250 = vmatpush.msra.mxu0 %v1220
    %1251 = vmatpush.msra.mxu0 %v1217
    %1252 = vmatpush.msra.mxu0 %v1214
    %1253 = vmatpush.msra.mxu0 %v1211
    %1254 = vmatmul.f32.gmra.mxu0 %v1233
    %v1255 = vpop.f32.mrf.mxu0
    %v1256 = vadd.f32 %v1225, %v1255
    %1257 = vmatmul.f32.gmra.mxu0 %v1236
    %v1258 = vpop.f32.mrf.mxu0
    %v1259 = vadd.f32 %v1225, %v1258
    %1260 = vdwg.mxu0
    %1261 = vmatpush.msra.mxu0 0.0
    %1262 = vmatpush.msra.mxu0 0.0
    %1263 = vmatpush.msra.mxu0 0.0
    %1264 = vmatpush.msra.mxu0 0.0
    %1265 = vmatpush.msra.mxu0 0.0
    %1266 = vmatpush.msra.mxu0 0.0
    %1267 = vmatpush.msra.mxu0 0.0
    %1268 = vmatpush.msra.mxu0 0.0
    %1269 = vmatpush.msra.mxu0 0.0
    %1270 = vmatpush.msra.mxu0 0.0
    %1271 = vmatpush.msra.mxu0 0.0
    %1272 = vmatpush.msra.mxu0 0.0
    %1273 = vmatpush.msra.mxu0 %v1221
    %1274 = vmatpush.msra.mxu0 %v1218
    %1275 = vmatpush.msra.mxu0 %v1215
    %1276 = vmatpush.msra.mxu0 %v1212
    %1277 = vmatmul.f32.gmra.mxu0 %v1233
    %v1278 = vpop.f32.mrf.mxu0
    %v1279 = vadd.f32 %v1226, %v1278
    %1280 = vmatmul.f32.gmra.mxu0 %v1236
    %v1281 = vpop.f32.mrf.mxu0
    %v1282 = vadd.f32 %v1226, %v1281
    %1283 = vdwg.mxu0
    %1284 = vmatpush.msra.mxu0 0.0
    %1285 = vmatpush.msra.mxu0 0.0
    %1286 = vmatpush.msra.mxu0 0.0
    %1287 = vmatpush.msra.mxu0 0.0
    %1288 = vmatpush.msra.mxu0 0.0
    %1289 = vmatpush.msra.mxu0 0.0
    %1290 = vmatpush.msra.mxu0 0.0
    %1291 = vmatpush.msra.mxu0 0.0
    %1292 = vmatpush.msra.mxu0 0.0
    %1293 = vmatpush.msra.mxu0 0.0
    %1294 = vmatpush.msra.mxu0 0.0
    %1295 = vmatpush.msra.mxu0 0.0
    %1296 = vmatpush.msra.mxu0 %v1222
    %1297 = vmatpush.msra.mxu0 %v1219
    %1298 = vmatpush.msra.mxu0 %v1216
    %1299 = vmatpush.msra.mxu0 %v1213
    %1300 = vmatmul.f32.gmra.mxu0 %v1233
    %v1301 = vpop.f32.mrf.mxu0
    %v1302 = vadd.f32 %v1227, %v1301
    %1303 = vmatmul.f32.gmra.mxu0 %v1236
    %v1304 = vpop.f32.mrf.mxu0
    %v1305 = vadd.f32 %v1227, %v1304
    %1306 = vdwg.mxu0
    %v1307 = vld [vmem:[#allocation4] sm:$0xff]
    %v1308 = vld [vmem:[#allocation4 + $0x8] sm:$0xff]
    %v1309 = vld [vmem:[#allocation4 + $0x10] sm:$0xff]
    %v1310 = vld [vmem:[#allocation4 + $0x18] sm:$0xff]
    %v1311 = vld [vmem:[#allocation4 + $0x20] sm:$0xff]
    %v1312 = vld [vmem:[#allocation4 + $0x28] sm:$0xff]
    %v1313 = vld [vmem:[#allocation4 + $0x30] sm:$0xff]
    %v1314 = vld [vmem:[#allocation4 + $0x38] sm:$0xff]
    %v1315 = vld [vmem:[#allocation4 + $0x40] sm:$0xff]
    %v1316 = vld [vmem:[#allocation4 + $0x48] sm:$0xff]
    %v1317 = vld [vmem:[#allocation4 + $0x50] sm:$0xff]
    %v1318 = vld [vmem:[#allocation4 + $0x58] sm:$0xff]
    %v1319 = vld [vmem:[%s11] sm:$0x7]
    %v1321 = vperm.slane %v1319, 0
    %v1322 = vperm.slane %v1319, 1
    %v1323 = vperm.slane %v1319, 2
    %v1328 = vsel %vm1231, %v1207, 0
    %1330 = vmatpush.msra.mxu0 0.0
    %1331 = vmatpush.msra.mxu0 0.0
    %1332 = vmatpush.msra.mxu0 0.0
    %1333 = vmatpush.msra.mxu0 0.0
    %1334 = vmatpush.msra.mxu0 0.0
    %1335 = vmatpush.msra.mxu0 0.0
    %1336 = vmatpush.msra.mxu0 0.0
    %1337 = vmatpush.msra.mxu0 0.0
    %1338 = vmatpush.msra.mxu0 0.0
    %1339 = vmatpush.msra.mxu0 0.0
    %1340 = vmatpush.msra.mxu0 0.0
    %1341 = vmatpush.msra.mxu0 0.0
    %1342 = vmatpush.msra.mxu0 %v1316
    %1343 = vmatpush.msra.mxu0 %v1313
    %1344 = vmatpush.msra.mxu0 %v1310
    %1345 = vmatpush.msra.mxu0 %v1307
    %1346 = vmatmul.f32.gmra.mxu0 %v1328
    %v1347 = vpop.f32.mrf.mxu0
    %v1348 = vadd.f32 %v1321, %v1347
    %1349 = vdwg.mxu0
    %1350 = vmatpush.msra.mxu0 0.0
    %1351 = vmatpush.msra.mxu0 0.0
    %1352 = vmatpush.msra.mxu0 0.0
    %1353 = vmatpush.msra.mxu0 0.0
    %1354 = vmatpush.msra.mxu0 0.0
    %1355 = vmatpush.msra.mxu0 0.0
    %1356 = vmatpush.msra.mxu0 0.0
    %1357 = vmatpush.msra.mxu0 0.0
    %1358 = vmatpush.msra.mxu0 0.0
    %1359 = vmatpush.msra.mxu0 0.0
    %1360 = vmatpush.msra.mxu0 0.0
    %1361 = vmatpush.msra.mxu0 0.0
    %1362 = vmatpush.msra.mxu0 %v1317
    %1363 = vmatpush.msra.mxu0 %v1314
    %1364 = vmatpush.msra.mxu0 %v1311
    %1365 = vmatpush.msra.mxu0 %v1308
    %1366 = vmatmul.f32.gmra.mxu0 %v1328
    %v1367 = vpop.f32.mrf.mxu0
    %v1368 = vadd.f32 %v1322, %v1367
    %1369 = vdwg.mxu0
    %1370 = vmatpush.msra.mxu0 0.0
    %1371 = vmatpush.msra.mxu0 0.0
    %1372 = vmatpush.msra.mxu0 0.0
    %1373 = vmatpush.msra.mxu0 0.0
    %1374 = vmatpush.msra.mxu0 0.0
    %1375 = vmatpush.msra.mxu0 0.0
    %1376 = vmatpush.msra.mxu0 0.0
    %1377 = vmatpush.msra.mxu0 0.0
    %1378 = vmatpush.msra.mxu0 0.0
    %1379 = vmatpush.msra.mxu0 0.0
    %1380 = vmatpush.msra.mxu0 0.0
    %1381 = vmatpush.msra.mxu0 0.0
    %1382 = vmatpush.msra.mxu0 %v1318
    %1383 = vmatpush.msra.mxu0 %v1315
    %1384 = vmatpush.msra.mxu0 %v1312
    %1385 = vmatpush.msra.mxu0 %v1309
    %1386 = vmatmul.f32.gmra.mxu0 %v1328
    %v1387 = vpop.f32.mrf.mxu0
    %v1388 = vadd.f32 %v1323, %v1387
    %1389 = vdwg.mxu0
    %v1390 = vadd.f32 %v1256, %v1348
    %v1391 = vxor.u32 %v1390, 2147483648
    %v1392 = vmul.f32 %v1391, 1.442695
    %v1393 = vpow.pop %v1392
    %v1394 = vadd.f32 %v1393, 1.0
    %v1395 = vrcp.pop %v1394
    %v1396 = vmul.f32 %v1394, %v1395
    %v1397 = vsub.f32 1.0, %v1396
    %v1398 = vmul.f32 %v1395, %v1397
    %v1399 = vadd.f32 %v1395, %v1398
    %vm1400 = vweird.f32 %v1394
    %vm1401 = vweird.f32 %v1395
    %vm1402 = vmor %vm1400, %vm1401
    %v1403 = vsel %vm1402, %v1395, %v1399
    %v1404 = vand.u32 2147483647, %v1394
    %vm1405 = vcmp.eq.f32.partialorder %v1404, 8.507059e+37
    %v1406 = vand.u32 %v1394, 2147483648
    %v1407 = vor.u32 1.1754944e-38, %v1406
    %v1408 = vsel %vm1405, %v1407, %v1403
    %v1409 = vmul.f32 1.0, %v1408
    %v1410 = vadd.f32 %v1279, %v1368
    %v1411 = vxor.u32 %v1410, 2147483648
    %v1412 = vmul.f32 %v1411, 1.442695
    %v1413 = vpow.pop %v1412
    %v1414 = vadd.f32 %v1413, 1.0
    %v1415 = vrcp.pop %v1414
    %v1416 = vmul.f32 %v1414, %v1415
    %v1417 = vsub.f32 1.0, %v1416
    %v1418 = vmul.f32 %v1415, %v1417
    %v1419 = vadd.f32 %v1415, %v1418
    %vm1420 = vweird.f32 %v1414
    %vm1421 = vweird.f32 %v1415
    %vm1422 = vmor %vm1420, %vm1421
    %v1423 = vsel %vm1422, %v1415, %v1419
    %v1424 = vand.u32 2147483647, %v1414
    %vm1425 = vcmp.eq.f32.partialorder %v1424, 8.507059e+37
    %v1426 = vand.u32 %v1414, 2147483648
    %v1427 = vor.u32 1.1754944e-38, %v1426
    %v1428 = vsel %vm1425, %v1427, %v1423
    %v1429 = vmul.f32 1.0, %v1428
    %v1430 = vmul.f32 %v1409, %v1388
    %v1431 = vadd.f32 %v1302, %v1430
    %v1432 = vtanh.pop %v1431
    %v1433 = vsub.f32 1.0, %v1429
    %v1434 = vmul.f32 %v1433, %v1432
    %v1435 = vmul.f32 %v1429, %v1207
    %v1436 = vadd.f32 %v1434, %v1435
    %v1438 = vsel %vm1231, %v1436, 0
    %1440 = vmatpush.msra.mxu0 0.0
    %1441 = vmatpush.msra.mxu0 0.0
    %1442 = vmatpush.msra.mxu0 0.0
    %1443 = vmatpush.msra.mxu0 0.0
    %1444 = vmatpush.msra.mxu0 0.0
    %1445 = vmatpush.msra.mxu0 0.0
    %1446 = vmatpush.msra.mxu0 0.0
    %1447 = vmatpush.msra.mxu0 0.0
    %1448 = vmatpush.msra.mxu0 0.0
    %1449 = vmatpush.msra.mxu0 0.0
    %1450 = vmatpush.msra.mxu0 0.0
    %1451 = vmatpush.msra.mxu0 0.0
    %1452 = vmatpush.msra.mxu0 %v1316
    %1453 = vmatpush.msra.mxu0 %v1313
    %1454 = vmatpush.msra.mxu0 %v1310
    %1455 = vmatpush.msra.mxu0 %v1307
    %1456 = vmatmul.f32.gmra.mxu0 %v1438
    %v1457 = vpop.f32.mrf.mxu0
    %v1458 = vadd.f32 %v1321, %v1457
    %1459 = vdwg.mxu0
    %1460 = vmatpush.msra.mxu0 0.0
    %1461 = vmatpush.msra.mxu0 0.0
    %1462 = vmatpush.msra.mxu0 0.0
    %1463 = vmatpush.msra.mxu0 0.0
    %1464 = vmatpush.msra.mxu0 0.0
    %1465 = vmatpush.msra.mxu0 0.0
    %1466 = vmatpush.msra.mxu0 0.0
    %1467 = vmatpush.msra.mxu0 0.0
    %1468 = vmatpush.msra.mxu0 0.0
    %1469 = vmatpush.msra.mxu0 0.0
    %1470 = vmatpush.msra.mxu0 0.0
    %1471 = vmatpush.msra.mxu0 0.0
    %1472 = vmatpush.msra.mxu0 %v1317
    %1473 = vmatpush.msra.mxu0 %v1314
    %1474 = vmatpush.msra.mxu0 %v1311
    %1475 = vmatpush.msra.mxu0 %v1308
    %1476 = vmatmul.f32.gmra.mxu0 %v1438
    %v1477 = vpop.f32.mrf.mxu0
    %v1478 = vadd.f32 %v1322, %v1477
    %1479 = vdwg.mxu0
    %1480 = vmatpush.msra.mxu0 0.0
    %1481 = vmatpush.msra.mxu0 0.0
    %1482 = vmatpush.msra.mxu0 0.0
    %1483 = vmatpush.msra.mxu0 0.0
    %1484 = vmatpush.msra.mxu0 0.0
    %1485 = vmatpush.msra.mxu0 0.0
    %1486 = vmatpush.msra.mxu0 0.0
    %1487 = vmatpush.msra.mxu0 0.0
    %1488 = vmatpush.msra.mxu0 0.0
    %1489 = vmatpush.msra.mxu0 0.0
    %1490 = vmatpush.msra.mxu0 0.0
    %1491 = vmatpush.msra.mxu0 0.0
    %1492 = vmatpush.msra.mxu0 %v1318
    %1493 = vmatpush.msra.mxu0 %v1315
    %1494 = vmatpush.msra.mxu0 %v1312
    %1495 = vmatpush.msra.mxu0 %v1309
    %1496 = vmatmul.f32.gmra.mxu0 %v1438
    %v1497 = vpop.f32.mrf.mxu0
    %v1498 = vadd.f32 %v1323, %v1497
    %1499 = vdwg.mxu0
    %v1501 = vrot.slane %v1458, 6
    %v1503 = vadd.f32 %v1256, %v1501
    %v1504 = vxor.u32 %v1503, 2147483648
    %v1505 = vmul.f32 %v1504, 1.442695
    %v1506 = vpow.pop %v1505
    %v1507 = vadd.f32 %v1506, 1.0
    %v1508 = vrcp.pop %v1507
    %v1509 = vmul.f32 %v1507, %v1508
    %v1510 = vsub.f32 1.0, %v1509
    %v1511 = vmul.f32 %v1508, %v1510
    %v1512 = vadd.f32 %v1508, %v1511
    %vm1513 = vweird.f32 %v1507
    %vm1514 = vweird.f32 %v1508
    %vm1515 = vmor %vm1513, %vm1514
    %v1516 = vsel %vm1515, %v1508, %v1512
    %v1517 = vand.u32 2147483647, %v1507
    %vm1518 = vcmp.eq.f32.partialorder %v1517, 8.507059e+37
    %v1519 = vand.u32 %v1507, 2147483648
    %v1520 = vor.u32 1.1754944e-38, %v1519
    %v1521 = vsel %vm1518, %v1520, %v1516
    %v1522 = vmul.f32 1.0, %v1521
    %v1524 = vrot.slane %v1478, 6
    %v1526 = vadd.f32 %v1279, %v1524
    %v1527 = vxor.u32 %v1526, 2147483648
    %v1528 = vmul.f32 %v1527, 1.442695
    %v1529 = vpow.pop %v1528
    %v1530 = vadd.f32 %v1529, 1.0
    %v1531 = vrcp.pop %v1530
    %v1532 = vmul.f32 %v1530, %v1531
    %v1533 = vsub.f32 1.0, %v1532
    %v1534 = vmul.f32 %v1531, %v1533
    %v1535 = vadd.f32 %v1531, %v1534
    %vm1536 = vweird.f32 %v1530
    %vm1537 = vweird.f32 %v1531
    %vm1538 = vmor %vm1536, %vm1537
    %v1539 = vsel %vm1538, %v1531, %v1535
    %v1540 = vand.u32 2147483647, %v1530
    %vm1541 = vcmp.eq.f32.partialorder %v1540, 8.507059e+37
    %v1542 = vand.u32 %v1530, 2147483648
    %v1543 = vor.u32 1.1754944e-38, %v1542
    %v1544 = vsel %vm1541, %v1543, %v1539
    %v1545 = vmul.f32 1.0, %v1544
    %v1547 = vrot.slane %v1498, 6
    %v1549 = vmul.f32 %v1522, %v1547
    %v1550 = vadd.f32 %v1302, %v1549
    %v1551 = vtanh.pop %v1550
    %v1552 = vsub.f32 1.0, %v1545
    %v1553 = vmul.f32 %v1552, %v1551
    %v1554 = vrot.slane %v1436, 6
    %v1556 = vmul.f32 %v1545, %v1554
    %v1557 = vadd.f32 %v1553, %v1556
    %v1559 = vrot.slane %v1557, 2
    %v1560 = vsel %vm1231, %v1559, 0
    %1562 = vmatpush.msra.mxu0 0.0
    %1563 = vmatpush.msra.mxu0 0.0
    %1564 = vmatpush.msra.mxu0 0.0
    %1565 = vmatpush.msra.mxu0 0.0
    %1566 = vmatpush.msra.mxu0 0.0
    %1567 = vmatpush.msra.mxu0 0.0
    %1568 = vmatpush.msra.mxu0 0.0
    %1569 = vmatpush.msra.mxu0 0.0
    %1570 = vmatpush.msra.mxu0 0.0
    %1571 = vmatpush.msra.mxu0 0.0
    %1572 = vmatpush.msra.mxu0 0.0
    %1573 = vmatpush.msra.mxu0 0.0
    %1574 = vmatpush.msra.mxu0 %v1316
    %1575 = vmatpush.msra.mxu0 %v1313
    %1576 = vmatpush.msra.mxu0 %v1310
    %1577 = vmatpush.msra.mxu0 %v1307
    %1578 = vmatmul.f32.gmra.mxu0 %v1560
    %v1579 = vpop.f32.mrf.mxu0
    %v1580 = vadd.f32 %v1321, %v1579
    %1581 = vdwg.mxu0
    %1582 = vmatpush.msra.mxu0 0.0
    %1583 = vmatpush.msra.mxu0 0.0
    %1584 = vmatpush.msra.mxu0 0.0
    %1585 = vmatpush.msra.mxu0 0.0
    %1586 = vmatpush.msra.mxu0 0.0
    %1587 = vmatpush.msra.mxu0 0.0
    %1588 = vmatpush.msra.mxu0 0.0
    %1589 = vmatpush.msra.mxu0 0.0
    %1590 = vmatpush.msra.mxu0 0.0
    %1591 = vmatpush.msra.mxu0 0.0
    %1592 = vmatpush.msra.mxu0 0.0
    %1593 = vmatpush.msra.mxu0 0.0
    %1594 = vmatpush.msra.mxu0 %v1317
    %1595 = vmatpush.msra.mxu0 %v1314
    %1596 = vmatpush.msra.mxu0 %v1311
    %1597 = vmatpush.msra.mxu0 %v1308
    %1598 = vmatmul.f32.gmra.mxu0 %v1560
    %v1599 = vpop.f32.mrf.mxu0
    %v1600 = vadd.f32 %v1322, %v1599
    %1601 = vdwg.mxu0
    %1602 = vmatpush.msra.mxu0 0.0
    %1603 = vmatpush.msra.mxu0 0.0
    %1604 = vmatpush.msra.mxu0 0.0
    %1605 = vmatpush.msra.mxu0 0.0
    %1606 = vmatpush.msra.mxu0 0.0
    %1607 = vmatpush.msra.mxu0 0.0
    %1608 = vmatpush.msra.mxu0 0.0
    %1609 = vmatpush.msra.mxu0 0.0
    %1610 = vmatpush.msra.mxu0 0.0
    %1611 = vmatpush.msra.mxu0 0.0
    %1612 = vmatpush.msra.mxu0 0.0
    %1613 = vmatpush.msra.mxu0 0.0
    %1614 = vmatpush.msra.mxu0 %v1318
    %1615 = vmatpush.msra.mxu0 %v1315
    %1616 = vmatpush.msra.mxu0 %v1312
    %1617 = vmatpush.msra.mxu0 %v1309
    %1618 = vmatmul.f32.gmra.mxu0 %v1560
    %v1619 = vpop.f32.mrf.mxu0
    %v1620 = vadd.f32 %v1323, %v1619
    %1621 = vdwg.mxu0
    %v1623 = vrot.slane %v1580, 4
    %v1625 = vadd.f32 %v1256, %v1623
    %v1626 = vxor.u32 %v1625, 2147483648
    %v1627 = vmul.f32 %v1626, 1.442695
    %v1628 = vpow.pop %v1627
    %v1629 = vadd.f32 %v1628, 1.0
    %v1630 = vrcp.pop %v1629
    %v1631 = vmul.f32 %v1629, %v1630
    %v1632 = vsub.f32 1.0, %v1631
    %v1633 = vmul.f32 %v1630, %v1632
    %v1634 = vadd.f32 %v1630, %v1633
    %vm1635 = vweird.f32 %v1629
    %vm1636 = vweird.f32 %v1630
    %vm1637 = vmor %vm1635, %vm1636
    %v1638 = vsel %vm1637, %v1630, %v1634
    %v1639 = vand.u32 2147483647, %v1629
    %vm1640 = vcmp.eq.f32.partialorder %v1639, 8.507059e+37
    %v1641 = vand.u32 %v1629, 2147483648
    %v1642 = vor.u32 1.1754944e-38, %v1641
    %v1643 = vsel %vm1640, %v1642, %v1638
    %v1644 = vmul.f32 1.0, %v1643
    %v1646 = vrot.slane %v1600, 4
    %v1648 = vadd.f32 %v1279, %v1646
    %v1649 = vxor.u32 %v1648, 2147483648
    %v1650 = vmul.f32 %v1649, 1.442695
    %v1651 = vpow.pop %v1650
    %v1652 = vadd.f32 %v1651, 1.0
    %v1653 = vrcp.pop %v1652
    %v1654 = vmul.f32 %v1652, %v1653
    %v1655 = vsub.f32 1.0, %v1654
    %v1656 = vmul.f32 %v1653, %v1655
    %v1657 = vadd.f32 %v1653, %v1656
    %vm1658 = vweird.f32 %v1652
    %vm1659 = vweird.f32 %v1653
    %vm1660 = vmor %vm1658, %vm1659
    %v1661 = vsel %vm1660, %v1653, %v1657
    %v1662 = vand.u32 2147483647, %v1652
    %vm1663 = vcmp.eq.f32.partialorder %v1662, 8.507059e+37
    %v1664 = vand.u32 %v1652, 2147483648
    %v1665 = vor.u32 1.1754944e-38, %v1664
    %v1666 = vsel %vm1663, %v1665, %v1661
    %v1667 = vmul.f32 1.0, %v1666
    %v1669 = vrot.slane %v1620, 4
    %v1671 = vmul.f32 %v1644, %v1669
    %v1672 = vadd.f32 %v1302, %v1671
    %v1673 = vtanh.pop %v1672
    %v1674 = vsub.f32 1.0, %v1667
    %v1675 = vmul.f32 %v1674, %v1673
    %v1676 = vrot.slane %v1557, 6
    %v1678 = vmul.f32 %v1667, %v1676
    %v1679 = vadd.f32 %v1675, %v1678
    %v1681 = vrot.slane %v1679, 4
    %v1682 = vsel %vm1231, %v1681, 0
    %1684 = vmatpush.msra.mxu0 0.0
    %1685 = vmatpush.msra.mxu0 0.0
    %1686 = vmatpush.msra.mxu0 0.0
    %1687 = vmatpush.msra.mxu0 0.0
    %1688 = vmatpush.msra.mxu0 0.0
    %1689 = vmatpush.msra.mxu0 0.0
    %1690 = vmatpush.msra.mxu0 0.0
    %1691 = vmatpush.msra.mxu0 0.0
    %1692 = vmatpush.msra.mxu0 0.0
    %1693 = vmatpush.msra.mxu0 0.0
    %1694 = vmatpush.msra.mxu0 0.0
    %1695 = vmatpush.msra.mxu0 0.0
    %1696 = vmatpush.msra.mxu0 %v1316
    %1697 = vmatpush.msra.mxu0 %v1313
    %1698 = vmatpush.msra.mxu0 %v1310
    %1699 = vmatpush.msra.mxu0 %v1307
    %1700 = vmatmul.f32.gmra.mxu0 %v1682
    %v1701 = vpop.f32.mrf.mxu0
    %v1702 = vadd.f32 %v1321, %v1701
    %1703 = vdwg.mxu0
    %1704 = vmatpush.msra.mxu0 0.0
    %1705 = vmatpush.msra.mxu0 0.0
    %1706 = vmatpush.msra.mxu0 0.0
    %1707 = vmatpush.msra.mxu0 0.0
    %1708 = vmatpush.msra.mxu0 0.0
    %1709 = vmatpush.msra.mxu0 0.0
    %1710 = vmatpush.msra.mxu0 0.0
    %1711 = vmatpush.msra.mxu0 0.0
    %1712 = vmatpush.msra.mxu0 0.0
    %1713 = vmatpush.msra.mxu0 0.0
    %1714 = vmatpush.msra.mxu0 0.0
    %1715 = vmatpush.msra.mxu0 0.0
    %1716 = vmatpush.msra.mxu0 %v1317
    %1717 = vmatpush.msra.mxu0 %v1314
    %1718 = vmatpush.msra.mxu0 %v1311
    %1719 = vmatpush.msra.mxu0 %v1308
    %1720 = vmatmul.f32.gmra.mxu0 %v1682
    %v1721 = vpop.f32.mrf.mxu0
    %v1722 = vadd.f32 %v1322, %v1721
    %1723 = vdwg.mxu0
    %1724 = vmatpush.msra.mxu0 0.0
    %1725 = vmatpush.msra.mxu0 0.0
    %1726 = vmatpush.msra.mxu0 0.0
    %1727 = vmatpush.msra.mxu0 0.0
    %1728 = vmatpush.msra.mxu0 0.0
    %1729 = vmatpush.msra.mxu0 0.0
    %1730 = vmatpush.msra.mxu0 0.0
    %1731 = vmatpush.msra.mxu0 0.0
    %1732 = vmatpush.msra.mxu0 0.0
    %1733 = vmatpush.msra.mxu0 0.0
    %1734 = vmatpush.msra.mxu0 0.0
    %1735 = vmatpush.msra.mxu0 0.0
    %1736 = vmatpush.msra.mxu0 %v1318
    %1737 = vmatpush.msra.mxu0 %v1315
    %1738 = vmatpush.msra.mxu0 %v1312
    %1739 = vmatpush.msra.mxu0 %v1309
    %1740 = vmatmul.f32.gmra.mxu0 %v1682
    %v1741 = vpop.f32.mrf.mxu0
    %v1742 = vadd.f32 %v1323, %v1741
    %1743 = vdwg.mxu0
    %v1745 = vrot.slane %v1702, 2
    %v1747 = vadd.f32 %v1256, %v1745
    %v1748 = vxor.u32 %v1747, 2147483648
    %v1749 = vmul.f32 %v1748, 1.442695
    %v1750 = vpow.pop %v1749
    %v1751 = vadd.f32 %v1750, 1.0
    %v1752 = vrcp.pop %v1751
    %v1753 = vmul.f32 %v1751, %v1752
    %v1754 = vsub.f32 1.0, %v1753
    %v1755 = vmul.f32 %v1752, %v1754
    %v1756 = vadd.f32 %v1752, %v1755
    %vm1757 = vweird.f32 %v1751
    %vm1758 = vweird.f32 %v1752
    %vm1759 = vmor %vm1757, %vm1758
    %v1760 = vsel %vm1759, %v1752, %v1756
    %v1761 = vand.u32 2147483647, %v1751
    %vm1762 = vcmp.eq.f32.partialorder %v1761, 8.507059e+37
    %v1763 = vand.u32 %v1751, 2147483648
    %v1764 = vor.u32 1.1754944e-38, %v1763
    %v1765 = vsel %vm1762, %v1764, %v1760
    %v1766 = vmul.f32 1.0, %v1765
    %v1768 = vrot.slane %v1722, 2
    %v1770 = vadd.f32 %v1279, %v1768
    %v1771 = vxor.u32 %v1770, 2147483648
    %v1772 = vmul.f32 %v1771, 1.442695
    %v1773 = vpow.pop %v1772
    %v1774 = vadd.f32 %v1773, 1.0
    %v1775 = vrcp.pop %v1774
    %v1776 = vmul.f32 %v1774, %v1775
    %v1777 = vsub.f32 1.0, %v1776
    %v1778 = vmul.f32 %v1775, %v1777
    %v1779 = vadd.f32 %v1775, %v1778
    %vm1780 = vweird.f32 %v1774
    %vm1781 = vweird.f32 %v1775
    %vm1782 = vmor %vm1780, %vm1781
    %v1783 = vsel %vm1782, %v1775, %v1779
    %v1784 = vand.u32 2147483647, %v1774
    %vm1785 = vcmp.eq.f32.partialorder %v1784, 8.507059e+37
    %v1786 = vand.u32 %v1774, 2147483648
    %v1787 = vor.u32 1.1754944e-38, %v1786
    %v1788 = vsel %vm1785, %v1787, %v1783
    %v1789 = vmul.f32 1.0, %v1788
    %v1791 = vrot.slane %v1742, 2
    %v1793 = vmul.f32 %v1766, %v1791
    %v1794 = vadd.f32 %v1302, %v1793
    %v1795 = vtanh.pop %v1794
    %v1796 = vsub.f32 1.0, %v1789
    %v1797 = vmul.f32 %v1796, %v1795
    %v1798 = vrot.slane %v1679, 6
    %v1800 = vmul.f32 %v1789, %v1798
    %v1801 = vadd.f32 %v1797, %v1800
    %v1803 = vrot.slane %v1801, 6
    %v1804 = vsel %vm1231, %v1803, 0
    %1806 = vmatpush.msra.mxu0 0.0
    %1807 = vmatpush.msra.mxu0 0.0
    %1808 = vmatpush.msra.mxu0 0.0
    %1809 = vmatpush.msra.mxu0 0.0
    %1810 = vmatpush.msra.mxu0 0.0
    %1811 = vmatpush.msra.mxu0 0.0
    %1812 = vmatpush.msra.mxu0 0.0
    %1813 = vmatpush.msra.mxu0 0.0
    %1814 = vmatpush.msra.mxu0 0.0
    %1815 = vmatpush.msra.mxu0 0.0
    %1816 = vmatpush.msra.mxu0 0.0
    %1817 = vmatpush.msra.mxu0 0.0
    %1818 = vmatpush.msra.mxu0 %v1316
    %1819 = vmatpush.msra.mxu0 %v1313
    %1820 = vmatpush.msra.mxu0 %v1310
    %1821 = vmatpush.msra.mxu0 %v1307
    %1822 = vmatmul.f32.gmra.mxu0 %v1804
    %v1823 = vpop.f32.mrf.mxu0
    %v1824 = vadd.f32 %v1321, %v1823
    %1825 = vdwg.mxu0
    %1826 = vmatpush.msra.mxu0 0.0
    %1827 = vmatpush.msra.mxu0 0.0
    %1828 = vmatpush.msra.mxu0 0.0
    %1829 = vmatpush.msra.mxu0 0.0
    %1830 = vmatpush.msra.mxu0 0.0
    %1831 = vmatpush.msra.mxu0 0.0
    %1832 = vmatpush.msra.mxu0 0.0
    %1833 = vmatpush.msra.mxu0 0.0
    %1834 = vmatpush.msra.mxu0 0.0
    %1835 = vmatpush.msra.mxu0 0.0
    %1836 = vmatpush.msra.mxu0 0.0
    %1837 = vmatpush.msra.mxu0 0.0
    %1838 = vmatpush.msra.mxu0 %v1317
    %1839 = vmatpush.msra.mxu0 %v1314
    %1840 = vmatpush.msra.mxu0 %v1311
    %1841 = vmatpush.msra.mxu0 %v1308
    %1842 = vmatmul.f32.gmra.mxu0 %v1804
    %v1843 = vpop.f32.mrf.mxu0
    %v1844 = vadd.f32 %v1322, %v1843
    %1845 = vdwg.mxu0
    %1846 = vmatpush.msra.mxu0 0.0
    %1847 = vmatpush.msra.mxu0 0.0
    %1848 = vmatpush.msra.mxu0 0.0
    %1849 = vmatpush.msra.mxu0 0.0
    %1850 = vmatpush.msra.mxu0 0.0
    %1851 = vmatpush.msra.mxu0 0.0
    %1852 = vmatpush.msra.mxu0 0.0
    %1853 = vmatpush.msra.mxu0 0.0
    %1854 = vmatpush.msra.mxu0 0.0
    %1855 = vmatpush.msra.mxu0 0.0
    %1856 = vmatpush.msra.mxu0 0.0
    %1857 = vmatpush.msra.mxu0 0.0
    %1858 = vmatpush.msra.mxu0 %v1318
    %1859 = vmatpush.msra.mxu0 %v1315
    %1860 = vmatpush.msra.mxu0 %v1312
    %1861 = vmatpush.msra.mxu0 %v1309
    %1862 = vmatmul.f32.gmra.mxu0 %v1804
    %v1863 = vpop.f32.mrf.mxu0
    %v1864 = vadd.f32 %v1323, %v1863
    %1865 = vdwg.mxu0
    %v1866 = vadd.f32 %v1259, %v1824
    %v1867 = vxor.u32 %v1866, 2147483648
    %v1868 = vmul.f32 %v1867, 1.442695
    %v1869 = vpow.pop %v1868
    %v1870 = vadd.f32 %v1869, 1.0
    %v1871 = vrcp.pop %v1870
    %v1872 = vmul.f32 %v1870, %v1871
    %v1873 = vsub.f32 1.0, %v1872
    %v1874 = vmul.f32 %v1871, %v1873
    %v1875 = vadd.f32 %v1871, %v1874
    %vm1876 = vweird.f32 %v1870
    %vm1877 = vweird.f32 %v1871
    %vm1878 = vmor %vm1876, %vm1877
    %v1879 = vsel %vm1878, %v1871, %v1875
    %v1880 = vand.u32 2147483647, %v1870
    %vm1881 = vcmp.eq.f32.partialorder %v1880, 8.507059e+37
    %v1882 = vand.u32 %v1870, 2147483648
    %v1883 = vor.u32 1.1754944e-38, %v1882
    %v1884 = vsel %vm1881, %v1883, %v1879
    %v1885 = vmul.f32 1.0, %v1884
    %v1886 = vadd.f32 %v1282, %v1844
    %v1887 = vxor.u32 %v1886, 2147483648
    %v1888 = vmul.f32 %v1887, 1.442695
    %v1889 = vpow.pop %v1888
    %v1890 = vadd.f32 %v1889, 1.0
    %v1891 = vrcp.pop %v1890
    %v1892 = vmul.f32 %v1890, %v1891
    %v1893 = vsub.f32 1.0, %v1892
    %v1894 = vmul.f32 %v1891, %v1893
    %v1895 = vadd.f32 %v1891, %v1894
    %vm1896 = vweird.f32 %v1890
    %vm1897 = vweird.f32 %v1891
    %vm1898 = vmor %vm1896, %vm1897
    %v1899 = vsel %vm1898, %v1891, %v1895
    %v1900 = vand.u32 2147483647, %v1890
    %vm1901 = vcmp.eq.f32.partialorder %v1900, 8.507059e+37
    %v1902 = vand.u32 %v1890, 2147483648
    %v1903 = vor.u32 1.1754944e-38, %v1902
    %v1904 = vsel %vm1901, %v1903, %v1899
    %v1905 = vmul.f32 1.0, %v1904
    %v1906 = vmul.f32 %v1885, %v1864
    %v1907 = vadd.f32 %v1305, %v1906
    %v1908 = vtanh.pop %v1907
    %v1909 = vsub.f32 1.0, %v1905
    %v1910 = vmul.f32 %v1909, %v1908
    %v1912 = vmul.f32 %v1905, %v1803
    %v1913 = vadd.f32 %v1910, %v1912
    %v1915 = vsel %vm1231, %v1913, 0
    %1917 = vmatpush.msra.mxu0 0.0
    %1918 = vmatpush.msra.mxu0 0.0
    %1919 = vmatpush.msra.mxu0 0.0
    %1920 = vmatpush.msra.mxu0 0.0
    %1921 = vmatpush.msra.mxu0 0.0
    %1922 = vmatpush.msra.mxu0 0.0
    %1923 = vmatpush.msra.mxu0 0.0
    %1924 = vmatpush.msra.mxu0 0.0
    %1925 = vmatpush.msra.mxu0 0.0
    %1926 = vmatpush.msra.mxu0 0.0
    %1927 = vmatpush.msra.mxu0 0.0
    %1928 = vmatpush.msra.mxu0 0.0
    %1929 = vmatpush.msra.mxu0 %v1316
    %1930 = vmatpush.msra.mxu0 %v1313
    %1931 = vmatpush.msra.mxu0 %v1310
    %1932 = vmatpush.msra.mxu0 %v1307
    %1933 = vmatmul.f32.gmra.mxu0 %v1915
    %v1934 = vpop.f32.mrf.mxu0
    %v1935 = vadd.f32 %v1321, %v1934
    %1936 = vdwg.mxu0
    %1937 = vmatpush.msra.mxu0 0.0
    %1938 = vmatpush.msra.mxu0 0.0
    %1939 = vmatpush.msra.mxu0 0.0
    %1940 = vmatpush.msra.mxu0 0.0
    %1941 = vmatpush.msra.mxu0 0.0
    %1942 = vmatpush.msra.mxu0 0.0
    %1943 = vmatpush.msra.mxu0 0.0
    %1944 = vmatpush.msra.mxu0 0.0
    %1945 = vmatpush.msra.mxu0 0.0
    %1946 = vmatpush.msra.mxu0 0.0
    %1947 = vmatpush.msra.mxu0 0.0
    %1948 = vmatpush.msra.mxu0 0.0
    %1949 = vmatpush.msra.mxu0 %v1317
    %1950 = vmatpush.msra.mxu0 %v1314
    %1951 = vmatpush.msra.mxu0 %v1311
    %1952 = vmatpush.msra.mxu0 %v1308
    %1953 = vmatmul.f32.gmra.mxu0 %v1915
    %v1954 = vpop.f32.mrf.mxu0
    %v1955 = vadd.f32 %v1322, %v1954
    %1956 = vdwg.mxu0
    %1957 = vmatpush.msra.mxu0 0.0
    %1958 = vmatpush.msra.mxu0 0.0
    %1959 = vmatpush.msra.mxu0 0.0
    %1960 = vmatpush.msra.mxu0 0.0
    %1961 = vmatpush.msra.mxu0 0.0
    %1962 = vmatpush.msra.mxu0 0.0
    %1963 = vmatpush.msra.mxu0 0.0
    %1964 = vmatpush.msra.mxu0 0.0
    %1965 = vmatpush.msra.mxu0 0.0
    %1966 = vmatpush.msra.mxu0 0.0
    %1967 = vmatpush.msra.mxu0 0.0
    %1968 = vmatpush.msra.mxu0 0.0
    %1969 = vmatpush.msra.mxu0 %v1318
    %1970 = vmatpush.msra.mxu0 %v1315
    %1971 = vmatpush.msra.mxu0 %v1312
    %1972 = vmatpush.msra.mxu0 %v1309
    %1973 = vmatmul.f32.gmra.mxu0 %v1915
    %v1974 = vpop.f32.mrf.mxu0
    %v1975 = vadd.f32 %v1323, %v1974
    %1976 = vdwg.mxu0
    %v1978 = vrot.slane %v1935, 6
    %v1980 = vadd.f32 %v1259, %v1978
    %v1981 = vxor.u32 %v1980, 2147483648
    %v1982 = vmul.f32 %v1981, 1.442695
    %v1983 = vpow.pop %v1982
    %v1984 = vadd.f32 %v1983, 1.0
    %v1985 = vrcp.pop %v1984
    %v1986 = vmul.f32 %v1984, %v1985
    %v1987 = vsub.f32 1.0, %v1986
    %v1988 = vmul.f32 %v1985, %v1987
    %v1989 = vadd.f32 %v1985, %v1988
    %vm1990 = vweird.f32 %v1984
    %vm1991 = vweird.f32 %v1985
    %vm1992 = vmor %vm1990, %vm1991
    %v1993 = vsel %vm1992, %v1985, %v1989
    %v1994 = vand.u32 2147483647, %v1984
    %vm1995 = vcmp.eq.f32.partialorder %v1994, 8.507059e+37
    %v1996 = vand.u32 %v1984, 2147483648
    %v1997 = vor.u32 1.1754944e-38, %v1996
    %v1998 = vsel %vm1995, %v1997, %v1993
    %v1999 = vmul.f32 1.0, %v1998
    %v2001 = vrot.slane %v1955, 6
    %v2003 = vadd.f32 %v1282, %v2001
    %v2004 = vxor.u32 %v2003, 2147483648
    %v2005 = vmul.f32 %v2004, 1.442695
    %v2006 = vpow.pop %v2005
    %v2007 = vadd.f32 %v2006, 1.0
    %v2008 = vrcp.pop %v2007
    %v2009 = vmul.f32 %v2007, %v2008
    %v2010 = vsub.f32 1.0, %v2009
    %v2011 = vmul.f32 %v2008, %v2010
    %v2012 = vadd.f32 %v2008, %v2011
    %vm2013 = vweird.f32 %v2007
    %vm2014 = vweird.f32 %v2008
    %vm2015 = vmor %vm2013, %vm2014
    %v2016 = vsel %vm2015, %v2008, %v2012
    %v2017 = vand.u32 2147483647, %v2007
    %vm2018 = vcmp.eq.f32.partialorder %v2017, 8.507059e+37
    %v2019 = vand.u32 %v2007, 2147483648
    %v2020 = vor.u32 1.1754944e-38, %v2019
    %v2021 = vsel %vm2018, %v2020, %v2016
    %v2022 = vmul.f32 1.0, %v2021
    %v2024 = vrot.slane %v1975, 6
    %v2026 = vmul.f32 %v1999, %v2024
    %v2027 = vadd.f32 %v1305, %v2026
    %v2028 = vtanh.pop %v2027
    %v2029 = vsub.f32 1.0, %v2022
    %v2030 = vmul.f32 %v2029, %v2028
    %v2031 = vrot.slane %v1913, 6
    %v2033 = vmul.f32 %v2022, %v2031
    %v2034 = vadd.f32 %v2030, %v2033
    %v2036 = vrot.slane %v2034, 2
    %v2037 = vsel %vm1231, %v2036, 0
    %2039 = vmatpush.msra.mxu0 0.0
    %2040 = vmatpush.msra.mxu0 0.0
    %2041 = vmatpush.msra.mxu0 0.0
    %2042 = vmatpush.msra.mxu0 0.0
    %2043 = vmatpush.msra.mxu0 0.0
    %2044 = vmatpush.msra.mxu0 0.0
    %2045 = vmatpush.msra.mxu0 0.0
    %2046 = vmatpush.msra.mxu0 0.0
    %2047 = vmatpush.msra.mxu0 0.0
    %2048 = vmatpush.msra.mxu0 0.0
    %2049 = vmatpush.msra.mxu0 0.0
    %2050 = vmatpush.msra.mxu0 0.0
    %2051 = vmatpush.msra.mxu0 %v1316
    %2052 = vmatpush.msra.mxu0 %v1313
    %2053 = vmatpush.msra.mxu0 %v1310
    %2054 = vmatpush.msra.mxu0 %v1307
    %2055 = vmatmul.f32.gmra.mxu0 %v2037
    %v2056 = vpop.f32.mrf.mxu0
    %v2057 = vadd.f32 %v1321, %v2056
    %2058 = vdwg.mxu0
    %2059 = vmatpush.msra.mxu0 0.0
    %2060 = vmatpush.msra.mxu0 0.0
    %2061 = vmatpush.msra.mxu0 0.0
    %2062 = vmatpush.msra.mxu0 0.0
    %2063 = vmatpush.msra.mxu0 0.0
    %2064 = vmatpush.msra.mxu0 0.0
    %2065 = vmatpush.msra.mxu0 0.0
    %2066 = vmatpush.msra.mxu0 0.0
    %2067 = vmatpush.msra.mxu0 0.0
    %2068 = vmatpush.msra.mxu0 0.0
    %2069 = vmatpush.msra.mxu0 0.0
    %2070 = vmatpush.msra.mxu0 0.0
    %2071 = vmatpush.msra.mxu0 %v1317
    %2072 = vmatpush.msra.mxu0 %v1314
    %2073 = vmatpush.msra.mxu0 %v1311
    %2074 = vmatpush.msra.mxu0 %v1308
    %2075 = vmatmul.f32.gmra.mxu0 %v2037
    %v2076 = vpop.f32.mrf.mxu0
    %v2077 = vadd.f32 %v1322, %v2076
    %2078 = vdwg.mxu0
    %2079 = vmatpush.msra.mxu0 0.0
    %2080 = vmatpush.msra.mxu0 0.0
    %2081 = vmatpush.msra.mxu0 0.0
    %2082 = vmatpush.msra.mxu0 0.0
    %2083 = vmatpush.msra.mxu0 0.0
    %2084 = vmatpush.msra.mxu0 0.0
    %2085 = vmatpush.msra.mxu0 0.0
    %2086 = vmatpush.msra.mxu0 0.0
    %2087 = vmatpush.msra.mxu0 0.0
    %2088 = vmatpush.msra.mxu0 0.0
    %2089 = vmatpush.msra.mxu0 0.0
    %2090 = vmatpush.msra.mxu0 0.0
    %2091 = vmatpush.msra.mxu0 %v1318
    %2092 = vmatpush.msra.mxu0 %v1315
    %2093 = vmatpush.msra.mxu0 %v1312
    %2094 = vmatpush.msra.mxu0 %v1309
    %2095 = vmatmul.f32.gmra.mxu0 %v2037
    %v2096 = vpop.f32.mrf.mxu0
    %v2097 = vadd.f32 %v1323, %v2096
    %2098 = vdwg.mxu0
    %v2100 = vrot.slane %v2057, 4
    %v2102 = vadd.f32 %v1259, %v2100
    %v2103 = vxor.u32 %v2102, 2147483648
    %v2104 = vmul.f32 %v2103, 1.442695
    %v2105 = vpow.pop %v2104
    %v2106 = vadd.f32 %v2105, 1.0
    %v2107 = vrcp.pop %v2106
    %v2108 = vmul.f32 %v2106, %v2107
    %v2109 = vsub.f32 1.0, %v2108
    %v2110 = vmul.f32 %v2107, %v2109
    %v2111 = vadd.f32 %v2107, %v2110
    %vm2112 = vweird.f32 %v2106
    %vm2113 = vweird.f32 %v2107
    %vm2114 = vmor %vm2112, %vm2113
    %v2115 = vsel %vm2114, %v2107, %v2111
    %v2116 = vand.u32 2147483647, %v2106
    %vm2117 = vcmp.eq.f32.partialorder %v2116, 8.507059e+37
    %v2118 = vand.u32 %v2106, 2147483648
    %v2119 = vor.u32 1.1754944e-38, %v2118
    %v2120 = vsel %vm2117, %v2119, %v2115
    %v2121 = vmul.f32 1.0, %v2120
    %v2123 = vrot.slane %v2077, 4
    %v2125 = vadd.f32 %v1282, %v2123
    %v2126 = vxor.u32 %v2125, 2147483648
    %v2127 = vmul.f32 %v2126, 1.442695
    %v2128 = vpow.pop %v2127
    %v2129 = vadd.f32 %v2128, 1.0
    %v2130 = vrcp.pop %v2129
    %v2131 = vmul.f32 %v2129, %v2130
    %v2132 = vsub.f32 1.0, %v2131
    %v2133 = vmul.f32 %v2130, %v2132
    %v2134 = vadd.f32 %v2130, %v2133
    %vm2135 = vweird.f32 %v2129
    %vm2136 = vweird.f32 %v2130
    %vm2137 = vmor %vm2135, %vm2136
    %v2138 = vsel %vm2137, %v2130, %v2134
    %v2139 = vand.u32 2147483647, %v2129
    %vm2140 = vcmp.eq.f32.partialorder %v2139, 8.507059e+37
    %v2141 = vand.u32 %v2129, 2147483648
    %v2142 = vor.u32 1.1754944e-38, %v2141
    %v2143 = vsel %vm2140, %v2142, %v2138
    %v2144 = vmul.f32 1.0, %v2143
    %v2146 = vrot.slane %v2097, 4
    %v2148 = vmul.f32 %v2121, %v2146
    %v2149 = vadd.f32 %v1305, %v2148
    %v2150 = vtanh.pop %v2149
    %v2151 = vsub.f32 1.0, %v2144
    %v2152 = vmul.f32 %v2151, %v2150
    %v2153 = vrot.slane %v2034, 6
    %v2155 = vmul.f32 %v2144, %v2153
    %v2156 = vadd.f32 %v2152, %v2155
    %v2158 = vrot.slane %v2156, 4
    %v2159 = vsel %vm1231, %v2158, 0
    %2161 = vmatpush.msra.mxu0 0.0
    %2162 = vmatpush.msra.mxu0 0.0
    %2163 = vmatpush.msra.mxu0 0.0
    %2164 = vmatpush.msra.mxu0 0.0
    %2165 = vmatpush.msra.mxu0 0.0
    %2166 = vmatpush.msra.mxu0 0.0
    %2167 = vmatpush.msra.mxu0 0.0
    %2168 = vmatpush.msra.mxu0 0.0
    %2169 = vmatpush.msra.mxu0 0.0
    %2170 = vmatpush.msra.mxu0 0.0
    %2171 = vmatpush.msra.mxu0 0.0
    %2172 = vmatpush.msra.mxu0 0.0
    %2173 = vmatpush.msra.mxu0 %v1316
    %2174 = vmatpush.msra.mxu0 %v1313
    %2175 = vmatpush.msra.mxu0 %v1310
    %2176 = vmatpush.msra.mxu0 %v1307
    %2177 = vmatmul.f32.gmra.mxu0 %v2159
    %v2178 = vpop.f32.mrf.mxu0
    %v2179 = vadd.f32 %v1321, %v2178
    %2180 = vdwg.mxu0
    %2181 = vmatpush.msra.mxu0 0.0
    %2182 = vmatpush.msra.mxu0 0.0
    %2183 = vmatpush.msra.mxu0 0.0
    %2184 = vmatpush.msra.mxu0 0.0
    %2185 = vmatpush.msra.mxu0 0.0
    %2186 = vmatpush.msra.mxu0 0.0
    %2187 = vmatpush.msra.mxu0 0.0
    %2188 = vmatpush.msra.mxu0 0.0
    %2189 = vmatpush.msra.mxu0 0.0
    %2190 = vmatpush.msra.mxu0 0.0
    %2191 = vmatpush.msra.mxu0 0.0
    %2192 = vmatpush.msra.mxu0 0.0
    %2193 = vmatpush.msra.mxu0 %v1317
    %2194 = vmatpush.msra.mxu0 %v1314
    %2195 = vmatpush.msra.mxu0 %v1311
    %2196 = vmatpush.msra.mxu0 %v1308
    %2197 = vmatmul.f32.gmra.mxu0 %v2159
    %v2198 = vpop.f32.mrf.mxu0
    %v2199 = vadd.f32 %v1322, %v2198
    %2200 = vdwg.mxu0
    %2201 = vmatpush.msra.mxu0 0.0
    %2202 = vmatpush.msra.mxu0 0.0
    %2203 = vmatpush.msra.mxu0 0.0
    %2204 = vmatpush.msra.mxu0 0.0
    %2205 = vmatpush.msra.mxu0 0.0
    %2206 = vmatpush.msra.mxu0 0.0
    %2207 = vmatpush.msra.mxu0 0.0
    %2208 = vmatpush.msra.mxu0 0.0
    %2209 = vmatpush.msra.mxu0 0.0
    %2210 = vmatpush.msra.mxu0 0.0
    %2211 = vmatpush.msra.mxu0 0.0
    %2212 = vmatpush.msra.mxu0 0.0
    %2213 = vmatpush.msra.mxu0 %v1318
    %2214 = vmatpush.msra.mxu0 %v1315
    %2215 = vmatpush.msra.mxu0 %v1312
    %2216 = vmatpush.msra.mxu0 %v1309
    %2217 = vmatmul.f32.gmra.mxu0 %v2159
    %v2218 = vpop.f32.mrf.mxu0
    %v2219 = vadd.f32 %v1323, %v2218
    %2220 = vdwg.mxu0
    %v2222 = vrot.slane %v2179, 2
    %v2224 = vadd.f32 %v1259, %v2222
    %v2225 = vxor.u32 %v2224, 2147483648
    %v2226 = vmul.f32 %v2225, 1.442695
    %v2227 = vpow.pop %v2226
    %v2228 = vadd.f32 %v2227, 1.0
    %v2229 = vrcp.pop %v2228
    %v2230 = vmul.f32 %v2228, %v2229
    %v2231 = vsub.f32 1.0, %v2230
    %v2232 = vmul.f32 %v2229, %v2231
    %v2233 = vadd.f32 %v2229, %v2232
    %vm2234 = vweird.f32 %v2228
    %vm2235 = vweird.f32 %v2229
    %vm2236 = vmor %vm2234, %vm2235
    %v2237 = vsel %vm2236, %v2229, %v2233
    %v2238 = vand.u32 2147483647, %v2228
    %vm2239 = vcmp.eq.f32.partialorder %v2238, 8.507059e+37
    %v2240 = vand.u32 %v2228, 2147483648
    %v2241 = vor.u32 1.1754944e-38, %v2240
    %v2242 = vsel %vm2239, %v2241, %v2237
    %v2243 = vmul.f32 1.0, %v2242
    %v2245 = vrot.slane %v2199, 2
    %v2247 = vadd.f32 %v1282, %v2245
    %v2248 = vxor.u32 %v2247, 2147483648
    %v2249 = vmul.f32 %v2248, 1.442695
    %v2250 = vpow.pop %v2249
    %v2251 = vadd.f32 %v2250, 1.0
    %v2252 = vrcp.pop %v2251
    %v2253 = vmul.f32 %v2251, %v2252
    %v2254 = vsub.f32 1.0, %v2253
    %v2255 = vmul.f32 %v2252, %v2254
    %v2256 = vadd.f32 %v2252, %v2255
    %vm2257 = vweird.f32 %v2251
    %vm2258 = vweird.f32 %v2252
    %vm2259 = vmor %vm2257, %vm2258
    %v2260 = vsel %vm2259, %v2252, %v2256
    %v2261 = vand.u32 2147483647, %v2251
    %vm2262 = vcmp.eq.f32.partialorder %v2261, 8.507059e+37
    %v2263 = vand.u32 %v2251, 2147483648
    %v2264 = vor.u32 1.1754944e-38, %v2263
    %v2265 = vsel %vm2262, %v2264, %v2260
    %v2266 = vmul.f32 1.0, %v2265
    %v2268 = vrot.slane %v2219, 2
    %v2270 = vmul.f32 %v2243, %v2268
    %v2271 = vadd.f32 %v1305, %v2270
    %v2272 = vtanh.pop %v2271
    %v2273 = vsub.f32 1.0, %v2266
    %v2274 = vmul.f32 %v2273, %v2272
    %v2275 = vrot.slane %v2156, 6
    %v2277 = vmul.f32 %v2266, %v2275
    %v2278 = vadd.f32 %v2274, %v2277
    %vm2279 = vcmask 1041408
    %v2280 = vsel %vm2279, %v1436, %v1557
    %vm2281 = vcmask 1043456
    %v2282 = vsel %vm2281, %v2280, %v1679
    %vm2283 = vcmask 1045504
    %v2284 = vsel %vm2283, %v2282, %v1801
    %v2285 = vsel %vm2279, %v1913, %v2034
    %v2286 = vsel %vm2281, %v2285, %v2156
    %v2287 = vsel %vm2283, %v2286, %v2278
    %v2288 = vld [vmem:[%s12] sm:$0xff]
    %v2289 = vld [vmem:[%s12 + $0x8] sm:$0xff]
    %v2290 = vld [vmem:[%s12 + $0x10] sm:$0xff]
    %v2291 = vld [vmem:[%s12 + $0x18] sm:$0xff]
    %v2292 = vld [vmem:[%s13] sm:$0x1]
    %v2294 = vperm.slane %v2292, 0
    %v2297 = vsel %vm1231, %v2284, 0
    %v2300 = vsel %vm1231, %v2287, 0
    %2302 = vmatpush.msra.mxu0 0.0
    %2303 = vmatpush.msra.mxu0 0.0
    %2304 = vmatpush.msra.mxu0 0.0
    %2305 = vmatpush.msra.mxu0 0.0
    %2306 = vmatpush.msra.mxu0 0.0
    %2307 = vmatpush.msra.mxu0 0.0
    %2308 = vmatpush.msra.mxu0 0.0
    %2309 = vmatpush.msra.mxu0 0.0
    %2310 = vmatpush.msra.mxu0 0.0
    %2311 = vmatpush.msra.mxu0 0.0
    %2312 = vmatpush.msra.mxu0 0.0
    %2313 = vmatpush.msra.mxu0 0.0
    %2314 = vmatpush.msra.mxu0 %v2291
    %2315 = vmatpush.msra.mxu0 %v2290
    %2316 = vmatpush.msra.mxu0 %v2289
    %2317 = vmatpush.msra.mxu0 %v2288
    %2318 = vmatmul.f32.gmra.mxu0 %v2297
    %v2319 = vpop.f32.mrf.mxu0
    %v2320 = vadd.f32 %v2294, %v2319
    %2321 = vmatmul.f32.gmra.mxu0 %v2300
    %v2322 = vpop.f32.mrf.mxu0
    %v2323 = vadd.f32 %v2294, %v2322
    %2324 = vdwg.mxu0
    %2325 = vmax.xlane.f32.xlu0 %v2320
    %v2326 = vpop.xlane.xlu0 %2325
    %2327 = vmax.xlane.f32.xlu0 %v2323
    %v2328 = vpop.xlane.xlu0 %2327
    %v2329 = vsub.f32 %v2320, %v2326
    %v2330 = vsub.f32 %v2323, %v2328
    %v2331 = vmul.f32 %v2329, 1.442695
    %v2332 = vpow.pop %v2331
    %v2333 = vmul.f32 %v2330, 1.442695
    %v2334 = vpow.pop %v2333
    %2335 = vadd.xlane.f32.xlu0 %v2332
    %v2336 = vpop.xlane.xlu0 %2335
    %2337 = vadd.xlane.f32.xlu0 %v2334
    %v2338 = vpop.xlane.xlu0 %2337
    %v2339 = vlog2.pop %v2336
    %v2340 = vmul.f32 %v2339, 0.6931472
    %v2341 = vlog2.pop %v2338
    %v2342 = vmul.f32 %v2341, 0.6931472
    %v2343 = vsub.f32 %v2329, %v2340
    %v2344 = vsub.f32 %v2330, %v2342
    %2345 = vst [vmem:[%s14] sm:$0xff] %v2343
    %2346 = vst [vmem:[%s14 + $0x8] sm:$0xff] %v2344
    // Predicated region
    $region66: #{bert_s2s_forward.1} parent=1 // pred_check
      _
    $region67: #{bert_s2s_forward.1} parent=1 // pred_check_branch
      %2348 = sbr.rel (0) target = $region69
    $region68: #{bert_s2s_forward.1} parent=1 // pred_region
      _
    $region69: #{bert_s2s_forward.1} parent=1 // pred_fallthru
      _
    // Predicated region
    $region70: #{bert_s2s_forward.1} parent=1 // pred_check
      _
    $region71: #{bert_s2s_forward.1} parent=1 // pred_check_branch
      %2350 = sbr.rel (0) target = $region73
    $region72: #{bert_s2s_forward.1} parent=1 // pred_region
      _
    $region73: #{bert_s2s_forward.1} parent=1 // pred_fallthru
      _
    %2351 = vsyncpa [#allocation3], 1
    %2352 = vsyncpa [#allocation5], 1

</llo_original>
